<compile_context>
chip_gen: v7x
topology: tpu7x:2x2x1
jax: 0.10.0
libtpu: 0.0.40
codegen_flags: <defaults>
</compile_context>

<pallas_src>
import functools

import jax
import jax.numpy as jnp
from jax.experimental import pallas as pl
from jax.experimental.pallas import tpu as pltpu


def _round_up(x, m):
    return (x + m - 1) // m * m


# ----------------------------------------------------------------------------
# Pallas kernel: (patches @ W_scaled) + shift, then activation.
# patches / W are bf16 (native MXU throughput); accumulate + epilogue in f32.
# ----------------------------------------------------------------------------
def _gemm_shift_act_kernel(p_ref, w_ref, shift_ref, o_ref, *, act):
    acc = jnp.dot(p_ref[...], w_ref[...], preferred_element_type=jnp.float32)
    y = acc + shift_ref[...]                      # per-out-channel shift (f32)
    if act == "leaky_relu":
        y = jnp.where(y >= 0, y, jnp.float32(0.2) * y)
    elif act == "sigmoid":
        y = pl.reciprocal(1.0 + jnp.exp(-y), approx=True)   # EUP vrcp
    o_ref[...] = y.astype(o_ref.dtype)


def _pick_tile_m(M, K):
    """Fixed, sublane/bf16-friendly M tile. Cap 512; shrink if the
    double-buffered bf16 patch tile would exceed ~8 MiB so the layer stays
    inside v7x's 64 MiB VMEM (and the 32 MiB default scoped limit)."""
    cap = 512
    while cap > 16 and 2 * cap * K * 2 > 8 * 2**20:
        cap //= 2
    return min(cap, _round_up(M, 16))


def fused_conv_gemm(patches, w_mat, shift, act, out_dtype):
    """patches: [M, K] bf16; w_mat: [K, Coutp] bf16 (BN scale pre-folded,
    Coutp % 128 == 0); shift: [1, Coutp] f32.  Returns [M_pad, Coutp]."""
    M, K = patches.shape
    Coutp = w_mat.shape[1]
    tile_m = _pick_tile_m(M, K)
    M_pad = _round_up(M, tile_m)
    if M_pad != M:
        patches = jnp.pad(patches, ((0, M_pad - M), (0, 0)))
    tile_n = 128
    kernel = functools.partial(_gemm_shift_act_kernel, act=act)
    return pl.pallas_call(
        kernel,
        out_shape=jax.ShapeDtypeStruct((M_pad, Coutp), out_dtype),
        grid_spec=pltpu.PrefetchScalarGridSpec(
            num_scalar_prefetch=0,
            grid=(M_pad // tile_m, Coutp // tile_n),
            in_specs=[
                pl.BlockSpec((tile_m, K), lambda i, j: (i, 0)),
                pl.BlockSpec((K, tile_n), lambda i, j: (0, j)),
                pl.BlockSpec((1, tile_n), lambda i, j: (0, j)),
            ],
            out_specs=pl.BlockSpec((tile_m, tile_n), lambda i, j: (i, j)),
        ),
        compiler_params=pltpu.CompilerParams(
            dimension_semantics=("parallel", "parallel")),
    )(patches, w_mat, shift)


# ----------------------------------------------------------------------------
# Glue: NHWC im2col + layer wrapper (NHWC in / NHWC out, bf16 activations).
# ----------------------------------------------------------------------------
def _im2col_nhwc(x, k, stride, pad):
    """x: [N,H,W,C] -> patches [N*Ho*Wo, C*k*k]; tap order matches OIHW
    weights flattened to (Cout, Cin*k*k)."""
    N, H, W, C = x.shape
    xp = jnp.pad(x, ((0, 0), (pad, pad), (pad, pad), (0, 0)))
    Ho = (H + 2 * pad - k) // stride + 1
    Wo = (W + 2 * pad - k) // stride + 1
    taps = []
    for di in range(k):
        for dj in range(k):
            taps.append(
                xp[:, di:di + stride * Ho:stride, dj:dj + stride * Wo:stride, :])
    p = jnp.stack(taps, axis=-1)                 # [N, Ho, Wo, C, k*k]
    return p.reshape(N * Ho * Wo, C * k * k), Ho, Wo


def conv_bn_act(x_nhwc, weight_oihw, scale, shift, stride, pad, act, out_dtype):
    """x: [N,H,W,Cin] bf16; weight: [Cout,Cin,k,k] f32 (PyTorch OIHW layout).
    scale/shift: per-out-channel affine (eval-mode BN or conv bias)."""
    N = x_nhwc.shape[0]
    Cout, Cin, k, _ = weight_oihw.shape
    K = Cin * k * k
    patches, Ho, Wo = _im2col_nhwc(x_nhwc, k, stride, pad)       # bf16 [M, K]
    # Fold the per-channel scale into the weights; only shift goes to kernel.
    w_mat = (weight_oihw.reshape(Cout, K) * scale[:, None]).T    # [K, Cout] f32
    Coutp = _round_up(Cout, 128)                 # lane-dense output stores
    if Coutp != Cout:
        w_mat = jnp.pad(w_mat, ((0, 0), (0, Coutp - Cout)))
        shift = jnp.pad(shift, (0, Coutp - Cout))
    out = fused_conv_gemm(patches.astype(jnp.bfloat16),
                          w_mat.astype(jnp.bfloat16),
                          shift.reshape(1, Coutp).astype(jnp.float32),
                          act, out_dtype)
    return out[:N * Ho * Wo, :Cout].reshape(N, Ho, Wo, Cout)


# ----------------------------------------------------------------------------
# Discriminator (DCGAN): conv->LReLU, 3x(conv->BN->LReLU), conv->Sigmoid.
# ----------------------------------------------------------------------------
def init_params(key, channels, features):
    def normal(key, shape, std=0.02):
        return std * jax.random.normal(key, shape, dtype=jnp.float32)

    keys = jax.random.split(key, 12)
    p = {}
    # layer 1: Conv(channels -> f, 4, 2, 1) with bias
    p["w1"] = normal(keys[0], (features, channels, 4, 4))
    p["b1"] = normal(keys[1], (features,))
    # blocks 2..4: Conv(no bias) + BN(gamma, beta, running stats)
    dims = [(features, features * 2), (features * 2, features * 4),
            (features * 4, features * 8)]
    for i, (cin, cout) in enumerate(dims, start=2):
        p[f"w{i}"] = normal(keys[2 * i - 2], (cout, cin, 4, 4))
        p[f"gamma{i}"] = 1.0 + normal(keys[2 * i - 1], (cout,), std=0.05)
        p[f"beta{i}"] = jnp.zeros((cout,), jnp.float32)
        p[f"mean{i}"] = jnp.zeros((cout,), jnp.float32)
        p[f"var{i}"] = jnp.ones((cout,), jnp.float32)
    # layer 5: Conv(8f -> 1, 4, 2, 0) with bias
    p["w5"] = normal(keys[10], (1, features * 8, 4, 4))
    p["b5"] = normal(keys[11], (1,))
    return p


def discriminator_forward(params, x_nchw, eps=1e-5):
    f = params
    x = x_nchw.transpose(0, 2, 3, 1).astype(jnp.bfloat16)   # NHWC, bf16 storage
    c1 = f["w1"].shape[0]
    # layer 1: conv + bias + LeakyReLU(0.2)
    x = conv_bn_act(x, f["w1"], jnp.ones((c1,), jnp.float32), f["b1"],
                    stride=2, pad=1, act="leaky_relu", out_dtype=jnp.bfloat16)
    # blocks 2..4: conv(no bias) + BN(eval) + LeakyReLU(0.2)
    for i in range(2, 5):
        scale = f[f"gamma{i}"] / jnp.sqrt(f[f"var{i}"] + eps)
        shift = f[f"beta{i}"] - f[f"mean{i}"] * scale
        x = conv_bn_act(x, f[f"w{i}"], scale, shift,
                        stride=2, pad=1, act="leaky_relu",
                        out_dtype=jnp.bfloat16)
    # layer 5: conv + bias + Sigmoid (f32 output)
    x = conv_bn_act(x, f["w5"], jnp.ones((1,), jnp.float32), f["b5"],
                    stride=2, pad=0, act="sigmoid", out_dtype=jnp.float32)
    return x.transpose(0, 3, 1, 2)               # [N, 1, 1, 1] back to NCHW


# ----------------------------------------------------------------------------
# Pure-JAX f32 reference (lax.conv) to validate the Pallas path.
# ----------------------------------------------------------------------------
def _ref_conv(x, w, b, stride, pad):
    out = jax.lax.conv_general_dilated(
        x, w, window_strides=(stride, stride),
        padding=[(pad, pad), (pad, pad)],
        dimension_numbers=("NCHW", "OIHW", "NCHW"))
    if b is not None:
        out = out + b[None, :, None, None]
    return out


def reference_forward(params, x, eps=1e-5):
    f = params
    lrelu = lambda v: jnp.where(v >= 0, v, 0.2 * v)
    x = lrelu(_ref_conv(x, f["w1"], f["b1"], 2, 1))
    for i in range(2, 5):
        y = _ref_conv(x, f[f"w{i}"], None, 2, 1)
        scale = f[f"gamma{i}"] / jnp.sqrt(f[f"var{i}"] + eps)
        shift = f[f"beta{i}"] - f[f"mean{i}"] * scale
        x = lrelu(y * scale[None, :, None, None] + shift[None, :, None, None])
    x = _ref_conv(x, f["w5"], f["b5"], 2, 0)
    return jax.nn.sigmoid(x)


if __name__ == "__main__":
    key = jax.random.PRNGKey(0)
    k_params, k_x = jax.random.split(key)

    batch, channels, features, img = 2, 3, 8, 64  # DCGAN expects 64x64 images
    params = init_params(k_params, channels, features)
    x = jax.random.normal(k_x, (batch, channels, img, img), dtype=jnp.float32)

    fwd = jax.jit(discriminator_forward)
    out = jax.block_until_ready(fwd(params, x))
    assert out.shape == (batch, 1, 1, 1), out.shape

    ref = jax.block_until_ready(reference_forward(params, x))
    # bf16 GEMM operands / activations -> looser tolerance than f32 reference.
    assert jnp.allclose(out, ref, rtol=2e-2, atol=2e-2), (out, ref)

    print("KERNEL_OK")
</pallas_src>

<mosaic_0001>
module attributes {stable_mosaic.version = 11 : i64} {
  func.func @_gemm_shift_act_kernel(%arg0: i32, %arg1: i32, %arg2: memref<512x48xbf16, #tpu.memory_space<vmem>>, %arg3: memref<48x128xbf16, #tpu.memory_space<vmem>>, %arg4: memref<1x128xf32, #tpu.memory_space<vmem>>, %arg5: memref<512x128xbf16, #tpu.memory_space<vmem>>) attributes {dimension_semantics = [#tpu.dimension_semantics<parallel>, #tpu.dimension_semantics<parallel>], iteration_bounds = array<i64: 4, 1>, scalar_prefetch = 0 : i64, scratch_operands = 0 : i64, tpu.core_type = #tpu.core_type<tc>, window_params = [{transform_indices = @transform_0, window_bounds = array<i64: 512, 48>}, {transform_indices = @transform_1, window_bounds = array<i64: 48, 128>}, {transform_indices = @transform_2, window_bounds = array<i64: 1, 128>}, {transform_indices = @transform_3, window_bounds = array<i64: 512, 128>}]} {
    %c0 = arith.constant 0 : index
    %c0_0 = arith.constant 0 : index
    %0 = vector.load %arg2[%c0, %c0_0] : memref<512x48xbf16, #tpu.memory_space<vmem>>, vector<512x48xbf16>
    %c0_1 = arith.constant 0 : index
    %c0_2 = arith.constant 0 : index
    %1 = vector.load %arg3[%c0_1, %c0_2] : memref<48x128xbf16, #tpu.memory_space<vmem>>, vector<48x128xbf16>
    %cst = arith.constant dense<0.000000e+00> : vector<512x128xf32>
    %2 = tpu.matmul %0, %1, %cst {dimension_numbers = #tpu.dot_dimension_numbers<[1], [0], [0], [1], [0, 0, 1, 1], [], []>} : vector<512x48xbf16>, vector<48x128xbf16>, vector<512x128xf32> -> vector<512x128xf32>
    %c0_3 = arith.constant 0 : index
    %c0_4 = arith.constant 0 : index
    %3 = vector.load %arg4[%c0_3, %c0_4] : memref<1x128xf32, #tpu.memory_space<vmem>>, vector<1x128xf32>
    %4 = vector.broadcast %3 : vector<1x128xf32> to vector<512x128xf32>
    %5 = arith.addf %2, %4 : vector<512x128xf32>
    %cst_5 = arith.constant 0.000000e+00 : f32
    %6 = vector.broadcast %cst_5 : f32 to vector<512x128xf32>
    %7 = arith.cmpf oge, %5, %6 : vector<512x128xf32>
    %cst_6 = arith.constant 2.000000e-01 : f32
    %8 = vector.broadcast %cst_6 : f32 to vector<512x128xf32>
    %9 = arith.mulf %8, %5 : vector<512x128xf32>
    %10 = arith.select %7, %5, %9 : vector<512x128xi1>, vector<512x128xf32>
    %11 = arith.truncf %10 : vector<512x128xf32> to vector<512x128xbf16>
    %c0_7 = arith.constant 0 : index
    %c0_8 = arith.constant 0 : index
    %12 = vector.load %arg5[%c0_7, %c0_8] : memref<512x128xbf16, #tpu.memory_space<vmem>>, vector<512x128xbf16>
    tpu.vector_store %arg5[%c0_7, %c0_8], %11 {strides = array<i32>} : memref<512x128xbf16, #tpu.memory_space<vmem>>, vector<512x128xbf16>,
    return
  }
  func.func @transform_0(%arg0: i32, %arg1: i32) -> (i32, i32) {
    %c0_i32 = arith.constant 0 : i32
    %c0_i32_0 = arith.constant 0 : i32
    return %arg0, %c0_i32 : i32, i32
  }
  func.func @transform_1(%arg0: i32, %arg1: i32) -> (i32, i32) {
    %c0_i32 = arith.constant 0 : i32
    %c0_i32_0 = arith.constant 0 : i32
    return %c0_i32, %arg1 : i32, i32
  }
  func.func @transform_2(%arg0: i32, %arg1: i32) -> (i32, i32) {
    %c0_i32 = arith.constant 0 : i32
    %c0_i32_0 = arith.constant 0 : i32
    return %c0_i32, %arg1 : i32, i32
  }
  func.func @transform_3(%arg0: i32, %arg1: i32) -> (i32, i32) {
    %c0_i32 = arith.constant 0 : i32
    return %arg0, %arg1 : i32, i32
  }
}

module attributes {stable_mosaic.version = 11 : i64} {
  func.func @_gemm_shift_act_kernel(%arg0: i32, %arg1: i32, %arg2: memref<512x128xbf16, #tpu.memory_space<vmem>>, %arg3: memref<128x128xbf16, #tpu.memory_space<vmem>>, %arg4: memref<1x128xf32, #tpu.memory_space<vmem>>, %arg5: memref<512x128xbf16, #tpu.memory_space<vmem>>) attributes {dimension_semantics = [#tpu.dimension_semantics<parallel>, #tpu.dimension_semantics<parallel>], iteration_bounds = array<i64: 1, 1>, scalar_prefetch = 0 : i64, scratch_operands = 0 : i64, tpu.core_type = #tpu.core_type<tc>, window_params = [{transform_indices = @transform_0, window_bounds = array<i64: 512, 128>}, {transform_indices = @transform_1, window_bounds = array<i64: 128, 128>}, {transform_indices = @transform_2, window_bounds = array<i64: 1, 128>}, {transform_indices = @transform_3, window_bounds = array<i64: 512, 128>}]} {
    %c0 = arith.constant 0 : index
    %c0_0 = arith.constant 0 : index
    %0 = vector.load %arg2[%c0, %c0_0] : memref<512x128xbf16, #tpu.memory_space<vmem>>, vector<512x128xbf16>
    %c0_1 = arith.constant 0 : index
    %c0_2 = arith.constant 0 : index
    %1 = vector.load %arg3[%c0_1, %c0_2] : memref<128x128xbf16, #tpu.memory_space<vmem>>, vector<128x128xbf16>
    %cst = arith.constant dense<0.000000e+00> : vector<512x128xf32>
    %2 = tpu.matmul %0, %1, %cst {dimension_numbers = #tpu.dot_dimension_numbers<[1], [0], [0], [1], [0, 0, 1, 1], [], []>} : vector<512x128xbf16>, vector<128x128xbf16>, vector<512x128xf32> -> vector<512x128xf32>
    %c0_3 = arith.constant 0 : index
    %c0_4 = arith.constant 0 : index
    %3 = vector.load %arg4[%c0_3, %c0_4] : memref<1x128xf32, #tpu.memory_space<vmem>>, vector<1x128xf32>
    %4 = vector.broadcast %3 : vector<1x128xf32> to vector<512x128xf32>
    %5 = arith.addf %2, %4 : vector<512x128xf32>
    %cst_5 = arith.constant 0.000000e+00 : f32
    %6 = vector.broadcast %cst_5 : f32 to vector<512x128xf32>
    %7 = arith.cmpf oge, %5, %6 : vector<512x128xf32>
    %cst_6 = arith.constant 2.000000e-01 : f32
    %8 = vector.broadcast %cst_6 : f32 to vector<512x128xf32>
    %9 = arith.mulf %8, %5 : vector<512x128xf32>
    %10 = arith.select %7, %5, %9 : vector<512x128xi1>, vector<512x128xf32>
    %11 = arith.truncf %10 : vector<512x128xf32> to vector<512x128xbf16>
    %c0_7 = arith.constant 0 : index
    %c0_8 = arith.constant 0 : index
    %12 = vector.load %arg5[%c0_7, %c0_8] : memref<512x128xbf16, #tpu.memory_space<vmem>>, vector<512x128xbf16>
    tpu.vector_store %arg5[%c0_7, %c0_8], %11 {strides = array<i32>} : memref<512x128xbf16, #tpu.memory_space<vmem>>, vector<512x128xbf16>,
    return
  }
  func.func @transform_0(%arg0: i32, %arg1: i32) -> (i32, i32) {
    %c0_i32 = arith.constant 0 : i32
    %c0_i32_0 = arith.constant 0 : i32
    return %arg0, %c0_i32 : i32, i32
  }
  func.func @transform_1(%arg0: i32, %arg1: i32) -> (i32, i32) {
    %c0_i32 = arith.constant 0 : i32
    %c0_i32_0 = arith.constant 0 : i32
    return %c0_i32, %arg1 : i32, i32
  }
  func.func @transform_2(%arg0: i32, %arg1: i32) -> (i32, i32) {
    %c0_i32 = arith.constant 0 : i32
    %c0_i32_0 = arith.constant 0 : i32
    return %c0_i32, %arg1 : i32, i32
  }
  func.func @transform_3(%arg0: i32, %arg1: i32) -> (i32, i32) {
    %c0_i32 = arith.constant 0 : i32
    return %arg0, %arg1 : i32, i32
  }
}

module attributes {stable_mosaic.version = 11 : i64} {
  func.func @_gemm_shift_act_kernel(%arg0: i32, %arg1: i32, %arg2: memref<128x256xbf16, #tpu.memory_space<vmem>>, %arg3: memref<256x128xbf16, #tpu.memory_space<vmem>>, %arg4: memref<1x128xf32, #tpu.memory_space<vmem>>, %arg5: memref<128x128xbf16, #tpu.memory_space<vmem>>) attributes {dimension_semantics = [#tpu.dimension_semantics<parallel>, #tpu.dimension_semantics<parallel>], iteration_bounds = array<i64: 1, 1>, scalar_prefetch = 0 : i64, scratch_operands = 0 : i64, tpu.core_type = #tpu.core_type<tc>, window_params = [{transform_indices = @transform_0, window_bounds = array<i64: 128, 256>}, {transform_indices = @transform_1, window_bounds = array<i64: 256, 128>}, {transform_indices = @transform_2, window_bounds = array<i64: 1, 128>}, {transform_indices = @transform_3, window_bounds = array<i64: 128, 128>}]} {
    %c0 = arith.constant 0 : index
    %c0_0 = arith.constant 0 : index
    %0 = vector.load %arg2[%c0, %c0_0] : memref<128x256xbf16, #tpu.memory_space<vmem>>, vector<128x256xbf16>
    %c0_1 = arith.constant 0 : index
    %c0_2 = arith.constant 0 : index
    %1 = vector.load %arg3[%c0_1, %c0_2] : memref<256x128xbf16, #tpu.memory_space<vmem>>, vector<256x128xbf16>
    %cst = arith.constant dense<0.000000e+00> : vector<128x128xf32>
    %2 = tpu.matmul %0, %1, %cst {dimension_numbers = #tpu.dot_dimension_numbers<[1], [0], [0], [1], [0, 0, 1, 1], [], []>} : vector<128x256xbf16>, vector<256x128xbf16>, vector<128x128xf32> -> vector<128x128xf32>
    %c0_3 = arith.constant 0 : index
    %c0_4 = arith.constant 0 : index
    %3 = vector.load %arg4[%c0_3, %c0_4] : memref<1x128xf32, #tpu.memory_space<vmem>>, vector<1x128xf32>
    %4 = vector.broadcast %3 : vector<1x128xf32> to vector<128x128xf32>
    %5 = arith.addf %2, %4 : vector<128x128xf32>
    %cst_5 = arith.constant 0.000000e+00 : f32
    %6 = vector.broadcast %cst_5 : f32 to vector<128x128xf32>
    %7 = arith.cmpf oge, %5, %6 : vector<128x128xf32>
    %cst_6 = arith.constant 2.000000e-01 : f32
    %8 = vector.broadcast %cst_6 : f32 to vector<128x128xf32>
    %9 = arith.mulf %8, %5 : vector<128x128xf32>
    %10 = arith.select %7, %5, %9 : vector<128x128xi1>, vector<128x128xf32>
    %11 = arith.truncf %10 : vector<128x128xf32> to vector<128x128xbf16>
    %c0_7 = arith.constant 0 : index
    %c0_8 = arith.constant 0 : index
    %12 = vector.load %arg5[%c0_7, %c0_8] : memref<128x128xbf16, #tpu.memory_space<vmem>>, vector<128x128xbf16>
    tpu.vector_store %arg5[%c0_7, %c0_8], %11 {strides = array<i32>} : memref<128x128xbf16, #tpu.memory_space<vmem>>, vector<128x128xbf16>,
    return
  }
  func.func @transform_0(%arg0: i32, %arg1: i32) -> (i32, i32) {
    %c0_i32 = arith.constant 0 : i32
    %c0_i32_0 = arith.constant 0 : i32
    return %arg0, %c0_i32 : i32, i32
  }
  func.func @transform_1(%arg0: i32, %arg1: i32) -> (i32, i32) {
    %c0_i32 = arith.constant 0 : i32
    %c0_i32_0 = arith.constant 0 : i32
    return %c0_i32, %arg1 : i32, i32
  }
  func.func @transform_2(%arg0: i32, %arg1: i32) -> (i32, i32) {
    %c0_i32 = arith.constant 0 : i32
    %c0_i32_0 = arith.constant 0 : i32
    return %c0_i32, %arg1 : i32, i32
  }
  func.func @transform_3(%arg0: i32, %arg1: i32) -> (i32, i32) {
    %c0_i32 = arith.constant 0 : i32
    return %arg0, %arg1 : i32, i32
  }
}

module attributes {stable_mosaic.version = 11 : i64} {
  func.func @_gemm_shift_act_kernel(%arg0: i32, %arg1: i32, %arg2: memref<32x512xbf16, #tpu.memory_space<vmem>>, %arg3: memref<512x128xbf16, #tpu.memory_space<vmem>>, %arg4: memref<1x128xf32, #tpu.memory_space<vmem>>, %arg5: memref<32x128xbf16, #tpu.memory_space<vmem>>) attributes {dimension_semantics = [#tpu.dimension_semantics<parallel>, #tpu.dimension_semantics<parallel>], iteration_bounds = array<i64: 1, 1>, scalar_prefetch = 0 : i64, scratch_operands = 0 : i64, tpu.core_type = #tpu.core_type<tc>, window_params = [{transform_indices = @transform_0, window_bounds = array<i64: 32, 512>}, {transform_indices = @transform_1, window_bounds = array<i64: 512, 128>}, {transform_indices = @transform_2, window_bounds = array<i64: 1, 128>}, {transform_indices = @transform_3, window_bounds = array<i64: 32, 128>}]} {
    %c0 = arith.constant 0 : index
    %c0_0 = arith.constant 0 : index
    %0 = vector.load %arg2[%c0, %c0_0] : memref<32x512xbf16, #tpu.memory_space<vmem>>, vector<32x512xbf16>
    %c0_1 = arith.constant 0 : index
    %c0_2 = arith.constant 0 : index
    %1 = vector.load %arg3[%c0_1, %c0_2] : memref<512x128xbf16, #tpu.memory_space<vmem>>, vector<512x128xbf16>
    %cst = arith.constant dense<0.000000e+00> : vector<32x128xf32>
    %2 = tpu.matmul %0, %1, %cst {dimension_numbers = #tpu.dot_dimension_numbers<[1], [0], [0], [1], [0, 0, 1, 1], [], []>} : vector<32x512xbf16>, vector<512x128xbf16>, vector<32x128xf32> -> vector<32x128xf32>
    %c0_3 = arith.constant 0 : index
    %c0_4 = arith.constant 0 : index
    %3 = vector.load %arg4[%c0_3, %c0_4] : memref<1x128xf32, #tpu.memory_space<vmem>>, vector<1x128xf32>
    %4 = vector.broadcast %3 : vector<1x128xf32> to vector<32x128xf32>
    %5 = arith.addf %2, %4 : vector<32x128xf32>
    %cst_5 = arith.constant 0.000000e+00 : f32
    %6 = vector.broadcast %cst_5 : f32 to vector<32x128xf32>
    %7 = arith.cmpf oge, %5, %6 : vector<32x128xf32>
    %cst_6 = arith.constant 2.000000e-01 : f32
    %8 = vector.broadcast %cst_6 : f32 to vector<32x128xf32>
    %9 = arith.mulf %8, %5 : vector<32x128xf32>
    %10 = arith.select %7, %5, %9 : vector<32x128xi1>, vector<32x128xf32>
    %11 = arith.truncf %10 : vector<32x128xf32> to vector<32x128xbf16>
    %c0_7 = arith.constant 0 : index
    %c0_8 = arith.constant 0 : index
    %12 = vector.load %arg5[%c0_7, %c0_8] : memref<32x128xbf16, #tpu.memory_space<vmem>>, vector<32x128xbf16>
    tpu.vector_store %arg5[%c0_7, %c0_8], %11 {strides = array<i32>} : memref<32x128xbf16, #tpu.memory_space<vmem>>, vector<32x128xbf16>,
    return
  }
  func.func @transform_0(%arg0: i32, %arg1: i32) -> (i32, i32) {
    %c0_i32 = arith.constant 0 : i32
    %c0_i32_0 = arith.constant 0 : i32
    return %arg0, %c0_i32 : i32, i32
  }
  func.func @transform_1(%arg0: i32, %arg1: i32) -> (i32, i32) {
    %c0_i32 = arith.constant 0 : i32
    %c0_i32_0 = arith.constant 0 : i32
    return %c0_i32, %arg1 : i32, i32
  }
  func.func @transform_2(%arg0: i32, %arg1: i32) -> (i32, i32) {
    %c0_i32 = arith.constant 0 : i32
    %c0_i32_0 = arith.constant 0 : i32
    return %c0_i32, %arg1 : i32, i32
  }
  func.func @transform_3(%arg0: i32, %arg1: i32) -> (i32, i32) {
    %c0_i32 = arith.constant 0 : i32
    return %arg0, %arg1 : i32, i32
  }
}

module attributes {stable_mosaic.version = 11 : i64} {
  func.func @_gemm_shift_act_kernel(%arg0: i32, %arg1: i32, %arg2: memref<16x1024xbf16, #tpu.memory_space<vmem>>, %arg3: memref<1024x128xbf16, #tpu.memory_space<vmem>>, %arg4: memref<1x128xf32, #tpu.memory_space<vmem>>, %arg5: memref<16x128xf32, #tpu.memory_space<vmem>>) attributes {dimension_semantics = [#tpu.dimension_semantics<parallel>, #tpu.dimension_semantics<parallel>], iteration_bounds = array<i64: 1, 1>, scalar_prefetch = 0 : i64, scratch_operands = 0 : i64, tpu.core_type = #tpu.core_type<tc>, window_params = [{transform_indices = @transform_0, window_bounds = array<i64: 16, 1024>}, {transform_indices = @transform_1, window_bounds = array<i64: 1024, 128>}, {transform_indices = @transform_2, window_bounds = array<i64: 1, 128>}, {transform_indices = @transform_3, window_bounds = array<i64: 16, 128>}]} {
    %c0 = arith.constant 0 : index
    %c0_0 = arith.constant 0 : index
    %0 = vector.load %arg2[%c0, %c0_0] : memref<16x1024xbf16, #tpu.memory_space<vmem>>, vector<16x1024xbf16>
    %c0_1 = arith.constant 0 : index
    %c0_2 = arith.constant 0 : index
    %1 = vector.load %arg3[%c0_1, %c0_2] : memref<1024x128xbf16, #tpu.memory_space<vmem>>, vector<1024x128xbf16>
    %cst = arith.constant dense<0.000000e+00> : vector<16x128xf32>
    %2 = tpu.matmul %0, %1, %cst {dimension_numbers = #tpu.dot_dimension_numbers<[1], [0], [0], [1], [0, 0, 1, 1], [], []>} : vector<16x1024xbf16>, vector<1024x128xbf16>, vector<16x128xf32> -> vector<16x128xf32>
    %c0_3 = arith.constant 0 : index
    %c0_4 = arith.constant 0 : index
    %3 = vector.load %arg4[%c0_3, %c0_4] : memref<1x128xf32, #tpu.memory_space<vmem>>, vector<1x128xf32>
    %4 = vector.broadcast %3 : vector<1x128xf32> to vector<16x128xf32>
    %5 = arith.addf %2, %4 : vector<16x128xf32>
    %cst_5 = arith.constant 0.000000e+00 : f32
    %6 = vector.broadcast %cst_5 : f32 to vector<16x128xf32>
    %7 = arith.subf %6, %5 : vector<16x128xf32>
    %8 = math.exp %7 : vector<16x128xf32>
    %cst_6 = arith.constant 1.000000e+00 : f32
    %9 = vector.broadcast %cst_6 : f32 to vector<16x128xf32>
    %10 = arith.addf %9, %8 : vector<16x128xf32>
    %11 = tpu.reciprocal %10 {approx = true} : vector<16x128xf32> -> vector<16x128xf32>
    %c0_7 = arith.constant 0 : index
    %c0_8 = arith.constant 0 : index
    %12 = vector.load %arg5[%c0_7, %c0_8] : memref<16x128xf32, #tpu.memory_space<vmem>>, vector<16x128xf32>
    tpu.vector_store %arg5[%c0_7, %c0_8], %11 {strides = array<i32>} : memref<16x128xf32, #tpu.memory_space<vmem>>, vector<16x128xf32>,
    return
  }
  func.func @transform_0(%arg0: i32, %arg1: i32) -> (i32, i32) {
    %c0_i32 = arith.constant 0 : i32
    %c0_i32_0 = arith.constant 0 : i32
    return %arg0, %c0_i32 : i32, i32
  }
  func.func @transform_1(%arg0: i32, %arg1: i32) -> (i32, i32) {
    %c0_i32 = arith.constant 0 : i32
    %c0_i32_0 = arith.constant 0 : i32
    return %c0_i32, %arg1 : i32, i32
  }
  func.func @transform_2(%arg0: i32, %arg1: i32) -> (i32, i32) {
    %c0_i32 = arith.constant 0 : i32
    %c0_i32_0 = arith.constant 0 : i32
    return %c0_i32, %arg1 : i32, i32
  }
  func.func @transform_3(%arg0: i32, %arg1: i32) -> (i32, i32) {
    %c0_i32 = arith.constant 0 : i32
    return %arg0, %arg1 : i32, i32
  }
}

</mosaic_0001>

<llo_original>
// kernel: discriminator_forward.5
$region0: #{discriminator_forward.5}
  #allocation0 [shape = 'u32[]', space=smem, size = 0x4, offset = 0x4, fixed_abs, tag = 'smem constant byte address 0x4 - core index']
  #allocation1 [shape = 'u32[144,128]{1,0:T(1,128)}', space=vmem, size = 0x12000, scoped, tag = 'internal scratch']
  %s0 = inlined_call_operand.vmem [shape: bf16[2048,48], index: 0, kind: input, shape index: {}]
  %s1 = inlined_call_operand.vmem [shape: bf16[48,128], index: 1, kind: input, shape index: {}]
  %s2 = inlined_call_operand.vmem [shape: f32[1,128], index: 2, kind: input, shape index: {}]
  %s3 = inlined_call_operand.vmem [shape: bf16[2048,128], index: 3, kind: output, shape index: {}]
  %s4 = sld [smem:[#allocation0]]
  $region45: #{discriminator_forward.5} parent=0
    _
  %s6 = ssub.s32 1, %s4
  %s7 = scalar_select 0, %s6, %s4
  loop: start=0, step=1, limit=6
  $region2: #{discriminator_forward.5} parent=0 // loop_pre_header
    _
  $region3: #{discriminator_forward.5} parent=0 // loop_header
    %s9 = sphi 0, %s13
    %p10 = scmp.ge.s32.totalorder %s9, 6
    %s16 = sphi 0, %s28
    %s17 = sphi 0, %s24
    %s18 = sphi 0, %s16
    %s19 = sphi 0, %s17
    %s20 = sphi 0, %s18
    %s21 = sphi 0, %s19
    %s31 = sphi 0, %s33
    %s34 = sphi 0, %s31
    %s35 = sphi 0, %s34
    %s51 = sphi 0, %s35
    %s57 = sphi 0, %s59
    %s60 = sphi 0, %s57
    %s61 = sphi 0, %s60
    %s77 = sphi 0, %s61
    %s83 = sphi 0, %s85
    %s86 = sphi 0, %s83
    %s87 = sphi 0, %s86
    %s103 = sphi 0, %s87
    %s111 = sphi 0, %s113
    %s114 = sphi 0, %s111
    %s115 = sphi 0, %s114
    %s131 = sphi 0, %s115
  $region4: #{discriminator_forward.5} parent=0 // loop_header_branch
    %12 = sbr.rel (%p10) target = $region8
  $region5: #{discriminator_forward.5} parent=0 // loop_body
    %s14 = ssub.s32 %s9, 1
    %s15 = ssub.s32 %s9, 2
    %s22 = sadd.s32 1, %s17
    %p23 = scmp.ge.s32.totalorder %s22, 1
    %s24 = scalar_select %p23, 0, %s22
    %s25 = sadd.s32 1, %s16
    %s26 = scalar_select %p23, %s25, %s16
    %p27 = scmp.ge.s32.totalorder %s26, 4
    %s28 = scalar_select %p27, 0, %s26
    %s29 = ssub.s32 %s16, %s28
    %p30 = scmp.eq.s32.totalorder %s29, 0
    %s32 = sadd.s32 %s31, 1
    %s33 = scalar_select %p30, %s31, %s32
    %p36 = pneg %p30
    %p37 = scmp.eq.s32.totalorder %s9, 3
    %p38 = por %p36, %p37
    %p39 = scmp.ne.s32.totalorder %s31, %s34
    %p40 = scmp.eq.s32.totalorder %s9, 0
    %p41 = por %p39, %p40
    %p42 = scmp.ne.s32.totalorder %s31, %s34
    %p43 = scmp.eq.s32.totalorder %s14, 3
    %p44 = por %p42, %p43
    %p45 = scmp.ne.s32.totalorder %s34, %s35
    %p46 = scmp.eq.s32.totalorder %s14, 0
    %p47 = por %p45, %p46
    %p48 = scmp.ne.s32.totalorder %s34, %s35
    %p49 = scmp.eq.s32.totalorder %s15, 3
    %p50 = por %p48, %p49
    %p52 = scmp.ne.s32.totalorder %s35, %s51
    %p53 = scmp.eq.s32.totalorder %s15, 0
    %p54 = por %p52, %p53
    %s55 = ssub.s32 %s17, %s24
    %p56 = scmp.eq.s32.totalorder %s55, 0
    %s58 = sadd.s32 %s57, 1
    %s59 = scalar_select %p56, %s57, %s58
    %p62 = pneg %p56
    %p63 = scmp.eq.s32.totalorder %s9, 3
    %p64 = por %p62, %p63
    %p65 = scmp.ne.s32.totalorder %s57, %s60
    %p66 = scmp.eq.s32.totalorder %s9, 0
    %p67 = por %p65, %p66
    %p68 = scmp.ne.s32.totalorder %s57, %s60
    %p69 = scmp.eq.s32.totalorder %s14, 3
    %p70 = por %p68, %p69
    %p71 = scmp.ne.s32.totalorder %s60, %s61
    %p72 = scmp.eq.s32.totalorder %s14, 0
    %p73 = por %p71, %p72
    %p74 = scmp.ne.s32.totalorder %s60, %s61
    %p75 = scmp.eq.s32.totalorder %s15, 3
    %p76 = por %p74, %p75
    %p78 = scmp.ne.s32.totalorder %s61, %s77
    %p79 = scmp.eq.s32.totalorder %s15, 0
    %p80 = por %p78, %p79
    %s81 = ssub.s32 %s17, %s24
    %p82 = scmp.eq.s32.totalorder %s81, 0
    %s84 = sadd.s32 %s83, 1
    %s85 = scalar_select %p82, %s83, %s84
    %p88 = pneg %p82
    %p89 = scmp.eq.s32.totalorder %s9, 3
    %p90 = por %p88, %p89
    %p91 = scmp.ne.s32.totalorder %s83, %s86
    %p92 = scmp.eq.s32.totalorder %s9, 0
    %p93 = por %p91, %p92
    %p94 = scmp.ne.s32.totalorder %s83, %s86
    %p95 = scmp.eq.s32.totalorder %s14, 3
    %p96 = por %p94, %p95
    %p97 = scmp.ne.s32.totalorder %s86, %s87
    %p98 = scmp.eq.s32.totalorder %s14, 0
    %p99 = por %p97, %p98
    %p100 = scmp.ne.s32.totalorder %s86, %s87
    %p101 = scmp.eq.s32.totalorder %s15, 3
    %p102 = por %p100, %p101
    %p104 = scmp.ne.s32.totalorder %s87, %s103
    %p105 = scmp.eq.s32.totalorder %s15, 0
    %p106 = por %p104, %p105
    %s107 = ssub.s32 %s16, %s28
    %s108 = ssub.s32 %s17, %s24
    %s109 = sor.u32 %s107, %s108
    %p110 = scmp.eq.s32.totalorder %s109, 0
    %s112 = sadd.s32 %s111, 1
    %s113 = scalar_select %p110, %s111, %s112
    %p116 = pneg %p110
    %p117 = scmp.eq.s32.totalorder %s9, 3
    %p118 = por %p116, %p117
    %p119 = scmp.ne.s32.totalorder %s111, %s114
    %p120 = scmp.eq.s32.totalorder %s9, 0
    %p121 = por %p119, %p120
    %p122 = scmp.ne.s32.totalorder %s111, %s114
    %p123 = scmp.eq.s32.totalorder %s14, 3
    %p124 = por %p122, %p123
    %p125 = scmp.ne.s32.totalorder %s114, %s115
    %p126 = scmp.eq.s32.totalorder %s14, 0
    %p127 = por %p125, %p126
    %p128 = scmp.ne.s32.totalorder %s114, %s115
    %p129 = scmp.eq.s32.totalorder %s15, 3
    %p130 = por %p128, %p129
    %p132 = scmp.ne.s32.totalorder %s115, %s131
    %p133 = scmp.eq.s32.totalorder %s15, 0
    %p134 = por %p132, %p133
    %p135 = scmp.le.s32.totalorder 1, %s9
    %p136 = scmp.lt.s32.totalorder %s9, 5
    %p137 = pnand %p135, %p136
    %p138 = pneg %p137
    // Predicated region
    $region9: #{discriminator_forward.5} parent=5 // pred_check
      _
    $region10: #{discriminator_forward.5} parent=5 // pred_check_branch
      %140 = sbr.rel (%p137) target = $region12
    $region11: #{discriminator_forward.5} parent=5 // pred_region
      %s141 = ssub.s32 %s9, 1
      // Predicated region
      $region13: #{discriminator_forward.5} parent=11 // pred_check
        %p142 = pneg %p73
      $region14: #{discriminator_forward.5} parent=11 // pred_check_branch
        %144 = sbr.rel (%p142) target = $region16
      $region15: #{discriminator_forward.5} parent=11 // pred_region
        %p145 = scmp.lt.s32.totalorder %s19, 0
        %s146 = scalar_select %p145, %s19, 0
        %s147 = smul.addr %s146, 4
        %s148 = scalar_lea.vmem %s1, %s147
      $region16: #{discriminator_forward.5} parent=11 // pred_fallthru
        _
      // Predicated region
      $region17: #{discriminator_forward.5} parent=11 // pred_check
        %p149 = pneg %p99
      $region18: #{discriminator_forward.5} parent=11 // pred_check_branch
        %151 = sbr.rel (%p149) target = $region20
      $region19: #{discriminator_forward.5} parent=11 // pred_region
        %p152 = scmp.lt.s32.totalorder %s19, 0
        %s153 = scalar_select %p152, %s19, 0
        %s154 = scalar_lea.vmem %s2, %s153
      $region20: #{discriminator_forward.5} parent=11 // pred_fallthru
        _
    $region12: #{discriminator_forward.5} parent=5 // pred_fallthru
      _
    %p155 = scmp.lt.s32.totalorder %s9, 4
    // Predicated region
    $region21: #{discriminator_forward.5} parent=5 // pred_check
      %p156 = pneg %p155
    $region22: #{discriminator_forward.5} parent=5 // pred_check_branch
      %158 = sbr.rel (%p156) target = $region24
    $region23: #{discriminator_forward.5} parent=5 // pred_region
      // Predicated region
      $region25: #{discriminator_forward.5} parent=23 // pred_check
        %p159 = pneg %p41
      $region26: #{discriminator_forward.5} parent=23 // pred_check_branch
        %161 = sbr.rel (%p159) target = $region28
      $region27: #{discriminator_forward.5} parent=23 // pred_region
        %s162 = smul.u32 64, %s16
        %p163 = scmp.lt.s32.totalorder %s162, 255
        %s164 = scalar_select %p163, %s162, 255
        %s165 = smul.addr %s164, 4
        %s166 = scalar_lea.vmem %s0, %s165
        %s167 = smul.u32 64, %s16
      $region28: #{discriminator_forward.5} parent=23 // pred_fallthru
        _
    $region24: #{discriminator_forward.5} parent=5 // pred_fallthru
      _
    %p168 = scmp.le.s32.totalorder 1, %s9
    %p169 = scmp.lt.s32.totalorder %s9, 5
    %p170 = pnand %p168, %p169
    %p171 = pneg %p170
    // Predicated region
    $region29: #{discriminator_forward.5} parent=5 // pred_check
      _
    $region30: #{discriminator_forward.5} parent=5 // pred_check_branch
      %173 = sbr.rel (%p170) target = $region32
    $region31: #{discriminator_forward.5} parent=5 // pred_region
      %s174 = ssub.s32 %s9, 1
      %s175 = smul.u32 64, %s18
      %p176 = scmp.lt.s32.totalorder %s175, 255
      %s177 = scalar_select %p176, %s175, 255
      %s178 = smul.addr %s177, 4
      %s179 = scalar_lea.vmem %s0, %s178
      %p180 = pneg %p47
      %p181 = pneg %p44
      %p182 = scmp.lt.s32.totalorder %s19, 0
      %s183 = scalar_select %p182, %s19, 0
      %s184 = smul.addr %s183, 4
      %s185 = scalar_lea.vmem %s1, %s184
      %p186 = pneg %p73
      %p187 = pneg %p70
      %p188 = scmp.lt.s32.totalorder %s19, 0
      %s189 = scalar_select %p188, %s19, 0
      %s190 = scalar_lea.vmem %s2, %s189
      %p191 = pneg %p99
      %p192 = pneg %p96
      %p193 = pneg %p127
      %p194 = pneg %p124
      %s195 = smul.u32 64, %s18
      %p196 = scmp.lt.s32.totalorder %s195, 255
      %s197 = scalar_select %p196, %s195, 255
      %p198 = scmp.lt.s32.totalorder %s19, 0
      %s199 = scalar_select %p198, %s19, 0
      %s200 = sadd.s32 %s199, %s197
      %s201 = smul.addr %s200, 4
      %s202 = scalar_lea.vmem %s3, %s201
      %s203 = smul.u32 64, %s18
      %p204 = scmp.lt.s32.totalorder %s203, 255
      %s205 = scalar_select %p204, %s203, 255
      %s206 = smul.addr %s205, 4
      %s207 = scalar_lea.vmem %s0, %s206
      %s208 = smul.u32 64, %s18
      %p209 = scmp.lt.s32.totalorder %s19, 0
      %s210 = scalar_select %p209, %s19, 0
      %s211 = smul.addr %s210, 4
      %s212 = scalar_lea.vmem %s1, %s211
      %p213 = scmp.lt.s32.totalorder %s19, 0
      %s214 = scalar_select %p213, %s19, 0
      %s215 = scalar_lea.vmem %s2, %s214
      %s216 = smul.u32 64, %s18
      %p217 = scmp.lt.s32.totalorder %s216, 255
      %s218 = scalar_select %p217, %s216, 255
      %p219 = scmp.lt.s32.totalorder %s19, 0
      %s220 = scalar_select %p219, %s19, 0
      %s221 = sadd.s32 %s220, %s218
      %s222 = smul.addr %s221, 4
      %s223 = scalar_lea.vmem %s3, %s222
      %s224 = smul.u32 64, %s18
      %v226 = vld [vmem:[%s207] sm:$0xf]
      %v227 = vld [vmem:[%s207 + $0x4] sm:$0xf]
      %v228 = vld [vmem:[%s207 + $0x8] sm:$0xf]
      %v229 = vld [vmem:[%s207 + $0xc] sm:$0xf]
      %v230 = vld [vmem:[%s207 + $0x10] sm:$0xf]
      %v231 = vld [vmem:[%s207 + $0x14] sm:$0xf]
      %v232 = vld [vmem:[%s207 + $0x18] sm:$0xf]
      %v233 = vld [vmem:[%s207 + $0x1c] sm:$0xf]
      %v234 = vld [vmem:[%s207 + $0x20] sm:$0xf]
      %v235 = vld [vmem:[%s207 + $0x24] sm:$0xf]
      %v236 = vld [vmem:[%s207 + $0x28] sm:$0xf]
      %v237 = vld [vmem:[%s207 + $0x2c] sm:$0xf]
      %v238 = vld [vmem:[%s207 + $0x30] sm:$0xf]
      %v239 = vld [vmem:[%s207 + $0x34] sm:$0xf]
      %v240 = vld [vmem:[%s207 + $0x38] sm:$0xf]
      %v241 = vld [vmem:[%s207 + $0x3c] sm:$0xf]
      %v242 = vld [vmem:[%s207 + $0x40] sm:$0xf]
      %v243 = vld [vmem:[%s207 + $0x44] sm:$0xf]
      %v244 = vld [vmem:[%s207 + $0x48] sm:$0xf]
      %v245 = vld [vmem:[%s207 + $0x4c] sm:$0xf]
      %v246 = vld [vmem:[%s207 + $0x50] sm:$0xf]
      %v247 = vld [vmem:[%s207 + $0x54] sm:$0xf]
      %v248 = vld [vmem:[%s207 + $0x58] sm:$0xf]
      %v249 = vld [vmem:[%s207 + $0x5c] sm:$0xf]
      %v250 = vld [vmem:[%s207 + $0x60] sm:$0xf]
      %v251 = vld [vmem:[%s207 + $0x64] sm:$0xf]
      %v252 = vld [vmem:[%s207 + $0x68] sm:$0xf]
      %v253 = vld [vmem:[%s207 + $0x6c] sm:$0xf]
      %v254 = vld [vmem:[%s207 + $0x70] sm:$0xf]
      %v255 = vld [vmem:[%s207 + $0x74] sm:$0xf]
      %v256 = vld [vmem:[%s207 + $0x78] sm:$0xf]
      %v257 = vld [vmem:[%s207 + $0x7c] sm:$0xf]
      %v258 = vld [vmem:[%s207 + $0x80] sm:$0xf]
      %v259 = vld [vmem:[%s207 + $0x84] sm:$0xf]
      %v260 = vld [vmem:[%s207 + $0x88] sm:$0xf]
      %v261 = vld [vmem:[%s207 + $0x8c] sm:$0xf]
      %v262 = vld [vmem:[%s207 + $0x90] sm:$0xf]
      %v263 = vld [vmem:[%s207 + $0x94] sm:$0xf]
      %v264 = vld [vmem:[%s207 + $0x98] sm:$0xf]
      %v265 = vld [vmem:[%s207 + $0x9c] sm:$0xf]
      %v266 = vld [vmem:[%s207 + $0xa0] sm:$0xf]
      %v267 = vld [vmem:[%s207 + $0xa4] sm:$0xf]
      %v268 = vld [vmem:[%s207 + $0xa8] sm:$0xf]
      %v269 = vld [vmem:[%s207 + $0xac] sm:$0xf]
      %v270 = vld [vmem:[%s207 + $0xb0] sm:$0xf]
      %v271 = vld [vmem:[%s207 + $0xb4] sm:$0xf]
      %v272 = vld [vmem:[%s207 + $0xb8] sm:$0xf]
      %v273 = vld [vmem:[%s207 + $0xbc] sm:$0xf]
      %v274 = vld [vmem:[%s207 + $0xc0] sm:$0xf]
      %v275 = vld [vmem:[%s207 + $0xc4] sm:$0xf]
      %v276 = vld [vmem:[%s207 + $0xc8] sm:$0xf]
      %v277 = vld [vmem:[%s207 + $0xcc] sm:$0xf]
      %v278 = vld [vmem:[%s207 + $0xd0] sm:$0xf]
      %v279 = vld [vmem:[%s207 + $0xd4] sm:$0xf]
      %v280 = vld [vmem:[%s207 + $0xd8] sm:$0xf]
      %v281 = vld [vmem:[%s207 + $0xdc] sm:$0xf]
      %v282 = vld [vmem:[%s207 + $0xe0] sm:$0xf]
      %v283 = vld [vmem:[%s207 + $0xe4] sm:$0xf]
      %v284 = vld [vmem:[%s207 + $0xe8] sm:$0xf]
      %v285 = vld [vmem:[%s207 + $0xec] sm:$0xf]
      %v286 = vld [vmem:[%s207 + $0xf0] sm:$0xf]
      %v287 = vld [vmem:[%s207 + $0xf4] sm:$0xf]
      %v288 = vld [vmem:[%s207 + $0xf8] sm:$0xf]
      %v289 = vld [vmem:[%s207 + $0xfc] sm:$0xf]
      %v290 = vld [vmem:[%s212] sm:$0xf]
      %v291 = vld [vmem:[%s212 + $0x4] sm:$0xf]
      %v292 = vld [vmem:[%s212 + $0x8] sm:$0xf]
      %v293 = vld [vmem:[%s212 + $0xc] sm:$0xf]
      %v294 = vld [vmem:[%s212 + $0x10] sm:$0xf]
      %v295 = vld [vmem:[%s212 + $0x14] sm:$0xf]
      %v296 = vld [vmem:[%s215] sm:$0x1]
      %v298 = vlaneseq
      %v299 = vshrl.u32 %v298, 7
      %v300 = vsub.s32 0, %v299
      %v301 = vrot.slane %v296, %v300
      %v367 = vunpack.c.l.b16 %v226
      %v368 = vunpack.c.l.b16 %v227
      %v369 = vunpack.c.l.b16 %v228
      %v370 = vunpack.c.l.b16 %v229
      %v371 = vunpack.c.l.b16 %v230
      %v372 = vunpack.c.l.b16 %v231
      %v373 = vunpack.c.l.b16 %v232
      %v374 = vunpack.c.l.b16 %v233
      %v375 = vunpack.c.l.b16 %v234
      %v376 = vunpack.c.l.b16 %v235
      %v377 = vunpack.c.l.b16 %v236
      %v378 = vunpack.c.l.b16 %v237
      %v379 = vunpack.c.l.b16 %v238
      %v380 = vunpack.c.l.b16 %v239
      %v381 = vunpack.c.l.b16 %v240
      %v382 = vunpack.c.l.b16 %v241
      %v383 = vunpack.c.l.b16 %v242
      %v384 = vunpack.c.l.b16 %v243
      %v385 = vunpack.c.l.b16 %v244
      %v386 = vunpack.c.l.b16 %v245
      %v387 = vunpack.c.l.b16 %v246
      %v388 = vunpack.c.l.b16 %v247
      %v389 = vunpack.c.l.b16 %v248
      %v390 = vunpack.c.l.b16 %v249
      %v391 = vunpack.c.l.b16 %v250
      %v392 = vunpack.c.l.b16 %v251
      %v393 = vunpack.c.l.b16 %v252
      %v394 = vunpack.c.l.b16 %v253
      %v395 = vunpack.c.l.b16 %v254
      %v396 = vunpack.c.l.b16 %v255
      %v397 = vunpack.c.l.b16 %v256
      %v398 = vunpack.c.l.b16 %v257
      %v399 = vunpack.c.l.b16 %v258
      %v400 = vunpack.c.l.b16 %v259
      %v401 = vunpack.c.l.b16 %v260
      %v402 = vunpack.c.l.b16 %v261
      %v403 = vunpack.c.l.b16 %v262
      %v404 = vunpack.c.l.b16 %v263
      %v405 = vunpack.c.l.b16 %v264
      %v406 = vunpack.c.l.b16 %v265
      %v407 = vunpack.c.l.b16 %v266
      %v408 = vunpack.c.l.b16 %v267
      %v409 = vunpack.c.l.b16 %v268
      %v410 = vunpack.c.l.b16 %v269
      %v411 = vunpack.c.l.b16 %v270
      %v412 = vunpack.c.l.b16 %v271
      %v413 = vunpack.c.l.b16 %v272
      %v414 = vunpack.c.l.b16 %v273
      %v415 = vunpack.c.l.b16 %v274
      %v416 = vunpack.c.l.b16 %v275
      %v417 = vunpack.c.l.b16 %v276
      %v418 = vunpack.c.l.b16 %v277
      %v419 = vunpack.c.l.b16 %v278
      %v420 = vunpack.c.l.b16 %v279
      %v421 = vunpack.c.l.b16 %v280
      %v422 = vunpack.c.l.b16 %v281
      %v423 = vunpack.c.l.b16 %v282
      %v424 = vunpack.c.l.b16 %v283
      %v425 = vunpack.c.l.b16 %v284
      %v426 = vunpack.c.l.b16 %v285
      %v427 = vunpack.c.l.b16 %v286
      %v428 = vunpack.c.l.b16 %v287
      %v429 = vunpack.c.l.b16 %v288
      %v430 = vunpack.c.l.b16 %v289
      %v431 = vpack.c.b16 %v368, %v367
      %v432 = vpack.c.b16 %v370, %v369
      %v433 = vpack.c.b16 %v372, %v371
      %v434 = vpack.c.b16 %v374, %v373
      %v435 = vpack.c.b16 %v376, %v375
      %v436 = vpack.c.b16 %v378, %v377
      %v437 = vpack.c.b16 %v380, %v379
      %v438 = vpack.c.b16 %v382, %v381
      %v439 = vpack.c.b16 %v384, %v383
      %v440 = vpack.c.b16 %v386, %v385
      %v441 = vpack.c.b16 %v388, %v387
      %v442 = vpack.c.b16 %v390, %v389
      %v443 = vpack.c.b16 %v392, %v391
      %v444 = vpack.c.b16 %v394, %v393
      %v445 = vpack.c.b16 %v396, %v395
      %v446 = vpack.c.b16 %v398, %v397
      %v447 = vpack.c.b16 %v400, %v399
      %v448 = vpack.c.b16 %v402, %v401
      %v449 = vpack.c.b16 %v404, %v403
      %v450 = vpack.c.b16 %v406, %v405
      %v451 = vpack.c.b16 %v408, %v407
      %v452 = vpack.c.b16 %v410, %v409
      %v453 = vpack.c.b16 %v412, %v411
      %v454 = vpack.c.b16 %v414, %v413
      %v455 = vpack.c.b16 %v416, %v415
      %v456 = vpack.c.b16 %v418, %v417
      %v457 = vpack.c.b16 %v420, %v419
      %v458 = vpack.c.b16 %v422, %v421
      %v459 = vpack.c.b16 %v424, %v423
      %v460 = vpack.c.b16 %v426, %v425
      %v461 = vpack.c.b16 %v428, %v427
      %v462 = vpack.c.b16 %v430, %v429
      %v469 = vunpack.c.l.b16 %v290
      %v470 = vunpack.c.l.b16 %v291
      %v471 = vunpack.c.l.b16 %v292
      %v472 = vunpack.c.l.b16 %v293
      %v473 = vunpack.c.l.b16 %v294
      %v474 = vunpack.c.l.b16 %v295
      %v475 = vpack.c.b16 %v470, %v469
      %v476 = vpack.c.b16 %v472, %v471
      %v477 = vpack.c.b16 %v474, %v473
      %vm481 = vcmask 392192
      %v483 = vsel %vm481, %v431, 0
      %v486 = vsel %vm481, %v432, 0
      %v489 = vsel %vm481, %v433, 0
      %v492 = vsel %vm481, %v434, 0
      %v495 = vsel %vm481, %v435, 0
      %v498 = vsel %vm481, %v436, 0
      %v501 = vsel %vm481, %v437, 0
      %v504 = vsel %vm481, %v438, 0
      %v507 = vsel %vm481, %v439, 0
      %v510 = vsel %vm481, %v440, 0
      %v513 = vsel %vm481, %v441, 0
      %v516 = vsel %vm481, %v442, 0
      %v519 = vsel %vm481, %v443, 0
      %v522 = vsel %vm481, %v444, 0
      %v525 = vsel %vm481, %v445, 0
      %v528 = vsel %vm481, %v446, 0
      %v531 = vsel %vm481, %v447, 0
      %v534 = vsel %vm481, %v448, 0
      %v537 = vsel %vm481, %v449, 0
      %v540 = vsel %vm481, %v450, 0
      %v543 = vsel %vm481, %v451, 0
      %v546 = vsel %vm481, %v452, 0
      %v549 = vsel %vm481, %v453, 0
      %v552 = vsel %vm481, %v454, 0
      %v555 = vsel %vm481, %v455, 0
      %v558 = vsel %vm481, %v456, 0
      %v561 = vsel %vm481, %v457, 0
      %v564 = vsel %vm481, %v458, 0
      %v567 = vsel %vm481, %v459, 0
      %v570 = vsel %vm481, %v460, 0
      %v573 = vsel %vm481, %v461, 0
      %v576 = vsel %vm481, %v462, 0
      %578 = vmatprep.subr.bf16.mxu0 0
      %579 = vmatpush1.bf16.msra.mxu0 %v475
      %580 = vmatprep.subr.bf16.mxu0 0
      %581 = vmatpush1.bf16.msra.mxu0 %v476
      %582 = vmatprep.subr.bf16.mxu0 0
      %583 = vmatpush1.bf16.msra.mxu0 %v477
      %584 = vmatprep.subr.bf16.mxu0 0
      %585 = vmatpush1.bf16.msra.mxu0 0
      %586 = vmatprep.subr.bf16.mxu0 0
      %587 = vmatpush1.bf16.msra.mxu0 0
      %588 = vmatprep.subr.bf16.mxu0 0
      %589 = vmatpush1.bf16.msra.mxu0 0
      %590 = vmatprep.subr.bf16.mxu0 0
      %591 = vmatpush1.bf16.msra.mxu0 0
      %592 = vmatprep.subr.bf16.mxu0 0
      %593 = vmatpush1.bf16.msra.mxu0 0
      %594 = vmatprep.subr.bf16.mxu0 0
      %595 = vmatpush1.bf16.msra.mxu0 0
      %596 = vmatprep.subr.bf16.mxu0 0
      %597 = vmatpush1.bf16.msra.mxu0 0
      %598 = vmatprep.subr.bf16.mxu0 0
      %599 = vmatpush1.bf16.msra.mxu0 0
      %600 = vmatprep.subr.bf16.mxu0 0
      %601 = vmatpush1.bf16.msra.mxu0 0
      %602 = vmatprep.subr.bf16.mxu0 0
      %603 = vmatpush1.bf16.msra.mxu0 0
      %604 = vmatprep.subr.bf16.mxu0 0
      %605 = vmatpush1.bf16.msra.mxu0 0
      %606 = vmatprep.subr.bf16.mxu0 0
      %607 = vmatpush1.bf16.msra.mxu0 0
      %608 = vmatprep.subr.bf16.mxu0 0
      %609 = vmatpush1.bf16.msra.mxu0 0
      %610 = vmatprep.mubr.bf16.mxu0 0
      %611 = vmatmul.mubr.bf16.gmra.mrb[0].mxu0 %v483
      %v612 = vpop.f32.mrb[0].mxu0
      %v613 = vadd.f32 %v301, %v612
      %v614 = vpop.f32.mrb[0].mxu0
      %v615 = vpop.f32.mrb[0].mxu0
      %v616 = vadd.f32 %v301, %v615
      %v617 = vpop.f32.mrb[0].mxu0
      %618 = vmatprep.mubr.bf16.mxu0 0
      %619 = vmatmul.mubr.bf16.gmra.mrb[0].mxu0 %v486
      %v620 = vpop.f32.mrb[0].mxu0
      %v621 = vadd.f32 %v301, %v620
      %v622 = vpop.f32.mrb[0].mxu0
      %v623 = vpop.f32.mrb[0].mxu0
      %v624 = vadd.f32 %v301, %v623
      %v625 = vpop.f32.mrb[0].mxu0
      %626 = vmatprep.mubr.bf16.mxu0 0
      %627 = vmatmul.mubr.bf16.gmra.mrb[0].mxu0 %v489
      %v628 = vpop.f32.mrb[0].mxu0
      %v629 = vadd.f32 %v301, %v628
      %v630 = vpop.f32.mrb[0].mxu0
      %v631 = vpop.f32.mrb[0].mxu0
      %v632 = vadd.f32 %v301, %v631
      %v633 = vpop.f32.mrb[0].mxu0
      %634 = vmatprep.mubr.bf16.mxu0 0
      %635 = vmatmul.mubr.bf16.gmra.mrb[0].mxu0 %v492
      %v636 = vpop.f32.mrb[0].mxu0
      %v637 = vadd.f32 %v301, %v636
      %v638 = vpop.f32.mrb[0].mxu0
      %v639 = vpop.f32.mrb[0].mxu0
      %v640 = vadd.f32 %v301, %v639
      %v641 = vpop.f32.mrb[0].mxu0
      %642 = vmatprep.mubr.bf16.mxu0 0
      %643 = vmatmul.mubr.bf16.gmra.mrb[0].mxu0 %v495
      %v644 = vpop.f32.mrb[0].mxu0
      %v645 = vadd.f32 %v301, %v644
      %v646 = vpop.f32.mrb[0].mxu0
      %v647 = vpop.f32.mrb[0].mxu0
      %v648 = vadd.f32 %v301, %v647
      %v649 = vpop.f32.mrb[0].mxu0
      %650 = vmatprep.mubr.bf16.mxu0 0
      %651 = vmatmul.mubr.bf16.gmra.mrb[0].mxu0 %v498
      %v652 = vpop.f32.mrb[0].mxu0
      %v653 = vadd.f32 %v301, %v652
      %v654 = vpop.f32.mrb[0].mxu0
      %v655 = vpop.f32.mrb[0].mxu0
      %v656 = vadd.f32 %v301, %v655
      %v657 = vpop.f32.mrb[0].mxu0
      %658 = vmatprep.mubr.bf16.mxu0 0
      %659 = vmatmul.mubr.bf16.gmra.mrb[0].mxu0 %v501
      %v660 = vpop.f32.mrb[0].mxu0
      %v661 = vadd.f32 %v301, %v660
      %v662 = vpop.f32.mrb[0].mxu0
      %v663 = vpop.f32.mrb[0].mxu0
      %v664 = vadd.f32 %v301, %v663
      %v665 = vpop.f32.mrb[0].mxu0
      %666 = vmatprep.mubr.bf16.mxu0 0
      %667 = vmatmul.mubr.bf16.gmra.mrb[0].mxu0 %v504
      %v668 = vpop.f32.mrb[0].mxu0
      %v669 = vadd.f32 %v301, %v668
      %v670 = vpop.f32.mrb[0].mxu0
      %v671 = vpop.f32.mrb[0].mxu0
      %v672 = vadd.f32 %v301, %v671
      %v673 = vpop.f32.mrb[0].mxu0
      %674 = vmatprep.mubr.bf16.mxu0 0
      %675 = vmatmul.mubr.bf16.gmra.mrb[0].mxu0 %v507
      %v676 = vpop.f32.mrb[0].mxu0
      %v677 = vadd.f32 %v301, %v676
      %v678 = vpop.f32.mrb[0].mxu0
      %v679 = vpop.f32.mrb[0].mxu0
      %v680 = vadd.f32 %v301, %v679
      %v681 = vpop.f32.mrb[0].mxu0
      %682 = vmatprep.mubr.bf16.mxu0 0
      %683 = vmatmul.mubr.bf16.gmra.mrb[0].mxu0 %v510
      %v684 = vpop.f32.mrb[0].mxu0
      %v685 = vadd.f32 %v301, %v684
      %v686 = vpop.f32.mrb[0].mxu0
      %v687 = vpop.f32.mrb[0].mxu0
      %v688 = vadd.f32 %v301, %v687
      %v689 = vpop.f32.mrb[0].mxu0
      %690 = vmatprep.mubr.bf16.mxu0 0
      %691 = vmatmul.mubr.bf16.gmra.mrb[0].mxu0 %v513
      %v692 = vpop.f32.mrb[0].mxu0
      %v693 = vadd.f32 %v301, %v692
      %v694 = vpop.f32.mrb[0].mxu0
      %v695 = vpop.f32.mrb[0].mxu0
      %v696 = vadd.f32 %v301, %v695
      %v697 = vpop.f32.mrb[0].mxu0
      %698 = vmatprep.mubr.bf16.mxu0 0
      %699 = vmatmul.mubr.bf16.gmra.mrb[0].mxu0 %v516
      %v700 = vpop.f32.mrb[0].mxu0
      %v701 = vadd.f32 %v301, %v700
      %v702 = vpop.f32.mrb[0].mxu0
      %v703 = vpop.f32.mrb[0].mxu0
      %v704 = vadd.f32 %v301, %v703
      %v705 = vpop.f32.mrb[0].mxu0
      %706 = vmatprep.mubr.bf16.mxu0 0
      %707 = vmatmul.mubr.bf16.gmra.mrb[0].mxu0 %v519
      %v708 = vpop.f32.mrb[0].mxu0
      %v709 = vadd.f32 %v301, %v708
      %v710 = vpop.f32.mrb[0].mxu0
      %v711 = vpop.f32.mrb[0].mxu0
      %v712 = vadd.f32 %v301, %v711
      %v713 = vpop.f32.mrb[0].mxu0
      %714 = vmatprep.mubr.bf16.mxu0 0
      %715 = vmatmul.mubr.bf16.gmra.mrb[0].mxu0 %v522
      %v716 = vpop.f32.mrb[0].mxu0
      %v717 = vadd.f32 %v301, %v716
      %v718 = vpop.f32.mrb[0].mxu0
      %v719 = vpop.f32.mrb[0].mxu0
      %v720 = vadd.f32 %v301, %v719
      %v721 = vpop.f32.mrb[0].mxu0
      %722 = vmatprep.mubr.bf16.mxu0 0
      %723 = vmatmul.mubr.bf16.gmra.mrb[0].mxu0 %v525
      %v724 = vpop.f32.mrb[0].mxu0
      %v725 = vadd.f32 %v301, %v724
      %v726 = vpop.f32.mrb[0].mxu0
      %v727 = vpop.f32.mrb[0].mxu0
      %v728 = vadd.f32 %v301, %v727
      %v729 = vpop.f32.mrb[0].mxu0
      %730 = vmatprep.mubr.bf16.mxu0 0
      %731 = vmatmul.mubr.bf16.gmra.mrb[0].mxu0 %v528
      %v732 = vpop.f32.mrb[0].mxu0
      %v733 = vadd.f32 %v301, %v732
      %v734 = vpop.f32.mrb[0].mxu0
      %v735 = vpop.f32.mrb[0].mxu0
      %v736 = vadd.f32 %v301, %v735
      %v737 = vpop.f32.mrb[0].mxu0
      %738 = vmatprep.mubr.bf16.mxu0 0
      %739 = vmatmul.mubr.bf16.gmra.mrb[0].mxu0 %v531
      %v740 = vpop.f32.mrb[0].mxu0
      %v741 = vadd.f32 %v301, %v740
      %v742 = vpop.f32.mrb[0].mxu0
      %v743 = vpop.f32.mrb[0].mxu0
      %v744 = vadd.f32 %v301, %v743
      %v745 = vpop.f32.mrb[0].mxu0
      %746 = vmatprep.mubr.bf16.mxu0 0
      %747 = vmatmul.mubr.bf16.gmra.mrb[0].mxu0 %v534
      %v748 = vpop.f32.mrb[0].mxu0
      %v749 = vadd.f32 %v301, %v748
      %v750 = vpop.f32.mrb[0].mxu0
      %v751 = vpop.f32.mrb[0].mxu0
      %v752 = vadd.f32 %v301, %v751
      %v753 = vpop.f32.mrb[0].mxu0
      %754 = vmatprep.mubr.bf16.mxu0 0
      %755 = vmatmul.mubr.bf16.gmra.mrb[0].mxu0 %v537
      %v756 = vpop.f32.mrb[0].mxu0
      %v757 = vadd.f32 %v301, %v756
      %v758 = vpop.f32.mrb[0].mxu0
      %v759 = vpop.f32.mrb[0].mxu0
      %v760 = vadd.f32 %v301, %v759
      %v761 = vpop.f32.mrb[0].mxu0
      %762 = vmatprep.mubr.bf16.mxu0 0
      %763 = vmatmul.mubr.bf16.gmra.mrb[0].mxu0 %v540
      %v764 = vpop.f32.mrb[0].mxu0
      %v765 = vadd.f32 %v301, %v764
      %v766 = vpop.f32.mrb[0].mxu0
      %v767 = vpop.f32.mrb[0].mxu0
      %v768 = vadd.f32 %v301, %v767
      %v769 = vpop.f32.mrb[0].mxu0
      %770 = vmatprep.mubr.bf16.mxu0 0
      %771 = vmatmul.mubr.bf16.gmra.mrb[0].mxu0 %v543
      %v772 = vpop.f32.mrb[0].mxu0
      %v773 = vadd.f32 %v301, %v772
      %v774 = vpop.f32.mrb[0].mxu0
      %v775 = vpop.f32.mrb[0].mxu0
      %v776 = vadd.f32 %v301, %v775
      %v777 = vpop.f32.mrb[0].mxu0
      %778 = vmatprep.mubr.bf16.mxu0 0
      %779 = vmatmul.mubr.bf16.gmra.mrb[0].mxu0 %v546
      %v780 = vpop.f32.mrb[0].mxu0
      %v781 = vadd.f32 %v301, %v780
      %v782 = vpop.f32.mrb[0].mxu0
      %v783 = vpop.f32.mrb[0].mxu0
      %v784 = vadd.f32 %v301, %v783
      %v785 = vpop.f32.mrb[0].mxu0
      %786 = vmatprep.mubr.bf16.mxu0 0
      %787 = vmatmul.mubr.bf16.gmra.mrb[0].mxu0 %v549
      %v788 = vpop.f32.mrb[0].mxu0
      %v789 = vadd.f32 %v301, %v788
      %v790 = vpop.f32.mrb[0].mxu0
      %v791 = vpop.f32.mrb[0].mxu0
      %v792 = vadd.f32 %v301, %v791
      %v793 = vpop.f32.mrb[0].mxu0
      %794 = vmatprep.mubr.bf16.mxu0 0
      %795 = vmatmul.mubr.bf16.gmra.mrb[0].mxu0 %v552
      %v796 = vpop.f32.mrb[0].mxu0
      %v797 = vadd.f32 %v301, %v796
      %v798 = vpop.f32.mrb[0].mxu0
      %v799 = vpop.f32.mrb[0].mxu0
      %v800 = vadd.f32 %v301, %v799
      %v801 = vpop.f32.mrb[0].mxu0
      %802 = vmatprep.mubr.bf16.mxu0 0
      %803 = vmatmul.mubr.bf16.gmra.mrb[0].mxu0 %v555
      %v804 = vpop.f32.mrb[0].mxu0
      %v805 = vadd.f32 %v301, %v804
      %v806 = vpop.f32.mrb[0].mxu0
      %v807 = vpop.f32.mrb[0].mxu0
      %v808 = vadd.f32 %v301, %v807
      %v809 = vpop.f32.mrb[0].mxu0
      %810 = vmatprep.mubr.bf16.mxu0 0
      %811 = vmatmul.mubr.bf16.gmra.mrb[0].mxu0 %v558
      %v812 = vpop.f32.mrb[0].mxu0
      %v813 = vadd.f32 %v301, %v812
      %v814 = vpop.f32.mrb[0].mxu0
      %v815 = vpop.f32.mrb[0].mxu0
      %v816 = vadd.f32 %v301, %v815
      %v817 = vpop.f32.mrb[0].mxu0
      %818 = vmatprep.mubr.bf16.mxu0 0
      %819 = vmatmul.mubr.bf16.gmra.mrb[0].mxu0 %v561
      %v820 = vpop.f32.mrb[0].mxu0
      %v821 = vadd.f32 %v301, %v820
      %v822 = vpop.f32.mrb[0].mxu0
      %v823 = vpop.f32.mrb[0].mxu0
      %v824 = vadd.f32 %v301, %v823
      %v825 = vpop.f32.mrb[0].mxu0
      %826 = vmatprep.mubr.bf16.mxu0 0
      %827 = vmatmul.mubr.bf16.gmra.mrb[0].mxu0 %v564
      %v828 = vpop.f32.mrb[0].mxu0
      %v829 = vadd.f32 %v301, %v828
      %v830 = vpop.f32.mrb[0].mxu0
      %v831 = vpop.f32.mrb[0].mxu0
      %v832 = vadd.f32 %v301, %v831
      %v833 = vpop.f32.mrb[0].mxu0
      %834 = vmatprep.mubr.bf16.mxu0 0
      %835 = vmatmul.mubr.bf16.gmra.mrb[0].mxu0 %v567
      %v836 = vpop.f32.mrb[0].mxu0
      %v837 = vadd.f32 %v301, %v836
      %v838 = vpop.f32.mrb[0].mxu0
      %v839 = vpop.f32.mrb[0].mxu0
      %v840 = vadd.f32 %v301, %v839
      %v841 = vpop.f32.mrb[0].mxu0
      %842 = vmatprep.mubr.bf16.mxu0 0
      %843 = vmatmul.mubr.bf16.gmra.mrb[0].mxu0 %v570
      %v844 = vpop.f32.mrb[0].mxu0
      %v845 = vadd.f32 %v301, %v844
      %v846 = vpop.f32.mrb[0].mxu0
      %v847 = vpop.f32.mrb[0].mxu0
      %v848 = vadd.f32 %v301, %v847
      %v849 = vpop.f32.mrb[0].mxu0
      %850 = vmatprep.mubr.bf16.mxu0 0
      %851 = vmatmul.mubr.bf16.gmra.mrb[0].mxu0 %v573
      %v852 = vpop.f32.mrb[0].mxu0
      %v853 = vadd.f32 %v301, %v852
      %v854 = vpop.f32.mrb[0].mxu0
      %v855 = vpop.f32.mrb[0].mxu0
      %v856 = vadd.f32 %v301, %v855
      %v857 = vpop.f32.mrb[0].mxu0
      %858 = vmatprep.mubr.bf16.mxu0 0
      %859 = vmatmul.mubr.bf16.gmra.mrb[0].mxu0 %v576
      %v860 = vpop.f32.mrb[0].mxu0
      %v861 = vadd.f32 %v301, %v860
      %v862 = vpop.f32.mrb[0].mxu0
      %v863 = vpop.f32.mrb[0].mxu0
      %v864 = vadd.f32 %v301, %v863
      %v865 = vpop.f32.mrb[0].mxu0
      %866 = vdwg.mxu0
      %vm867 = vcmp.ge.f32.partialorder %v613, 0.0
      %vm868 = vcmp.ge.f32.partialorder %v616, 0.0
      %vm869 = vcmp.ge.f32.partialorder %v621, 0.0
      %vm870 = vcmp.ge.f32.partialorder %v624, 0.0
      %vm871 = vcmp.ge.f32.partialorder %v629, 0.0
      %vm872 = vcmp.ge.f32.partialorder %v632, 0.0
      %vm873 = vcmp.ge.f32.partialorder %v637, 0.0
      %vm874 = vcmp.ge.f32.partialorder %v640, 0.0
      %vm875 = vcmp.ge.f32.partialorder %v645, 0.0
      %vm876 = vcmp.ge.f32.partialorder %v648, 0.0
      %vm877 = vcmp.ge.f32.partialorder %v653, 0.0
      %vm878 = vcmp.ge.f32.partialorder %v656, 0.0
      %vm879 = vcmp.ge.f32.partialorder %v661, 0.0
      %vm880 = vcmp.ge.f32.partialorder %v664, 0.0
      %vm881 = vcmp.ge.f32.partialorder %v669, 0.0
      %vm882 = vcmp.ge.f32.partialorder %v672, 0.0
      %vm883 = vcmp.ge.f32.partialorder %v677, 0.0
      %vm884 = vcmp.ge.f32.partialorder %v680, 0.0
      %vm885 = vcmp.ge.f32.partialorder %v685, 0.0
      %vm886 = vcmp.ge.f32.partialorder %v688, 0.0
      %vm887 = vcmp.ge.f32.partialorder %v693, 0.0
      %vm888 = vcmp.ge.f32.partialorder %v696, 0.0
      %vm889 = vcmp.ge.f32.partialorder %v701, 0.0
      %vm890 = vcmp.ge.f32.partialorder %v704, 0.0
      %vm891 = vcmp.ge.f32.partialorder %v709, 0.0
      %vm892 = vcmp.ge.f32.partialorder %v712, 0.0
      %vm893 = vcmp.ge.f32.partialorder %v717, 0.0
      %vm894 = vcmp.ge.f32.partialorder %v720, 0.0
      %vm895 = vcmp.ge.f32.partialorder %v725, 0.0
      %vm896 = vcmp.ge.f32.partialorder %v728, 0.0
      %vm897 = vcmp.ge.f32.partialorder %v733, 0.0
      %vm898 = vcmp.ge.f32.partialorder %v736, 0.0
      %vm899 = vcmp.ge.f32.partialorder %v741, 0.0
      %vm900 = vcmp.ge.f32.partialorder %v744, 0.0
      %vm901 = vcmp.ge.f32.partialorder %v749, 0.0
      %vm902 = vcmp.ge.f32.partialorder %v752, 0.0
      %vm903 = vcmp.ge.f32.partialorder %v757, 0.0
      %vm904 = vcmp.ge.f32.partialorder %v760, 0.0
      %vm905 = vcmp.ge.f32.partialorder %v765, 0.0
      %vm906 = vcmp.ge.f32.partialorder %v768, 0.0
      %vm907 = vcmp.ge.f32.partialorder %v773, 0.0
      %vm908 = vcmp.ge.f32.partialorder %v776, 0.0
      %vm909 = vcmp.ge.f32.partialorder %v781, 0.0
      %vm910 = vcmp.ge.f32.partialorder %v784, 0.0
      %vm911 = vcmp.ge.f32.partialorder %v789, 0.0
      %vm912 = vcmp.ge.f32.partialorder %v792, 0.0
      %vm913 = vcmp.ge.f32.partialorder %v797, 0.0
      %vm914 = vcmp.ge.f32.partialorder %v800, 0.0
      %vm915 = vcmp.ge.f32.partialorder %v805, 0.0
      %vm916 = vcmp.ge.f32.partialorder %v808, 0.0
      %vm917 = vcmp.ge.f32.partialorder %v813, 0.0
      %vm918 = vcmp.ge.f32.partialorder %v816, 0.0
      %vm919 = vcmp.ge.f32.partialorder %v821, 0.0
      %vm920 = vcmp.ge.f32.partialorder %v824, 0.0
      %vm921 = vcmp.ge.f32.partialorder %v829, 0.0
      %vm922 = vcmp.ge.f32.partialorder %v832, 0.0
      %vm923 = vcmp.ge.f32.partialorder %v837, 0.0
      %vm924 = vcmp.ge.f32.partialorder %v840, 0.0
      %vm925 = vcmp.ge.f32.partialorder %v845, 0.0
      %vm926 = vcmp.ge.f32.partialorder %v848, 0.0
      %vm927 = vcmp.ge.f32.partialorder %v853, 0.0
      %vm928 = vcmp.ge.f32.partialorder %v856, 0.0
      %vm929 = vcmp.ge.f32.partialorder %v861, 0.0
      %vm930 = vcmp.ge.f32.partialorder %v864, 0.0
      %v931 = vmul.f32 %v613, 0.2
      %v932 = vmul.f32 %v616, 0.2
      %v933 = vmul.f32 %v621, 0.2
      %v934 = vmul.f32 %v624, 0.2
      %v935 = vmul.f32 %v629, 0.2
      %v936 = vmul.f32 %v632, 0.2
      %v937 = vmul.f32 %v637, 0.2
      %v938 = vmul.f32 %v640, 0.2
      %v939 = vmul.f32 %v645, 0.2
      %v940 = vmul.f32 %v648, 0.2
      %v941 = vmul.f32 %v653, 0.2
      %v942 = vmul.f32 %v656, 0.2
      %v943 = vmul.f32 %v661, 0.2
      %v944 = vmul.f32 %v664, 0.2
      %v945 = vmul.f32 %v669, 0.2
      %v946 = vmul.f32 %v672, 0.2
      %v947 = vmul.f32 %v677, 0.2
      %v948 = vmul.f32 %v680, 0.2
      %v949 = vmul.f32 %v685, 0.2
      %v950 = vmul.f32 %v688, 0.2
      %v951 = vmul.f32 %v693, 0.2
      %v952 = vmul.f32 %v696, 0.2
      %v953 = vmul.f32 %v701, 0.2
      %v954 = vmul.f32 %v704, 0.2
      %v955 = vmul.f32 %v709, 0.2
      %v956 = vmul.f32 %v712, 0.2
      %v957 = vmul.f32 %v717, 0.2
      %v958 = vmul.f32 %v720, 0.2
      %v959 = vmul.f32 %v725, 0.2
      %v960 = vmul.f32 %v728, 0.2
      %v961 = vmul.f32 %v733, 0.2
      %v962 = vmul.f32 %v736, 0.2
      %v963 = vmul.f32 %v741, 0.2
      %v964 = vmul.f32 %v744, 0.2
      %v965 = vmul.f32 %v749, 0.2
      %v966 = vmul.f32 %v752, 0.2
      %v967 = vmul.f32 %v757, 0.2
      %v968 = vmul.f32 %v760, 0.2
      %v969 = vmul.f32 %v765, 0.2
      %v970 = vmul.f32 %v768, 0.2
      %v971 = vmul.f32 %v773, 0.2
      %v972 = vmul.f32 %v776, 0.2
      %v973 = vmul.f32 %v781, 0.2
      %v974 = vmul.f32 %v784, 0.2
      %v975 = vmul.f32 %v789, 0.2
      %v976 = vmul.f32 %v792, 0.2
      %v977 = vmul.f32 %v797, 0.2
      %v978 = vmul.f32 %v800, 0.2
      %v979 = vmul.f32 %v805, 0.2
      %v980 = vmul.f32 %v808, 0.2
      %v981 = vmul.f32 %v813, 0.2
      %v982 = vmul.f32 %v816, 0.2
      %v983 = vmul.f32 %v821, 0.2
      %v984 = vmul.f32 %v824, 0.2
      %v985 = vmul.f32 %v829, 0.2
      %v986 = vmul.f32 %v832, 0.2
      %v987 = vmul.f32 %v837, 0.2
      %v988 = vmul.f32 %v840, 0.2
      %v989 = vmul.f32 %v845, 0.2
      %v990 = vmul.f32 %v848, 0.2
      %v991 = vmul.f32 %v853, 0.2
      %v992 = vmul.f32 %v856, 0.2
      %v993 = vmul.f32 %v861, 0.2
      %v994 = vmul.f32 %v864, 0.2
      %v995 = vsel %vm867, %v613, %v931
      %v996 = vsel %vm868, %v616, %v932
      %v997 = vsel %vm869, %v621, %v933
      %v998 = vsel %vm870, %v624, %v934
      %v999 = vsel %vm871, %v629, %v935
      %v1000 = vsel %vm872, %v632, %v936
      %v1001 = vsel %vm873, %v637, %v937
      %v1002 = vsel %vm874, %v640, %v938
      %v1003 = vsel %vm875, %v645, %v939
      %v1004 = vsel %vm876, %v648, %v940
      %v1005 = vsel %vm877, %v653, %v941
      %v1006 = vsel %vm878, %v656, %v942
      %v1007 = vsel %vm879, %v661, %v943
      %v1008 = vsel %vm880, %v664, %v944
      %v1009 = vsel %vm881, %v669, %v945
      %v1010 = vsel %vm882, %v672, %v946
      %v1011 = vsel %vm883, %v677, %v947
      %v1012 = vsel %vm884, %v680, %v948
      %v1013 = vsel %vm885, %v685, %v949
      %v1014 = vsel %vm886, %v688, %v950
      %v1015 = vsel %vm887, %v693, %v951
      %v1016 = vsel %vm888, %v696, %v952
      %v1017 = vsel %vm889, %v701, %v953
      %v1018 = vsel %vm890, %v704, %v954
      %v1019 = vsel %vm891, %v709, %v955
      %v1020 = vsel %vm892, %v712, %v956
      %v1021 = vsel %vm893, %v717, %v957
      %v1022 = vsel %vm894, %v720, %v958
      %v1023 = vsel %vm895, %v725, %v959
      %v1024 = vsel %vm896, %v728, %v960
      %v1025 = vsel %vm897, %v733, %v961
      %v1026 = vsel %vm898, %v736, %v962
      %v1027 = vsel %vm899, %v741, %v963
      %v1028 = vsel %vm900, %v744, %v964
      %v1029 = vsel %vm901, %v749, %v965
      %v1030 = vsel %vm902, %v752, %v966
      %v1031 = vsel %vm903, %v757, %v967
      %v1032 = vsel %vm904, %v760, %v968
      %v1033 = vsel %vm905, %v765, %v969
      %v1034 = vsel %vm906, %v768, %v970
      %v1035 = vsel %vm907, %v773, %v971
      %v1036 = vsel %vm908, %v776, %v972
      %v1037 = vsel %vm909, %v781, %v973
      %v1038 = vsel %vm910, %v784, %v974
      %v1039 = vsel %vm911, %v789, %v975
      %v1040 = vsel %vm912, %v792, %v976
      %v1041 = vsel %vm913, %v797, %v977
      %v1042 = vsel %vm914, %v800, %v978
      %v1043 = vsel %vm915, %v805, %v979
      %v1044 = vsel %vm916, %v808, %v980
      %v1045 = vsel %vm917, %v813, %v981
      %v1046 = vsel %vm918, %v816, %v982
      %v1047 = vsel %vm919, %v821, %v983
      %v1048 = vsel %vm920, %v824, %v984
      %v1049 = vsel %vm921, %v829, %v985
      %v1050 = vsel %vm922, %v832, %v986
      %v1051 = vsel %vm923, %v837, %v987
      %v1052 = vsel %vm924, %v840, %v988
      %v1053 = vsel %vm925, %v845, %v989
      %v1054 = vsel %vm926, %v848, %v990
      %v1055 = vsel %vm927, %v853, %v991
      %v1056 = vsel %vm928, %v856, %v992
      %v1057 = vsel %vm929, %v861, %v993
      %v1058 = vsel %vm930, %v864, %v994
      %v1059 = vpack.c.bf16 %v996, %v995
      %v1060 = vpack.c.bf16 %v998, %v997
      %v1061 = vpack.c.bf16 %v1000, %v999
      %v1062 = vpack.c.bf16 %v1002, %v1001
      %v1063 = vpack.c.bf16 %v1004, %v1003
      %v1064 = vpack.c.bf16 %v1006, %v1005
      %v1065 = vpack.c.bf16 %v1008, %v1007
      %v1066 = vpack.c.bf16 %v1010, %v1009
      %v1067 = vpack.c.bf16 %v1012, %v1011
      %v1068 = vpack.c.bf16 %v1014, %v1013
      %v1069 = vpack.c.bf16 %v1016, %v1015
      %v1070 = vpack.c.bf16 %v1018, %v1017
      %v1071 = vpack.c.bf16 %v1020, %v1019
      %v1072 = vpack.c.bf16 %v1022, %v1021
      %v1073 = vpack.c.bf16 %v1024, %v1023
      %v1074 = vpack.c.bf16 %v1026, %v1025
      %v1075 = vpack.c.bf16 %v1028, %v1027
      %v1076 = vpack.c.bf16 %v1030, %v1029
      %v1077 = vpack.c.bf16 %v1032, %v1031
      %v1078 = vpack.c.bf16 %v1034, %v1033
      %v1079 = vpack.c.bf16 %v1036, %v1035
      %v1080 = vpack.c.bf16 %v1038, %v1037
      %v1081 = vpack.c.bf16 %v1040, %v1039
      %v1082 = vpack.c.bf16 %v1042, %v1041
      %v1083 = vpack.c.bf16 %v1044, %v1043
      %v1084 = vpack.c.bf16 %v1046, %v1045
      %v1085 = vpack.c.bf16 %v1048, %v1047
      %v1086 = vpack.c.bf16 %v1050, %v1049
      %v1087 = vpack.c.bf16 %v1052, %v1051
      %v1088 = vpack.c.bf16 %v1054, %v1053
      %v1089 = vpack.c.bf16 %v1056, %v1055
      %v1090 = vpack.c.bf16 %v1058, %v1057
      %v1123 = vunpack.c.l.b16 %v1059
      %v1124 = vunpack.c.h.b16 %v1059
      %v1125 = vunpack.c.l.b16 %v1060
      %v1126 = vunpack.c.h.b16 %v1060
      %v1127 = vunpack.c.l.b16 %v1061
      %v1128 = vunpack.c.h.b16 %v1061
      %v1129 = vunpack.c.l.b16 %v1062
      %v1130 = vunpack.c.h.b16 %v1062
      %v1131 = vunpack.c.l.b16 %v1063
      %v1132 = vunpack.c.h.b16 %v1063
      %v1133 = vunpack.c.l.b16 %v1064
      %v1134 = vunpack.c.h.b16 %v1064
      %v1135 = vunpack.c.l.b16 %v1065
      %v1136 = vunpack.c.h.b16 %v1065
      %v1137 = vunpack.c.l.b16 %v1066
      %v1138 = vunpack.c.h.b16 %v1066
      %v1139 = vunpack.c.l.b16 %v1067
      %v1140 = vunpack.c.h.b16 %v1067
      %v1141 = vunpack.c.l.b16 %v1068
      %v1142 = vunpack.c.h.b16 %v1068
      %v1143 = vunpack.c.l.b16 %v1069
      %v1144 = vunpack.c.h.b16 %v1069
      %v1145 = vunpack.c.l.b16 %v1070
      %v1146 = vunpack.c.h.b16 %v1070
      %v1147 = vunpack.c.l.b16 %v1071
      %v1148 = vunpack.c.h.b16 %v1071
      %v1149 = vunpack.c.l.b16 %v1072
      %v1150 = vunpack.c.h.b16 %v1072
      %v1151 = vunpack.c.l.b16 %v1073
      %v1152 = vunpack.c.h.b16 %v1073
      %v1153 = vunpack.c.l.b16 %v1074
      %v1154 = vunpack.c.h.b16 %v1074
      %v1155 = vunpack.c.l.b16 %v1075
      %v1156 = vunpack.c.h.b16 %v1075
      %v1157 = vunpack.c.l.b16 %v1076
      %v1158 = vunpack.c.h.b16 %v1076
      %v1159 = vunpack.c.l.b16 %v1077
      %v1160 = vunpack.c.h.b16 %v1077
      %v1161 = vunpack.c.l.b16 %v1078
      %v1162 = vunpack.c.h.b16 %v1078
      %v1163 = vunpack.c.l.b16 %v1079
      %v1164 = vunpack.c.h.b16 %v1079
      %v1165 = vunpack.c.l.b16 %v1080
      %v1166 = vunpack.c.h.b16 %v1080
      %v1167 = vunpack.c.l.b16 %v1081
      %v1168 = vunpack.c.h.b16 %v1081
      %v1169 = vunpack.c.l.b16 %v1082
      %v1170 = vunpack.c.h.b16 %v1082
      %v1171 = vunpack.c.l.b16 %v1083
      %v1172 = vunpack.c.h.b16 %v1083
      %v1173 = vunpack.c.l.b16 %v1084
      %v1174 = vunpack.c.h.b16 %v1084
      %v1175 = vunpack.c.l.b16 %v1085
      %v1176 = vunpack.c.h.b16 %v1085
      %v1177 = vunpack.c.l.b16 %v1086
      %v1178 = vunpack.c.h.b16 %v1086
      %v1179 = vunpack.c.l.b16 %v1087
      %v1180 = vunpack.c.h.b16 %v1087
      %v1181 = vunpack.c.l.b16 %v1088
      %v1182 = vunpack.c.h.b16 %v1088
      %v1183 = vunpack.c.l.b16 %v1089
      %v1184 = vunpack.c.h.b16 %v1089
      %v1185 = vunpack.c.l.b16 %v1090
      %v1186 = vunpack.c.h.b16 %v1090
      %v1187 = vpack.c.b16 %v1123, %v1123
      %v1188 = vpack.c.b16 %v1124, %v1124
      %v1189 = vpack.c.b16 %v1125, %v1125
      %v1190 = vpack.c.b16 %v1126, %v1126
      %v1191 = vpack.c.b16 %v1127, %v1127
      %v1192 = vpack.c.b16 %v1128, %v1128
      %v1193 = vpack.c.b16 %v1129, %v1129
      %v1194 = vpack.c.b16 %v1130, %v1130
      %v1195 = vpack.c.b16 %v1131, %v1131
      %v1196 = vpack.c.b16 %v1132, %v1132
      %v1197 = vpack.c.b16 %v1133, %v1133
      %v1198 = vpack.c.b16 %v1134, %v1134
      %v1199 = vpack.c.b16 %v1135, %v1135
      %v1200 = vpack.c.b16 %v1136, %v1136
      %v1201 = vpack.c.b16 %v1137, %v1137
      %v1202 = vpack.c.b16 %v1138, %v1138
      %v1203 = vpack.c.b16 %v1139, %v1139
      %v1204 = vpack.c.b16 %v1140, %v1140
      %v1205 = vpack.c.b16 %v1141, %v1141
      %v1206 = vpack.c.b16 %v1142, %v1142
      %v1207 = vpack.c.b16 %v1143, %v1143
      %v1208 = vpack.c.b16 %v1144, %v1144
      %v1209 = vpack.c.b16 %v1145, %v1145
      %v1210 = vpack.c.b16 %v1146, %v1146
      %v1211 = vpack.c.b16 %v1147, %v1147
      %v1212 = vpack.c.b16 %v1148, %v1148
      %v1213 = vpack.c.b16 %v1149, %v1149
      %v1214 = vpack.c.b16 %v1150, %v1150
      %v1215 = vpack.c.b16 %v1151, %v1151
      %v1216 = vpack.c.b16 %v1152, %v1152
      %v1217 = vpack.c.b16 %v1153, %v1153
      %v1218 = vpack.c.b16 %v1154, %v1154
      %v1219 = vpack.c.b16 %v1155, %v1155
      %v1220 = vpack.c.b16 %v1156, %v1156
      %v1221 = vpack.c.b16 %v1157, %v1157
      %v1222 = vpack.c.b16 %v1158, %v1158
      %v1223 = vpack.c.b16 %v1159, %v1159
      %v1224 = vpack.c.b16 %v1160, %v1160
      %v1225 = vpack.c.b16 %v1161, %v1161
      %v1226 = vpack.c.b16 %v1162, %v1162
      %v1227 = vpack.c.b16 %v1163, %v1163
      %v1228 = vpack.c.b16 %v1164, %v1164
      %v1229 = vpack.c.b16 %v1165, %v1165
      %v1230 = vpack.c.b16 %v1166, %v1166
      %v1231 = vpack.c.b16 %v1167, %v1167
      %v1232 = vpack.c.b16 %v1168, %v1168
      %v1233 = vpack.c.b16 %v1169, %v1169
      %v1234 = vpack.c.b16 %v1170, %v1170
      %v1235 = vpack.c.b16 %v1171, %v1171
      %v1236 = vpack.c.b16 %v1172, %v1172
      %v1237 = vpack.c.b16 %v1173, %v1173
      %v1238 = vpack.c.b16 %v1174, %v1174
      %v1239 = vpack.c.b16 %v1175, %v1175
      %v1240 = vpack.c.b16 %v1176, %v1176
      %v1241 = vpack.c.b16 %v1177, %v1177
      %v1242 = vpack.c.b16 %v1178, %v1178
      %v1243 = vpack.c.b16 %v1179, %v1179
      %v1244 = vpack.c.b16 %v1180, %v1180
      %v1245 = vpack.c.b16 %v1181, %v1181
      %v1246 = vpack.c.b16 %v1182, %v1182
      %v1247 = vpack.c.b16 %v1183, %v1183
      %v1248 = vpack.c.b16 %v1184, %v1184
      %v1249 = vpack.c.b16 %v1185, %v1185
      %v1250 = vpack.c.b16 %v1186, %v1186
      %1315 = vst [vmem:[%s223] sm:$0xf] %v1187
      %1316 = vst [vmem:[%s223 + $0x4] sm:$0xf] %v1188
      %1317 = vst [vmem:[%s223 + $0x8] sm:$0xf] %v1189
      %1318 = vst [vmem:[%s223 + $0xc] sm:$0xf] %v1190
      %1319 = vst [vmem:[%s223 + $0x10] sm:$0xf] %v1191
      %1320 = vst [vmem:[%s223 + $0x14] sm:$0xf] %v1192
      %1321 = vst [vmem:[%s223 + $0x18] sm:$0xf] %v1193
      %1322 = vst [vmem:[%s223 + $0x1c] sm:$0xf] %v1194
      %1323 = vst [vmem:[%s223 + $0x20] sm:$0xf] %v1195
      %1324 = vst [vmem:[%s223 + $0x24] sm:$0xf] %v1196
      %1325 = vst [vmem:[%s223 + $0x28] sm:$0xf] %v1197
      %1326 = vst [vmem:[%s223 + $0x2c] sm:$0xf] %v1198
      %1327 = vst [vmem:[%s223 + $0x30] sm:$0xf] %v1199
      %1328 = vst [vmem:[%s223 + $0x34] sm:$0xf] %v1200
      %1329 = vst [vmem:[%s223 + $0x38] sm:$0xf] %v1201
      %1330 = vst [vmem:[%s223 + $0x3c] sm:$0xf] %v1202
      %1331 = vst [vmem:[%s223 + $0x40] sm:$0xf] %v1203
      %1332 = vst [vmem:[%s223 + $0x44] sm:$0xf] %v1204
      %1333 = vst [vmem:[%s223 + $0x48] sm:$0xf] %v1205
      %1334 = vst [vmem:[%s223 + $0x4c] sm:$0xf] %v1206
      %1335 = vst [vmem:[%s223 + $0x50] sm:$0xf] %v1207
      %1336 = vst [vmem:[%s223 + $0x54] sm:$0xf] %v1208
      %1337 = vst [vmem:[%s223 + $0x58] sm:$0xf] %v1209
      %1338 = vst [vmem:[%s223 + $0x5c] sm:$0xf] %v1210
      %1339 = vst [vmem:[%s223 + $0x60] sm:$0xf] %v1211
      %1340 = vst [vmem:[%s223 + $0x64] sm:$0xf] %v1212
      %1341 = vst [vmem:[%s223 + $0x68] sm:$0xf] %v1213
      %1342 = vst [vmem:[%s223 + $0x6c] sm:$0xf] %v1214
      %1343 = vst [vmem:[%s223 + $0x70] sm:$0xf] %v1215
      %1344 = vst [vmem:[%s223 + $0x74] sm:$0xf] %v1216
      %1345 = vst [vmem:[%s223 + $0x78] sm:$0xf] %v1217
      %1346 = vst [vmem:[%s223 + $0x7c] sm:$0xf] %v1218
      %1347 = vst [vmem:[%s223 + $0x80] sm:$0xf] %v1219
      %1348 = vst [vmem:[%s223 + $0x84] sm:$0xf] %v1220
      %1349 = vst [vmem:[%s223 + $0x88] sm:$0xf] %v1221
      %1350 = vst [vmem:[%s223 + $0x8c] sm:$0xf] %v1222
      %1351 = vst [vmem:[%s223 + $0x90] sm:$0xf] %v1223
      %1352 = vst [vmem:[%s223 + $0x94] sm:$0xf] %v1224
      %1353 = vst [vmem:[%s223 + $0x98] sm:$0xf] %v1225
      %1354 = vst [vmem:[%s223 + $0x9c] sm:$0xf] %v1226
      %1355 = vst [vmem:[%s223 + $0xa0] sm:$0xf] %v1227
      %1356 = vst [vmem:[%s223 + $0xa4] sm:$0xf] %v1228
      %1357 = vst [vmem:[%s223 + $0xa8] sm:$0xf] %v1229
      %1358 = vst [vmem:[%s223 + $0xac] sm:$0xf] %v1230
      %1359 = vst [vmem:[%s223 + $0xb0] sm:$0xf] %v1231
      %1360 = vst [vmem:[%s223 + $0xb4] sm:$0xf] %v1232
      %1361 = vst [vmem:[%s223 + $0xb8] sm:$0xf] %v1233
      %1362 = vst [vmem:[%s223 + $0xbc] sm:$0xf] %v1234
      %1363 = vst [vmem:[%s223 + $0xc0] sm:$0xf] %v1235
      %1364 = vst [vmem:[%s223 + $0xc4] sm:$0xf] %v1236
      %1365 = vst [vmem:[%s223 + $0xc8] sm:$0xf] %v1237
      %1366 = vst [vmem:[%s223 + $0xcc] sm:$0xf] %v1238
      %1367 = vst [vmem:[%s223 + $0xd0] sm:$0xf] %v1239
      %1368 = vst [vmem:[%s223 + $0xd4] sm:$0xf] %v1240
      %1369 = vst [vmem:[%s223 + $0xd8] sm:$0xf] %v1241
      %1370 = vst [vmem:[%s223 + $0xdc] sm:$0xf] %v1242
      %1371 = vst [vmem:[%s223 + $0xe0] sm:$0xf] %v1243
      %1372 = vst [vmem:[%s223 + $0xe4] sm:$0xf] %v1244
      %1373 = vst [vmem:[%s223 + $0xe8] sm:$0xf] %v1245
      %1374 = vst [vmem:[%s223 + $0xec] sm:$0xf] %v1246
      %1375 = vst [vmem:[%s223 + $0xf0] sm:$0xf] %v1247
      %1376 = vst [vmem:[%s223 + $0xf4] sm:$0xf] %v1248
      %1377 = vst [vmem:[%s223 + $0xf8] sm:$0xf] %v1249
      %1378 = vst [vmem:[%s223 + $0xfc] sm:$0xf] %v1250
      %s1379 = smul.u32 64, %s18
      %p1380 = scmp.lt.s32.totalorder %s1379, 255
      %s1381 = scalar_select %p1380, %s1379, 255
      %p1382 = scmp.lt.s32.totalorder %s19, 0
      %s1383 = scalar_select %p1382, %s19, 0
      %s1384 = sadd.s32 %s1383, %s1381
      %s1385 = smul.addr %s1384, 4
      %s1386 = scalar_lea.vmem %s3, %s1385
      // Predicated region
      $region33: #{discriminator_forward.5} parent=31 // pred_check
        %p1387 = pneg %p124
      $region34: #{discriminator_forward.5} parent=31 // pred_check_branch
        %1389 = sbr.rel (%p1387) target = $region36
      $region35: #{discriminator_forward.5} parent=31 // pred_region
        %s1390 = smul.u32 64, %s18
      $region36: #{discriminator_forward.5} parent=31 // pred_fallthru
        _
    $region32: #{discriminator_forward.5} parent=5 // pred_fallthru
      _
    %p1391 = scmp.le.s32.totalorder 2, %s9
    // Predicated region
    $region37: #{discriminator_forward.5} parent=5 // pred_check
      %p1392 = pneg %p1391
    $region38: #{discriminator_forward.5} parent=5 // pred_check_branch
      %1394 = sbr.rel (%p1392) target = $region40
    $region39: #{discriminator_forward.5} parent=5 // pred_region
      %s1395 = ssub.s32 %s9, 2
      // Predicated region
      $region41: #{discriminator_forward.5} parent=39 // pred_check
        %p1396 = pneg %p130
      $region42: #{discriminator_forward.5} parent=39 // pred_check_branch
        %1398 = sbr.rel (%p1396) target = $region44
      $region43: #{discriminator_forward.5} parent=39 // pred_region
        %s1399 = smul.u32 64, %s20
        %p1400 = scmp.lt.s32.totalorder %s1399, 255
        %s1401 = scalar_select %p1400, %s1399, 255
        %p1402 = scmp.lt.s32.totalorder %s21, 0
        %s1403 = scalar_select %p1402, %s21, 0
        %s1404 = sadd.s32 %s1403, %s1401
        %s1405 = smul.addr %s1404, 4
        %s1406 = scalar_lea.vmem %s3, %s1405
      $region44: #{discriminator_forward.5} parent=39 // pred_fallthru
        _
    $region40: #{discriminator_forward.5} parent=5 // pred_fallthru
      _
  $region6: #{discriminator_forward.5} parent=0 // loop_footer
    %s13 = sadd.s32 1, %s9
  $region7: #{discriminator_forward.5} parent=0 // loop_footer_branch
    %8 = sbr.rel target = $region3
  $region8: #{discriminator_forward.5} parent=0 // loop_exit
    _

// kernel: discriminator_forward.6
$region0: #{discriminator_forward.6}
  #allocation0 [shape = 'u32[]', space=smem, size = 0x4, offset = 0x4, fixed_abs, tag = 'smem constant byte address 0x4 - core index']
  #allocation1 [shape = 'u32[144,128]{1,0:T(1,128)}', space=vmem, size = 0x12000, scoped, tag = 'internal scratch']
  %s0 = inlined_call_operand.vmem [shape: bf16[512,128], index: 0, kind: input, shape index: {}]
  %s1 = inlined_call_operand.vmem [shape: bf16[128,128], index: 1, kind: input, shape index: {}]
  %s2 = inlined_call_operand.vmem [shape: f32[1,128], index: 2, kind: input, shape index: {}]
  %s3 = inlined_call_operand.vmem [shape: bf16[512,128], index: 3, kind: output, shape index: {}]
  %s4 = sld [smem:[#allocation0]]
  $region22: #{discriminator_forward.6} parent=0
    _
  %s6 = ssub.s32 1, %s4
  %s7 = scalar_select 0, %s6, %s4
  // Predicated region
  $region2: #{discriminator_forward.6} parent=0 // pred_check
    _
  $region3: #{discriminator_forward.6} parent=0 // pred_check_branch
    %9 = sbr.rel (0) target = $region5
  $region4: #{discriminator_forward.6} parent=0 // pred_region
    _
  $region5: #{discriminator_forward.6} parent=0 // pred_fallthru
    _
  // Predicated region
  $region6: #{discriminator_forward.6} parent=0 // pred_check
    _
  $region7: #{discriminator_forward.6} parent=0 // pred_check_branch
    %11 = sbr.rel (0) target = $region9
  $region8: #{discriminator_forward.6} parent=0 // pred_region
    _
  $region9: #{discriminator_forward.6} parent=0 // pred_fallthru
    _
  // Predicated region
  $region10: #{discriminator_forward.6} parent=0 // pred_check
    _
  $region11: #{discriminator_forward.6} parent=0 // pred_check_branch
    %13 = sbr.rel (0) target = $region13
  $region12: #{discriminator_forward.6} parent=0 // pred_region
    _
  $region13: #{discriminator_forward.6} parent=0 // pred_fallthru
    _
  %v15 = vld [vmem:[%s0] sm:$0xf]
  %v16 = vld [vmem:[%s0 + $0x4] sm:$0xf]
  %v17 = vld [vmem:[%s0 + $0x8] sm:$0xf]
  %v18 = vld [vmem:[%s0 + $0xc] sm:$0xf]
  %v19 = vld [vmem:[%s0 + $0x10] sm:$0xf]
  %v20 = vld [vmem:[%s0 + $0x14] sm:$0xf]
  %v21 = vld [vmem:[%s0 + $0x18] sm:$0xf]
  %v22 = vld [vmem:[%s0 + $0x1c] sm:$0xf]
  %v23 = vld [vmem:[%s0 + $0x20] sm:$0xf]
  %v24 = vld [vmem:[%s0 + $0x24] sm:$0xf]
  %v25 = vld [vmem:[%s0 + $0x28] sm:$0xf]
  %v26 = vld [vmem:[%s0 + $0x2c] sm:$0xf]
  %v27 = vld [vmem:[%s0 + $0x30] sm:$0xf]
  %v28 = vld [vmem:[%s0 + $0x34] sm:$0xf]
  %v29 = vld [vmem:[%s0 + $0x38] sm:$0xf]
  %v30 = vld [vmem:[%s0 + $0x3c] sm:$0xf]
  %v31 = vld [vmem:[%s0 + $0x40] sm:$0xf]
  %v32 = vld [vmem:[%s0 + $0x44] sm:$0xf]
  %v33 = vld [vmem:[%s0 + $0x48] sm:$0xf]
  %v34 = vld [vmem:[%s0 + $0x4c] sm:$0xf]
  %v35 = vld [vmem:[%s0 + $0x50] sm:$0xf]
  %v36 = vld [vmem:[%s0 + $0x54] sm:$0xf]
  %v37 = vld [vmem:[%s0 + $0x58] sm:$0xf]
  %v38 = vld [vmem:[%s0 + $0x5c] sm:$0xf]
  %v39 = vld [vmem:[%s0 + $0x60] sm:$0xf]
  %v40 = vld [vmem:[%s0 + $0x64] sm:$0xf]
  %v41 = vld [vmem:[%s0 + $0x68] sm:$0xf]
  %v42 = vld [vmem:[%s0 + $0x6c] sm:$0xf]
  %v43 = vld [vmem:[%s0 + $0x70] sm:$0xf]
  %v44 = vld [vmem:[%s0 + $0x74] sm:$0xf]
  %v45 = vld [vmem:[%s0 + $0x78] sm:$0xf]
  %v46 = vld [vmem:[%s0 + $0x7c] sm:$0xf]
  %v47 = vld [vmem:[%s0 + $0x80] sm:$0xf]
  %v48 = vld [vmem:[%s0 + $0x84] sm:$0xf]
  %v49 = vld [vmem:[%s0 + $0x88] sm:$0xf]
  %v50 = vld [vmem:[%s0 + $0x8c] sm:$0xf]
  %v51 = vld [vmem:[%s0 + $0x90] sm:$0xf]
  %v52 = vld [vmem:[%s0 + $0x94] sm:$0xf]
  %v53 = vld [vmem:[%s0 + $0x98] sm:$0xf]
  %v54 = vld [vmem:[%s0 + $0x9c] sm:$0xf]
  %v55 = vld [vmem:[%s0 + $0xa0] sm:$0xf]
  %v56 = vld [vmem:[%s0 + $0xa4] sm:$0xf]
  %v57 = vld [vmem:[%s0 + $0xa8] sm:$0xf]
  %v58 = vld [vmem:[%s0 + $0xac] sm:$0xf]
  %v59 = vld [vmem:[%s0 + $0xb0] sm:$0xf]
  %v60 = vld [vmem:[%s0 + $0xb4] sm:$0xf]
  %v61 = vld [vmem:[%s0 + $0xb8] sm:$0xf]
  %v62 = vld [vmem:[%s0 + $0xbc] sm:$0xf]
  %v63 = vld [vmem:[%s0 + $0xc0] sm:$0xf]
  %v64 = vld [vmem:[%s0 + $0xc4] sm:$0xf]
  %v65 = vld [vmem:[%s0 + $0xc8] sm:$0xf]
  %v66 = vld [vmem:[%s0 + $0xcc] sm:$0xf]
  %v67 = vld [vmem:[%s0 + $0xd0] sm:$0xf]
  %v68 = vld [vmem:[%s0 + $0xd4] sm:$0xf]
  %v69 = vld [vmem:[%s0 + $0xd8] sm:$0xf]
  %v70 = vld [vmem:[%s0 + $0xdc] sm:$0xf]
  %v71 = vld [vmem:[%s0 + $0xe0] sm:$0xf]
  %v72 = vld [vmem:[%s0 + $0xe4] sm:$0xf]
  %v73 = vld [vmem:[%s0 + $0xe8] sm:$0xf]
  %v74 = vld [vmem:[%s0 + $0xec] sm:$0xf]
  %v75 = vld [vmem:[%s0 + $0xf0] sm:$0xf]
  %v76 = vld [vmem:[%s0 + $0xf4] sm:$0xf]
  %v77 = vld [vmem:[%s0 + $0xf8] sm:$0xf]
  %v78 = vld [vmem:[%s0 + $0xfc] sm:$0xf]
  %v79 = vld [vmem:[%s1] sm:$0xf]
  %v80 = vld [vmem:[%s1 + $0x4] sm:$0xf]
  %v81 = vld [vmem:[%s1 + $0x8] sm:$0xf]
  %v82 = vld [vmem:[%s1 + $0xc] sm:$0xf]
  %v83 = vld [vmem:[%s1 + $0x10] sm:$0xf]
  %v84 = vld [vmem:[%s1 + $0x14] sm:$0xf]
  %v85 = vld [vmem:[%s1 + $0x18] sm:$0xf]
  %v86 = vld [vmem:[%s1 + $0x1c] sm:$0xf]
  %v87 = vld [vmem:[%s1 + $0x20] sm:$0xf]
  %v88 = vld [vmem:[%s1 + $0x24] sm:$0xf]
  %v89 = vld [vmem:[%s1 + $0x28] sm:$0xf]
  %v90 = vld [vmem:[%s1 + $0x2c] sm:$0xf]
  %v91 = vld [vmem:[%s1 + $0x30] sm:$0xf]
  %v92 = vld [vmem:[%s1 + $0x34] sm:$0xf]
  %v93 = vld [vmem:[%s1 + $0x38] sm:$0xf]
  %v94 = vld [vmem:[%s1 + $0x3c] sm:$0xf]
  %v95 = vld [vmem:[%s2] sm:$0x1]
  %v97 = vlaneseq
  %v98 = vshrl.u32 %v97, 7
  %v99 = vsub.s32 0, %v98
  %v100 = vrot.slane %v95, %v99
  %v166 = vunpack.c.l.b16 %v15
  %v167 = vunpack.c.l.b16 %v16
  %v168 = vunpack.c.l.b16 %v17
  %v169 = vunpack.c.l.b16 %v18
  %v170 = vunpack.c.l.b16 %v19
  %v171 = vunpack.c.l.b16 %v20
  %v172 = vunpack.c.l.b16 %v21
  %v173 = vunpack.c.l.b16 %v22
  %v174 = vunpack.c.l.b16 %v23
  %v175 = vunpack.c.l.b16 %v24
  %v176 = vunpack.c.l.b16 %v25
  %v177 = vunpack.c.l.b16 %v26
  %v178 = vunpack.c.l.b16 %v27
  %v179 = vunpack.c.l.b16 %v28
  %v180 = vunpack.c.l.b16 %v29
  %v181 = vunpack.c.l.b16 %v30
  %v182 = vunpack.c.l.b16 %v31
  %v183 = vunpack.c.l.b16 %v32
  %v184 = vunpack.c.l.b16 %v33
  %v185 = vunpack.c.l.b16 %v34
  %v186 = vunpack.c.l.b16 %v35
  %v187 = vunpack.c.l.b16 %v36
  %v188 = vunpack.c.l.b16 %v37
  %v189 = vunpack.c.l.b16 %v38
  %v190 = vunpack.c.l.b16 %v39
  %v191 = vunpack.c.l.b16 %v40
  %v192 = vunpack.c.l.b16 %v41
  %v193 = vunpack.c.l.b16 %v42
  %v194 = vunpack.c.l.b16 %v43
  %v195 = vunpack.c.l.b16 %v44
  %v196 = vunpack.c.l.b16 %v45
  %v197 = vunpack.c.l.b16 %v46
  %v198 = vunpack.c.l.b16 %v47
  %v199 = vunpack.c.l.b16 %v48
  %v200 = vunpack.c.l.b16 %v49
  %v201 = vunpack.c.l.b16 %v50
  %v202 = vunpack.c.l.b16 %v51
  %v203 = vunpack.c.l.b16 %v52
  %v204 = vunpack.c.l.b16 %v53
  %v205 = vunpack.c.l.b16 %v54
  %v206 = vunpack.c.l.b16 %v55
  %v207 = vunpack.c.l.b16 %v56
  %v208 = vunpack.c.l.b16 %v57
  %v209 = vunpack.c.l.b16 %v58
  %v210 = vunpack.c.l.b16 %v59
  %v211 = vunpack.c.l.b16 %v60
  %v212 = vunpack.c.l.b16 %v61
  %v213 = vunpack.c.l.b16 %v62
  %v214 = vunpack.c.l.b16 %v63
  %v215 = vunpack.c.l.b16 %v64
  %v216 = vunpack.c.l.b16 %v65
  %v217 = vunpack.c.l.b16 %v66
  %v218 = vunpack.c.l.b16 %v67
  %v219 = vunpack.c.l.b16 %v68
  %v220 = vunpack.c.l.b16 %v69
  %v221 = vunpack.c.l.b16 %v70
  %v222 = vunpack.c.l.b16 %v71
  %v223 = vunpack.c.l.b16 %v72
  %v224 = vunpack.c.l.b16 %v73
  %v225 = vunpack.c.l.b16 %v74
  %v226 = vunpack.c.l.b16 %v75
  %v227 = vunpack.c.l.b16 %v76
  %v228 = vunpack.c.l.b16 %v77
  %v229 = vunpack.c.l.b16 %v78
  %v230 = vpack.c.b16 %v167, %v166
  %v231 = vpack.c.b16 %v169, %v168
  %v232 = vpack.c.b16 %v171, %v170
  %v233 = vpack.c.b16 %v173, %v172
  %v234 = vpack.c.b16 %v175, %v174
  %v235 = vpack.c.b16 %v177, %v176
  %v236 = vpack.c.b16 %v179, %v178
  %v237 = vpack.c.b16 %v181, %v180
  %v238 = vpack.c.b16 %v183, %v182
  %v239 = vpack.c.b16 %v185, %v184
  %v240 = vpack.c.b16 %v187, %v186
  %v241 = vpack.c.b16 %v189, %v188
  %v242 = vpack.c.b16 %v191, %v190
  %v243 = vpack.c.b16 %v193, %v192
  %v244 = vpack.c.b16 %v195, %v194
  %v245 = vpack.c.b16 %v197, %v196
  %v246 = vpack.c.b16 %v199, %v198
  %v247 = vpack.c.b16 %v201, %v200
  %v248 = vpack.c.b16 %v203, %v202
  %v249 = vpack.c.b16 %v205, %v204
  %v250 = vpack.c.b16 %v207, %v206
  %v251 = vpack.c.b16 %v209, %v208
  %v252 = vpack.c.b16 %v211, %v210
  %v253 = vpack.c.b16 %v213, %v212
  %v254 = vpack.c.b16 %v215, %v214
  %v255 = vpack.c.b16 %v217, %v216
  %v256 = vpack.c.b16 %v219, %v218
  %v257 = vpack.c.b16 %v221, %v220
  %v258 = vpack.c.b16 %v223, %v222
  %v259 = vpack.c.b16 %v225, %v224
  %v260 = vpack.c.b16 %v227, %v226
  %v261 = vpack.c.b16 %v229, %v228
  %v310 = vunpack.c.l.b16 %v79
  %v311 = vunpack.c.l.b16 %v80
  %v312 = vunpack.c.l.b16 %v81
  %v313 = vunpack.c.l.b16 %v82
  %v314 = vunpack.c.l.b16 %v83
  %v315 = vunpack.c.l.b16 %v84
  %v316 = vunpack.c.l.b16 %v85
  %v317 = vunpack.c.l.b16 %v86
  %v318 = vunpack.c.l.b16 %v87
  %v319 = vunpack.c.l.b16 %v88
  %v320 = vunpack.c.l.b16 %v89
  %v321 = vunpack.c.l.b16 %v90
  %v322 = vunpack.c.l.b16 %v91
  %v323 = vunpack.c.l.b16 %v92
  %v324 = vunpack.c.l.b16 %v93
  %v325 = vunpack.c.l.b16 %v94
  %v326 = vpack.c.b16 %v311, %v310
  %v327 = vpack.c.b16 %v313, %v312
  %v328 = vpack.c.b16 %v315, %v314
  %v329 = vpack.c.b16 %v317, %v316
  %v330 = vpack.c.b16 %v319, %v318
  %v331 = vpack.c.b16 %v321, %v320
  %v332 = vpack.c.b16 %v323, %v322
  %v333 = vpack.c.b16 %v325, %v324
  %342 = vmatprep.subr.bf16.mxu0 0
  %343 = vmatpush1.bf16.msra.mxu0 %v326
  %344 = vmatprep.subr.bf16.mxu0 0
  %345 = vmatpush1.bf16.msra.mxu0 %v327
  %346 = vmatprep.subr.bf16.mxu0 0
  %347 = vmatpush1.bf16.msra.mxu0 %v328
  %348 = vmatprep.subr.bf16.mxu0 0
  %349 = vmatpush1.bf16.msra.mxu0 %v329
  %350 = vmatprep.subr.bf16.mxu0 0
  %351 = vmatpush1.bf16.msra.mxu0 %v330
  %352 = vmatprep.subr.bf16.mxu0 0
  %353 = vmatpush1.bf16.msra.mxu0 %v331
  %354 = vmatprep.subr.bf16.mxu0 0
  %355 = vmatpush1.bf16.msra.mxu0 %v332
  %356 = vmatprep.subr.bf16.mxu0 0
  %357 = vmatpush1.bf16.msra.mxu0 %v333
  %358 = vmatprep.subr.bf16.mxu0 0
  %359 = vmatpush1.bf16.msra.mxu0 0
  %360 = vmatprep.subr.bf16.mxu0 0
  %361 = vmatpush1.bf16.msra.mxu0 0
  %362 = vmatprep.subr.bf16.mxu0 0
  %363 = vmatpush1.bf16.msra.mxu0 0
  %364 = vmatprep.subr.bf16.mxu0 0
  %365 = vmatpush1.bf16.msra.mxu0 0
  %366 = vmatprep.subr.bf16.mxu0 0
  %367 = vmatpush1.bf16.msra.mxu0 0
  %368 = vmatprep.subr.bf16.mxu0 0
  %369 = vmatpush1.bf16.msra.mxu0 0
  %370 = vmatprep.subr.bf16.mxu0 0
  %371 = vmatpush1.bf16.msra.mxu0 0
  %372 = vmatprep.subr.bf16.mxu0 0
  %373 = vmatpush1.bf16.msra.mxu0 0
  %374 = vmatprep.mubr.bf16.mxu0 0
  %375 = vmatmul.mubr.bf16.gmra.mrb[0].mxu0 %v230
  %v376 = vpop.f32.mrb[0].mxu0
  %v377 = vadd.f32 %v100, %v376
  %v378 = vpop.f32.mrb[0].mxu0
  %v379 = vpop.f32.mrb[0].mxu0
  %v380 = vadd.f32 %v100, %v379
  %v381 = vpop.f32.mrb[0].mxu0
  %382 = vmatprep.mubr.bf16.mxu0 0
  %383 = vmatmul.mubr.bf16.gmra.mrb[0].mxu0 %v231
  %v384 = vpop.f32.mrb[0].mxu0
  %v385 = vadd.f32 %v100, %v384
  %v386 = vpop.f32.mrb[0].mxu0
  %v387 = vpop.f32.mrb[0].mxu0
  %v388 = vadd.f32 %v100, %v387
  %v389 = vpop.f32.mrb[0].mxu0
  %390 = vmatprep.mubr.bf16.mxu0 0
  %391 = vmatmul.mubr.bf16.gmra.mrb[0].mxu0 %v232
  %v392 = vpop.f32.mrb[0].mxu0
  %v393 = vadd.f32 %v100, %v392
  %v394 = vpop.f32.mrb[0].mxu0
  %v395 = vpop.f32.mrb[0].mxu0
  %v396 = vadd.f32 %v100, %v395
  %v397 = vpop.f32.mrb[0].mxu0
  %398 = vmatprep.mubr.bf16.mxu0 0
  %399 = vmatmul.mubr.bf16.gmra.mrb[0].mxu0 %v233
  %v400 = vpop.f32.mrb[0].mxu0
  %v401 = vadd.f32 %v100, %v400
  %v402 = vpop.f32.mrb[0].mxu0
  %v403 = vpop.f32.mrb[0].mxu0
  %v404 = vadd.f32 %v100, %v403
  %v405 = vpop.f32.mrb[0].mxu0
  %406 = vmatprep.mubr.bf16.mxu0 0
  %407 = vmatmul.mubr.bf16.gmra.mrb[0].mxu0 %v234
  %v408 = vpop.f32.mrb[0].mxu0
  %v409 = vadd.f32 %v100, %v408
  %v410 = vpop.f32.mrb[0].mxu0
  %v411 = vpop.f32.mrb[0].mxu0
  %v412 = vadd.f32 %v100, %v411
  %v413 = vpop.f32.mrb[0].mxu0
  %414 = vmatprep.mubr.bf16.mxu0 0
  %415 = vmatmul.mubr.bf16.gmra.mrb[0].mxu0 %v235
  %v416 = vpop.f32.mrb[0].mxu0
  %v417 = vadd.f32 %v100, %v416
  %v418 = vpop.f32.mrb[0].mxu0
  %v419 = vpop.f32.mrb[0].mxu0
  %v420 = vadd.f32 %v100, %v419
  %v421 = vpop.f32.mrb[0].mxu0
  %422 = vmatprep.mubr.bf16.mxu0 0
  %423 = vmatmul.mubr.bf16.gmra.mrb[0].mxu0 %v236
  %v424 = vpop.f32.mrb[0].mxu0
  %v425 = vadd.f32 %v100, %v424
  %v426 = vpop.f32.mrb[0].mxu0
  %v427 = vpop.f32.mrb[0].mxu0
  %v428 = vadd.f32 %v100, %v427
  %v429 = vpop.f32.mrb[0].mxu0
  %430 = vmatprep.mubr.bf16.mxu0 0
  %431 = vmatmul.mubr.bf16.gmra.mrb[0].mxu0 %v237
  %v432 = vpop.f32.mrb[0].mxu0
  %v433 = vadd.f32 %v100, %v432
  %v434 = vpop.f32.mrb[0].mxu0
  %v435 = vpop.f32.mrb[0].mxu0
  %v436 = vadd.f32 %v100, %v435
  %v437 = vpop.f32.mrb[0].mxu0
  %438 = vmatprep.mubr.bf16.mxu0 0
  %439 = vmatmul.mubr.bf16.gmra.mrb[0].mxu0 %v238
  %v440 = vpop.f32.mrb[0].mxu0
  %v441 = vadd.f32 %v100, %v440
  %v442 = vpop.f32.mrb[0].mxu0
  %v443 = vpop.f32.mrb[0].mxu0
  %v444 = vadd.f32 %v100, %v443
  %v445 = vpop.f32.mrb[0].mxu0
  %446 = vmatprep.mubr.bf16.mxu0 0
  %447 = vmatmul.mubr.bf16.gmra.mrb[0].mxu0 %v239
  %v448 = vpop.f32.mrb[0].mxu0
  %v449 = vadd.f32 %v100, %v448
  %v450 = vpop.f32.mrb[0].mxu0
  %v451 = vpop.f32.mrb[0].mxu0
  %v452 = vadd.f32 %v100, %v451
  %v453 = vpop.f32.mrb[0].mxu0
  %454 = vmatprep.mubr.bf16.mxu0 0
  %455 = vmatmul.mubr.bf16.gmra.mrb[0].mxu0 %v240
  %v456 = vpop.f32.mrb[0].mxu0
  %v457 = vadd.f32 %v100, %v456
  %v458 = vpop.f32.mrb[0].mxu0
  %v459 = vpop.f32.mrb[0].mxu0
  %v460 = vadd.f32 %v100, %v459
  %v461 = vpop.f32.mrb[0].mxu0
  %462 = vmatprep.mubr.bf16.mxu0 0
  %463 = vmatmul.mubr.bf16.gmra.mrb[0].mxu0 %v241
  %v464 = vpop.f32.mrb[0].mxu0
  %v465 = vadd.f32 %v100, %v464
  %v466 = vpop.f32.mrb[0].mxu0
  %v467 = vpop.f32.mrb[0].mxu0
  %v468 = vadd.f32 %v100, %v467
  %v469 = vpop.f32.mrb[0].mxu0
  %470 = vmatprep.mubr.bf16.mxu0 0
  %471 = vmatmul.mubr.bf16.gmra.mrb[0].mxu0 %v242
  %v472 = vpop.f32.mrb[0].mxu0
  %v473 = vadd.f32 %v100, %v472
  %v474 = vpop.f32.mrb[0].mxu0
  %v475 = vpop.f32.mrb[0].mxu0
  %v476 = vadd.f32 %v100, %v475
  %v477 = vpop.f32.mrb[0].mxu0
  %478 = vmatprep.mubr.bf16.mxu0 0
  %479 = vmatmul.mubr.bf16.gmra.mrb[0].mxu0 %v243
  %v480 = vpop.f32.mrb[0].mxu0
  %v481 = vadd.f32 %v100, %v480
  %v482 = vpop.f32.mrb[0].mxu0
  %v483 = vpop.f32.mrb[0].mxu0
  %v484 = vadd.f32 %v100, %v483
  %v485 = vpop.f32.mrb[0].mxu0
  %486 = vmatprep.mubr.bf16.mxu0 0
  %487 = vmatmul.mubr.bf16.gmra.mrb[0].mxu0 %v244
  %v488 = vpop.f32.mrb[0].mxu0
  %v489 = vadd.f32 %v100, %v488
  %v490 = vpop.f32.mrb[0].mxu0
  %v491 = vpop.f32.mrb[0].mxu0
  %v492 = vadd.f32 %v100, %v491
  %v493 = vpop.f32.mrb[0].mxu0
  %494 = vmatprep.mubr.bf16.mxu0 0
  %495 = vmatmul.mubr.bf16.gmra.mrb[0].mxu0 %v245
  %v496 = vpop.f32.mrb[0].mxu0
  %v497 = vadd.f32 %v100, %v496
  %v498 = vpop.f32.mrb[0].mxu0
  %v499 = vpop.f32.mrb[0].mxu0
  %v500 = vadd.f32 %v100, %v499
  %v501 = vpop.f32.mrb[0].mxu0
  %502 = vmatprep.mubr.bf16.mxu0 0
  %503 = vmatmul.mubr.bf16.gmra.mrb[0].mxu0 %v246
  %v504 = vpop.f32.mrb[0].mxu0
  %v505 = vadd.f32 %v100, %v504
  %v506 = vpop.f32.mrb[0].mxu0
  %v507 = vpop.f32.mrb[0].mxu0
  %v508 = vadd.f32 %v100, %v507
  %v509 = vpop.f32.mrb[0].mxu0
  %510 = vmatprep.mubr.bf16.mxu0 0
  %511 = vmatmul.mubr.bf16.gmra.mrb[0].mxu0 %v247
  %v512 = vpop.f32.mrb[0].mxu0
  %v513 = vadd.f32 %v100, %v512
  %v514 = vpop.f32.mrb[0].mxu0
  %v515 = vpop.f32.mrb[0].mxu0
  %v516 = vadd.f32 %v100, %v515
  %v517 = vpop.f32.mrb[0].mxu0
  %518 = vmatprep.mubr.bf16.mxu0 0
  %519 = vmatmul.mubr.bf16.gmra.mrb[0].mxu0 %v248
  %v520 = vpop.f32.mrb[0].mxu0
  %v521 = vadd.f32 %v100, %v520
  %v522 = vpop.f32.mrb[0].mxu0
  %v523 = vpop.f32.mrb[0].mxu0
  %v524 = vadd.f32 %v100, %v523
  %v525 = vpop.f32.mrb[0].mxu0
  %526 = vmatprep.mubr.bf16.mxu0 0
  %527 = vmatmul.mubr.bf16.gmra.mrb[0].mxu0 %v249
  %v528 = vpop.f32.mrb[0].mxu0
  %v529 = vadd.f32 %v100, %v528
  %v530 = vpop.f32.mrb[0].mxu0
  %v531 = vpop.f32.mrb[0].mxu0
  %v532 = vadd.f32 %v100, %v531
  %v533 = vpop.f32.mrb[0].mxu0
  %534 = vmatprep.mubr.bf16.mxu0 0
  %535 = vmatmul.mubr.bf16.gmra.mrb[0].mxu0 %v250
  %v536 = vpop.f32.mrb[0].mxu0
  %v537 = vadd.f32 %v100, %v536
  %v538 = vpop.f32.mrb[0].mxu0
  %v539 = vpop.f32.mrb[0].mxu0
  %v540 = vadd.f32 %v100, %v539
  %v541 = vpop.f32.mrb[0].mxu0
  %542 = vmatprep.mubr.bf16.mxu0 0
  %543 = vmatmul.mubr.bf16.gmra.mrb[0].mxu0 %v251
  %v544 = vpop.f32.mrb[0].mxu0
  %v545 = vadd.f32 %v100, %v544
  %v546 = vpop.f32.mrb[0].mxu0
  %v547 = vpop.f32.mrb[0].mxu0
  %v548 = vadd.f32 %v100, %v547
  %v549 = vpop.f32.mrb[0].mxu0
  %550 = vmatprep.mubr.bf16.mxu0 0
  %551 = vmatmul.mubr.bf16.gmra.mrb[0].mxu0 %v252
  %v552 = vpop.f32.mrb[0].mxu0
  %v553 = vadd.f32 %v100, %v552
  %v554 = vpop.f32.mrb[0].mxu0
  %v555 = vpop.f32.mrb[0].mxu0
  %v556 = vadd.f32 %v100, %v555
  %v557 = vpop.f32.mrb[0].mxu0
  %558 = vmatprep.mubr.bf16.mxu0 0
  %559 = vmatmul.mubr.bf16.gmra.mrb[0].mxu0 %v253
  %v560 = vpop.f32.mrb[0].mxu0
  %v561 = vadd.f32 %v100, %v560
  %v562 = vpop.f32.mrb[0].mxu0
  %v563 = vpop.f32.mrb[0].mxu0
  %v564 = vadd.f32 %v100, %v563
  %v565 = vpop.f32.mrb[0].mxu0
  %566 = vmatprep.mubr.bf16.mxu0 0
  %567 = vmatmul.mubr.bf16.gmra.mrb[0].mxu0 %v254
  %v568 = vpop.f32.mrb[0].mxu0
  %v569 = vadd.f32 %v100, %v568
  %v570 = vpop.f32.mrb[0].mxu0
  %v571 = vpop.f32.mrb[0].mxu0
  %v572 = vadd.f32 %v100, %v571
  %v573 = vpop.f32.mrb[0].mxu0
  %574 = vmatprep.mubr.bf16.mxu0 0
  %575 = vmatmul.mubr.bf16.gmra.mrb[0].mxu0 %v255
  %v576 = vpop.f32.mrb[0].mxu0
  %v577 = vadd.f32 %v100, %v576
  %v578 = vpop.f32.mrb[0].mxu0
  %v579 = vpop.f32.mrb[0].mxu0
  %v580 = vadd.f32 %v100, %v579
  %v581 = vpop.f32.mrb[0].mxu0
  %582 = vmatprep.mubr.bf16.mxu0 0
  %583 = vmatmul.mubr.bf16.gmra.mrb[0].mxu0 %v256
  %v584 = vpop.f32.mrb[0].mxu0
  %v585 = vadd.f32 %v100, %v584
  %v586 = vpop.f32.mrb[0].mxu0
  %v587 = vpop.f32.mrb[0].mxu0
  %v588 = vadd.f32 %v100, %v587
  %v589 = vpop.f32.mrb[0].mxu0
  %590 = vmatprep.mubr.bf16.mxu0 0
  %591 = vmatmul.mubr.bf16.gmra.mrb[0].mxu0 %v257
  %v592 = vpop.f32.mrb[0].mxu0
  %v593 = vadd.f32 %v100, %v592
  %v594 = vpop.f32.mrb[0].mxu0
  %v595 = vpop.f32.mrb[0].mxu0
  %v596 = vadd.f32 %v100, %v595
  %v597 = vpop.f32.mrb[0].mxu0
  %598 = vmatprep.mubr.bf16.mxu0 0
  %599 = vmatmul.mubr.bf16.gmra.mrb[0].mxu0 %v258
  %v600 = vpop.f32.mrb[0].mxu0
  %v601 = vadd.f32 %v100, %v600
  %v602 = vpop.f32.mrb[0].mxu0
  %v603 = vpop.f32.mrb[0].mxu0
  %v604 = vadd.f32 %v100, %v603
  %v605 = vpop.f32.mrb[0].mxu0
  %606 = vmatprep.mubr.bf16.mxu0 0
  %607 = vmatmul.mubr.bf16.gmra.mrb[0].mxu0 %v259
  %v608 = vpop.f32.mrb[0].mxu0
  %v609 = vadd.f32 %v100, %v608
  %v610 = vpop.f32.mrb[0].mxu0
  %v611 = vpop.f32.mrb[0].mxu0
  %v612 = vadd.f32 %v100, %v611
  %v613 = vpop.f32.mrb[0].mxu0
  %614 = vmatprep.mubr.bf16.mxu0 0
  %615 = vmatmul.mubr.bf16.gmra.mrb[0].mxu0 %v260
  %v616 = vpop.f32.mrb[0].mxu0
  %v617 = vadd.f32 %v100, %v616
  %v618 = vpop.f32.mrb[0].mxu0
  %v619 = vpop.f32.mrb[0].mxu0
  %v620 = vadd.f32 %v100, %v619
  %v621 = vpop.f32.mrb[0].mxu0
  %622 = vmatprep.mubr.bf16.mxu0 0
  %623 = vmatmul.mubr.bf16.gmra.mrb[0].mxu0 %v261
  %v624 = vpop.f32.mrb[0].mxu0
  %v625 = vadd.f32 %v100, %v624
  %v626 = vpop.f32.mrb[0].mxu0
  %v627 = vpop.f32.mrb[0].mxu0
  %v628 = vadd.f32 %v100, %v627
  %v629 = vpop.f32.mrb[0].mxu0
  %630 = vdwg.mxu0
  %vm631 = vcmp.ge.f32.partialorder %v377, 0.0
  %vm632 = vcmp.ge.f32.partialorder %v380, 0.0
  %vm633 = vcmp.ge.f32.partialorder %v385, 0.0
  %vm634 = vcmp.ge.f32.partialorder %v388, 0.0
  %vm635 = vcmp.ge.f32.partialorder %v393, 0.0
  %vm636 = vcmp.ge.f32.partialorder %v396, 0.0
  %vm637 = vcmp.ge.f32.partialorder %v401, 0.0
  %vm638 = vcmp.ge.f32.partialorder %v404, 0.0
  %vm639 = vcmp.ge.f32.partialorder %v409, 0.0
  %vm640 = vcmp.ge.f32.partialorder %v412, 0.0
  %vm641 = vcmp.ge.f32.partialorder %v417, 0.0
  %vm642 = vcmp.ge.f32.partialorder %v420, 0.0
  %vm643 = vcmp.ge.f32.partialorder %v425, 0.0
  %vm644 = vcmp.ge.f32.partialorder %v428, 0.0
  %vm645 = vcmp.ge.f32.partialorder %v433, 0.0
  %vm646 = vcmp.ge.f32.partialorder %v436, 0.0
  %vm647 = vcmp.ge.f32.partialorder %v441, 0.0
  %vm648 = vcmp.ge.f32.partialorder %v444, 0.0
  %vm649 = vcmp.ge.f32.partialorder %v449, 0.0
  %vm650 = vcmp.ge.f32.partialorder %v452, 0.0
  %vm651 = vcmp.ge.f32.partialorder %v457, 0.0
  %vm652 = vcmp.ge.f32.partialorder %v460, 0.0
  %vm653 = vcmp.ge.f32.partialorder %v465, 0.0
  %vm654 = vcmp.ge.f32.partialorder %v468, 0.0
  %vm655 = vcmp.ge.f32.partialorder %v473, 0.0
  %vm656 = vcmp.ge.f32.partialorder %v476, 0.0
  %vm657 = vcmp.ge.f32.partialorder %v481, 0.0
  %vm658 = vcmp.ge.f32.partialorder %v484, 0.0
  %vm659 = vcmp.ge.f32.partialorder %v489, 0.0
  %vm660 = vcmp.ge.f32.partialorder %v492, 0.0
  %vm661 = vcmp.ge.f32.partialorder %v497, 0.0
  %vm662 = vcmp.ge.f32.partialorder %v500, 0.0
  %vm663 = vcmp.ge.f32.partialorder %v505, 0.0
  %vm664 = vcmp.ge.f32.partialorder %v508, 0.0
  %vm665 = vcmp.ge.f32.partialorder %v513, 0.0
  %vm666 = vcmp.ge.f32.partialorder %v516, 0.0
  %vm667 = vcmp.ge.f32.partialorder %v521, 0.0
  %vm668 = vcmp.ge.f32.partialorder %v524, 0.0
  %vm669 = vcmp.ge.f32.partialorder %v529, 0.0
  %vm670 = vcmp.ge.f32.partialorder %v532, 0.0
  %vm671 = vcmp.ge.f32.partialorder %v537, 0.0
  %vm672 = vcmp.ge.f32.partialorder %v540, 0.0
  %vm673 = vcmp.ge.f32.partialorder %v545, 0.0
  %vm674 = vcmp.ge.f32.partialorder %v548, 0.0
  %vm675 = vcmp.ge.f32.partialorder %v553, 0.0
  %vm676 = vcmp.ge.f32.partialorder %v556, 0.0
  %vm677 = vcmp.ge.f32.partialorder %v561, 0.0
  %vm678 = vcmp.ge.f32.partialorder %v564, 0.0
  %vm679 = vcmp.ge.f32.partialorder %v569, 0.0
  %vm680 = vcmp.ge.f32.partialorder %v572, 0.0
  %vm681 = vcmp.ge.f32.partialorder %v577, 0.0
  %vm682 = vcmp.ge.f32.partialorder %v580, 0.0
  %vm683 = vcmp.ge.f32.partialorder %v585, 0.0
  %vm684 = vcmp.ge.f32.partialorder %v588, 0.0
  %vm685 = vcmp.ge.f32.partialorder %v593, 0.0
  %vm686 = vcmp.ge.f32.partialorder %v596, 0.0
  %vm687 = vcmp.ge.f32.partialorder %v601, 0.0
  %vm688 = vcmp.ge.f32.partialorder %v604, 0.0
  %vm689 = vcmp.ge.f32.partialorder %v609, 0.0
  %vm690 = vcmp.ge.f32.partialorder %v612, 0.0
  %vm691 = vcmp.ge.f32.partialorder %v617, 0.0
  %vm692 = vcmp.ge.f32.partialorder %v620, 0.0
  %vm693 = vcmp.ge.f32.partialorder %v625, 0.0
  %vm694 = vcmp.ge.f32.partialorder %v628, 0.0
  %v695 = vmul.f32 %v377, 0.2
  %v696 = vmul.f32 %v380, 0.2
  %v697 = vmul.f32 %v385, 0.2
  %v698 = vmul.f32 %v388, 0.2
  %v699 = vmul.f32 %v393, 0.2
  %v700 = vmul.f32 %v396, 0.2
  %v701 = vmul.f32 %v401, 0.2
  %v702 = vmul.f32 %v404, 0.2
  %v703 = vmul.f32 %v409, 0.2
  %v704 = vmul.f32 %v412, 0.2
  %v705 = vmul.f32 %v417, 0.2
  %v706 = vmul.f32 %v420, 0.2
  %v707 = vmul.f32 %v425, 0.2
  %v708 = vmul.f32 %v428, 0.2
  %v709 = vmul.f32 %v433, 0.2
  %v710 = vmul.f32 %v436, 0.2
  %v711 = vmul.f32 %v441, 0.2
  %v712 = vmul.f32 %v444, 0.2
  %v713 = vmul.f32 %v449, 0.2
  %v714 = vmul.f32 %v452, 0.2
  %v715 = vmul.f32 %v457, 0.2
  %v716 = vmul.f32 %v460, 0.2
  %v717 = vmul.f32 %v465, 0.2
  %v718 = vmul.f32 %v468, 0.2
  %v719 = vmul.f32 %v473, 0.2
  %v720 = vmul.f32 %v476, 0.2
  %v721 = vmul.f32 %v481, 0.2
  %v722 = vmul.f32 %v484, 0.2
  %v723 = vmul.f32 %v489, 0.2
  %v724 = vmul.f32 %v492, 0.2
  %v725 = vmul.f32 %v497, 0.2
  %v726 = vmul.f32 %v500, 0.2
  %v727 = vmul.f32 %v505, 0.2
  %v728 = vmul.f32 %v508, 0.2
  %v729 = vmul.f32 %v513, 0.2
  %v730 = vmul.f32 %v516, 0.2
  %v731 = vmul.f32 %v521, 0.2
  %v732 = vmul.f32 %v524, 0.2
  %v733 = vmul.f32 %v529, 0.2
  %v734 = vmul.f32 %v532, 0.2
  %v735 = vmul.f32 %v537, 0.2
  %v736 = vmul.f32 %v540, 0.2
  %v737 = vmul.f32 %v545, 0.2
  %v738 = vmul.f32 %v548, 0.2
  %v739 = vmul.f32 %v553, 0.2
  %v740 = vmul.f32 %v556, 0.2
  %v741 = vmul.f32 %v561, 0.2
  %v742 = vmul.f32 %v564, 0.2
  %v743 = vmul.f32 %v569, 0.2
  %v744 = vmul.f32 %v572, 0.2
  %v745 = vmul.f32 %v577, 0.2
  %v746 = vmul.f32 %v580, 0.2
  %v747 = vmul.f32 %v585, 0.2
  %v748 = vmul.f32 %v588, 0.2
  %v749 = vmul.f32 %v593, 0.2
  %v750 = vmul.f32 %v596, 0.2
  %v751 = vmul.f32 %v601, 0.2
  %v752 = vmul.f32 %v604, 0.2
  %v753 = vmul.f32 %v609, 0.2
  %v754 = vmul.f32 %v612, 0.2
  %v755 = vmul.f32 %v617, 0.2
  %v756 = vmul.f32 %v620, 0.2
  %v757 = vmul.f32 %v625, 0.2
  %v758 = vmul.f32 %v628, 0.2
  %v759 = vsel %vm631, %v377, %v695
  %v760 = vsel %vm632, %v380, %v696
  %v761 = vsel %vm633, %v385, %v697
  %v762 = vsel %vm634, %v388, %v698
  %v763 = vsel %vm635, %v393, %v699
  %v764 = vsel %vm636, %v396, %v700
  %v765 = vsel %vm637, %v401, %v701
  %v766 = vsel %vm638, %v404, %v702
  %v767 = vsel %vm639, %v409, %v703
  %v768 = vsel %vm640, %v412, %v704
  %v769 = vsel %vm641, %v417, %v705
  %v770 = vsel %vm642, %v420, %v706
  %v771 = vsel %vm643, %v425, %v707
  %v772 = vsel %vm644, %v428, %v708
  %v773 = vsel %vm645, %v433, %v709
  %v774 = vsel %vm646, %v436, %v710
  %v775 = vsel %vm647, %v441, %v711
  %v776 = vsel %vm648, %v444, %v712
  %v777 = vsel %vm649, %v449, %v713
  %v778 = vsel %vm650, %v452, %v714
  %v779 = vsel %vm651, %v457, %v715
  %v780 = vsel %vm652, %v460, %v716
  %v781 = vsel %vm653, %v465, %v717
  %v782 = vsel %vm654, %v468, %v718
  %v783 = vsel %vm655, %v473, %v719
  %v784 = vsel %vm656, %v476, %v720
  %v785 = vsel %vm657, %v481, %v721
  %v786 = vsel %vm658, %v484, %v722
  %v787 = vsel %vm659, %v489, %v723
  %v788 = vsel %vm660, %v492, %v724
  %v789 = vsel %vm661, %v497, %v725
  %v790 = vsel %vm662, %v500, %v726
  %v791 = vsel %vm663, %v505, %v727
  %v792 = vsel %vm664, %v508, %v728
  %v793 = vsel %vm665, %v513, %v729
  %v794 = vsel %vm666, %v516, %v730
  %v795 = vsel %vm667, %v521, %v731
  %v796 = vsel %vm668, %v524, %v732
  %v797 = vsel %vm669, %v529, %v733
  %v798 = vsel %vm670, %v532, %v734
  %v799 = vsel %vm671, %v537, %v735
  %v800 = vsel %vm672, %v540, %v736
  %v801 = vsel %vm673, %v545, %v737
  %v802 = vsel %vm674, %v548, %v738
  %v803 = vsel %vm675, %v553, %v739
  %v804 = vsel %vm676, %v556, %v740
  %v805 = vsel %vm677, %v561, %v741
  %v806 = vsel %vm678, %v564, %v742
  %v807 = vsel %vm679, %v569, %v743
  %v808 = vsel %vm680, %v572, %v744
  %v809 = vsel %vm681, %v577, %v745
  %v810 = vsel %vm682, %v580, %v746
  %v811 = vsel %vm683, %v585, %v747
  %v812 = vsel %vm684, %v588, %v748
  %v813 = vsel %vm685, %v593, %v749
  %v814 = vsel %vm686, %v596, %v750
  %v815 = vsel %vm687, %v601, %v751
  %v816 = vsel %vm688, %v604, %v752
  %v817 = vsel %vm689, %v609, %v753
  %v818 = vsel %vm690, %v612, %v754
  %v819 = vsel %vm691, %v617, %v755
  %v820 = vsel %vm692, %v620, %v756
  %v821 = vsel %vm693, %v625, %v757
  %v822 = vsel %vm694, %v628, %v758
  %v823 = vpack.c.bf16 %v760, %v759
  %v824 = vpack.c.bf16 %v762, %v761
  %v825 = vpack.c.bf16 %v764, %v763
  %v826 = vpack.c.bf16 %v766, %v765
  %v827 = vpack.c.bf16 %v768, %v767
  %v828 = vpack.c.bf16 %v770, %v769
  %v829 = vpack.c.bf16 %v772, %v771
  %v830 = vpack.c.bf16 %v774, %v773
  %v831 = vpack.c.bf16 %v776, %v775
  %v832 = vpack.c.bf16 %v778, %v777
  %v833 = vpack.c.bf16 %v780, %v779
  %v834 = vpack.c.bf16 %v782, %v781
  %v835 = vpack.c.bf16 %v784, %v783
  %v836 = vpack.c.bf16 %v786, %v785
  %v837 = vpack.c.bf16 %v788, %v787
  %v838 = vpack.c.bf16 %v790, %v789
  %v839 = vpack.c.bf16 %v792, %v791
  %v840 = vpack.c.bf16 %v794, %v793
  %v841 = vpack.c.bf16 %v796, %v795
  %v842 = vpack.c.bf16 %v798, %v797
  %v843 = vpack.c.bf16 %v800, %v799
  %v844 = vpack.c.bf16 %v802, %v801
  %v845 = vpack.c.bf16 %v804, %v803
  %v846 = vpack.c.bf16 %v806, %v805
  %v847 = vpack.c.bf16 %v808, %v807
  %v848 = vpack.c.bf16 %v810, %v809
  %v849 = vpack.c.bf16 %v812, %v811
  %v850 = vpack.c.bf16 %v814, %v813
  %v851 = vpack.c.bf16 %v816, %v815
  %v852 = vpack.c.bf16 %v818, %v817
  %v853 = vpack.c.bf16 %v820, %v819
  %v854 = vpack.c.bf16 %v822, %v821
  %v887 = vunpack.c.l.b16 %v823
  %v888 = vunpack.c.h.b16 %v823
  %v889 = vunpack.c.l.b16 %v824
  %v890 = vunpack.c.h.b16 %v824
  %v891 = vunpack.c.l.b16 %v825
  %v892 = vunpack.c.h.b16 %v825
  %v893 = vunpack.c.l.b16 %v826
  %v894 = vunpack.c.h.b16 %v826
  %v895 = vunpack.c.l.b16 %v827
  %v896 = vunpack.c.h.b16 %v827
  %v897 = vunpack.c.l.b16 %v828
  %v898 = vunpack.c.h.b16 %v828
  %v899 = vunpack.c.l.b16 %v829
  %v900 = vunpack.c.h.b16 %v829
  %v901 = vunpack.c.l.b16 %v830
  %v902 = vunpack.c.h.b16 %v830
  %v903 = vunpack.c.l.b16 %v831
  %v904 = vunpack.c.h.b16 %v831
  %v905 = vunpack.c.l.b16 %v832
  %v906 = vunpack.c.h.b16 %v832
  %v907 = vunpack.c.l.b16 %v833
  %v908 = vunpack.c.h.b16 %v833
  %v909 = vunpack.c.l.b16 %v834
  %v910 = vunpack.c.h.b16 %v834
  %v911 = vunpack.c.l.b16 %v835
  %v912 = vunpack.c.h.b16 %v835
  %v913 = vunpack.c.l.b16 %v836
  %v914 = vunpack.c.h.b16 %v836
  %v915 = vunpack.c.l.b16 %v837
  %v916 = vunpack.c.h.b16 %v837
  %v917 = vunpack.c.l.b16 %v838
  %v918 = vunpack.c.h.b16 %v838
  %v919 = vunpack.c.l.b16 %v839
  %v920 = vunpack.c.h.b16 %v839
  %v921 = vunpack.c.l.b16 %v840
  %v922 = vunpack.c.h.b16 %v840
  %v923 = vunpack.c.l.b16 %v841
  %v924 = vunpack.c.h.b16 %v841
  %v925 = vunpack.c.l.b16 %v842
  %v926 = vunpack.c.h.b16 %v842
  %v927 = vunpack.c.l.b16 %v843
  %v928 = vunpack.c.h.b16 %v843
  %v929 = vunpack.c.l.b16 %v844
  %v930 = vunpack.c.h.b16 %v844
  %v931 = vunpack.c.l.b16 %v845
  %v932 = vunpack.c.h.b16 %v845
  %v933 = vunpack.c.l.b16 %v846
  %v934 = vunpack.c.h.b16 %v846
  %v935 = vunpack.c.l.b16 %v847
  %v936 = vunpack.c.h.b16 %v847
  %v937 = vunpack.c.l.b16 %v848
  %v938 = vunpack.c.h.b16 %v848
  %v939 = vunpack.c.l.b16 %v849
  %v940 = vunpack.c.h.b16 %v849
  %v941 = vunpack.c.l.b16 %v850
  %v942 = vunpack.c.h.b16 %v850
  %v943 = vunpack.c.l.b16 %v851
  %v944 = vunpack.c.h.b16 %v851
  %v945 = vunpack.c.l.b16 %v852
  %v946 = vunpack.c.h.b16 %v852
  %v947 = vunpack.c.l.b16 %v853
  %v948 = vunpack.c.h.b16 %v853
  %v949 = vunpack.c.l.b16 %v854
  %v950 = vunpack.c.h.b16 %v854
  %v951 = vpack.c.b16 %v887, %v887
  %v952 = vpack.c.b16 %v888, %v888
  %v953 = vpack.c.b16 %v889, %v889
  %v954 = vpack.c.b16 %v890, %v890
  %v955 = vpack.c.b16 %v891, %v891
  %v956 = vpack.c.b16 %v892, %v892
  %v957 = vpack.c.b16 %v893, %v893
  %v958 = vpack.c.b16 %v894, %v894
  %v959 = vpack.c.b16 %v895, %v895
  %v960 = vpack.c.b16 %v896, %v896
  %v961 = vpack.c.b16 %v897, %v897
  %v962 = vpack.c.b16 %v898, %v898
  %v963 = vpack.c.b16 %v899, %v899
  %v964 = vpack.c.b16 %v900, %v900
  %v965 = vpack.c.b16 %v901, %v901
  %v966 = vpack.c.b16 %v902, %v902
  %v967 = vpack.c.b16 %v903, %v903
  %v968 = vpack.c.b16 %v904, %v904
  %v969 = vpack.c.b16 %v905, %v905
  %v970 = vpack.c.b16 %v906, %v906
  %v971 = vpack.c.b16 %v907, %v907
  %v972 = vpack.c.b16 %v908, %v908
  %v973 = vpack.c.b16 %v909, %v909
  %v974 = vpack.c.b16 %v910, %v910
  %v975 = vpack.c.b16 %v911, %v911
  %v976 = vpack.c.b16 %v912, %v912
  %v977 = vpack.c.b16 %v913, %v913
  %v978 = vpack.c.b16 %v914, %v914
  %v979 = vpack.c.b16 %v915, %v915
  %v980 = vpack.c.b16 %v916, %v916
  %v981 = vpack.c.b16 %v917, %v917
  %v982 = vpack.c.b16 %v918, %v918
  %v983 = vpack.c.b16 %v919, %v919
  %v984 = vpack.c.b16 %v920, %v920
  %v985 = vpack.c.b16 %v921, %v921
  %v986 = vpack.c.b16 %v922, %v922
  %v987 = vpack.c.b16 %v923, %v923
  %v988 = vpack.c.b16 %v924, %v924
  %v989 = vpack.c.b16 %v925, %v925
  %v990 = vpack.c.b16 %v926, %v926
  %v991 = vpack.c.b16 %v927, %v927
  %v992 = vpack.c.b16 %v928, %v928
  %v993 = vpack.c.b16 %v929, %v929
  %v994 = vpack.c.b16 %v930, %v930
  %v995 = vpack.c.b16 %v931, %v931
  %v996 = vpack.c.b16 %v932, %v932
  %v997 = vpack.c.b16 %v933, %v933
  %v998 = vpack.c.b16 %v934, %v934
  %v999 = vpack.c.b16 %v935, %v935
  %v1000 = vpack.c.b16 %v936, %v936
  %v1001 = vpack.c.b16 %v937, %v937
  %v1002 = vpack.c.b16 %v938, %v938
  %v1003 = vpack.c.b16 %v939, %v939
  %v1004 = vpack.c.b16 %v940, %v940
  %v1005 = vpack.c.b16 %v941, %v941
  %v1006 = vpack.c.b16 %v942, %v942
  %v1007 = vpack.c.b16 %v943, %v943
  %v1008 = vpack.c.b16 %v944, %v944
  %v1009 = vpack.c.b16 %v945, %v945
  %v1010 = vpack.c.b16 %v946, %v946
  %v1011 = vpack.c.b16 %v947, %v947
  %v1012 = vpack.c.b16 %v948, %v948
  %v1013 = vpack.c.b16 %v949, %v949
  %v1014 = vpack.c.b16 %v950, %v950
  %1079 = vst [vmem:[%s3] sm:$0xf] %v951
  %1080 = vst [vmem:[%s3 + $0x4] sm:$0xf] %v952
  %1081 = vst [vmem:[%s3 + $0x8] sm:$0xf] %v953
  %1082 = vst [vmem:[%s3 + $0xc] sm:$0xf] %v954
  %1083 = vst [vmem:[%s3 + $0x10] sm:$0xf] %v955
  %1084 = vst [vmem:[%s3 + $0x14] sm:$0xf] %v956
  %1085 = vst [vmem:[%s3 + $0x18] sm:$0xf] %v957
  %1086 = vst [vmem:[%s3 + $0x1c] sm:$0xf] %v958
  %1087 = vst [vmem:[%s3 + $0x20] sm:$0xf] %v959
  %1088 = vst [vmem:[%s3 + $0x24] sm:$0xf] %v960
  %1089 = vst [vmem:[%s3 + $0x28] sm:$0xf] %v961
  %1090 = vst [vmem:[%s3 + $0x2c] sm:$0xf] %v962
  %1091 = vst [vmem:[%s3 + $0x30] sm:$0xf] %v963
  %1092 = vst [vmem:[%s3 + $0x34] sm:$0xf] %v964
  %1093 = vst [vmem:[%s3 + $0x38] sm:$0xf] %v965
  %1094 = vst [vmem:[%s3 + $0x3c] sm:$0xf] %v966
  %1095 = vst [vmem:[%s3 + $0x40] sm:$0xf] %v967
  %1096 = vst [vmem:[%s3 + $0x44] sm:$0xf] %v968
  %1097 = vst [vmem:[%s3 + $0x48] sm:$0xf] %v969
  %1098 = vst [vmem:[%s3 + $0x4c] sm:$0xf] %v970
  %1099 = vst [vmem:[%s3 + $0x50] sm:$0xf] %v971
  %1100 = vst [vmem:[%s3 + $0x54] sm:$0xf] %v972
  %1101 = vst [vmem:[%s3 + $0x58] sm:$0xf] %v973
  %1102 = vst [vmem:[%s3 + $0x5c] sm:$0xf] %v974
  %1103 = vst [vmem:[%s3 + $0x60] sm:$0xf] %v975
  %1104 = vst [vmem:[%s3 + $0x64] sm:$0xf] %v976
  %1105 = vst [vmem:[%s3 + $0x68] sm:$0xf] %v977
  %1106 = vst [vmem:[%s3 + $0x6c] sm:$0xf] %v978
  %1107 = vst [vmem:[%s3 + $0x70] sm:$0xf] %v979
  %1108 = vst [vmem:[%s3 + $0x74] sm:$0xf] %v980
  %1109 = vst [vmem:[%s3 + $0x78] sm:$0xf] %v981
  %1110 = vst [vmem:[%s3 + $0x7c] sm:$0xf] %v982
  %1111 = vst [vmem:[%s3 + $0x80] sm:$0xf] %v983
  %1112 = vst [vmem:[%s3 + $0x84] sm:$0xf] %v984
  %1113 = vst [vmem:[%s3 + $0x88] sm:$0xf] %v985
  %1114 = vst [vmem:[%s3 + $0x8c] sm:$0xf] %v986
  %1115 = vst [vmem:[%s3 + $0x90] sm:$0xf] %v987
  %1116 = vst [vmem:[%s3 + $0x94] sm:$0xf] %v988
  %1117 = vst [vmem:[%s3 + $0x98] sm:$0xf] %v989
  %1118 = vst [vmem:[%s3 + $0x9c] sm:$0xf] %v990
  %1119 = vst [vmem:[%s3 + $0xa0] sm:$0xf] %v991
  %1120 = vst [vmem:[%s3 + $0xa4] sm:$0xf] %v992
  %1121 = vst [vmem:[%s3 + $0xa8] sm:$0xf] %v993
  %1122 = vst [vmem:[%s3 + $0xac] sm:$0xf] %v994
  %1123 = vst [vmem:[%s3 + $0xb0] sm:$0xf] %v995
  %1124 = vst [vmem:[%s3 + $0xb4] sm:$0xf] %v996
  %1125 = vst [vmem:[%s3 + $0xb8] sm:$0xf] %v997
  %1126 = vst [vmem:[%s3 + $0xbc] sm:$0xf] %v998
  %1127 = vst [vmem:[%s3 + $0xc0] sm:$0xf] %v999
  %1128 = vst [vmem:[%s3 + $0xc4] sm:$0xf] %v1000
  %1129 = vst [vmem:[%s3 + $0xc8] sm:$0xf] %v1001
  %1130 = vst [vmem:[%s3 + $0xcc] sm:$0xf] %v1002
  %1131 = vst [vmem:[%s3 + $0xd0] sm:$0xf] %v1003
  %1132 = vst [vmem:[%s3 + $0xd4] sm:$0xf] %v1004
  %1133 = vst [vmem:[%s3 + $0xd8] sm:$0xf] %v1005
  %1134 = vst [vmem:[%s3 + $0xdc] sm:$0xf] %v1006
  %1135 = vst [vmem:[%s3 + $0xe0] sm:$0xf] %v1007
  %1136 = vst [vmem:[%s3 + $0xe4] sm:$0xf] %v1008
  %1137 = vst [vmem:[%s3 + $0xe8] sm:$0xf] %v1009
  %1138 = vst [vmem:[%s3 + $0xec] sm:$0xf] %v1010
  %1139 = vst [vmem:[%s3 + $0xf0] sm:$0xf] %v1011
  %1140 = vst [vmem:[%s3 + $0xf4] sm:$0xf] %v1012
  %1141 = vst [vmem:[%s3 + $0xf8] sm:$0xf] %v1013
  %1142 = vst [vmem:[%s3 + $0xfc] sm:$0xf] %v1014
  // Predicated region
  $region14: #{discriminator_forward.6} parent=0 // pred_check
    _
  $region15: #{discriminator_forward.6} parent=0 // pred_check_branch
    %1144 = sbr.rel (0) target = $region17
  $region16: #{discriminator_forward.6} parent=0 // pred_region
    _
  $region17: #{discriminator_forward.6} parent=0 // pred_fallthru
    _
  // Predicated region
  $region18: #{discriminator_forward.6} parent=0 // pred_check
    _
  $region19: #{discriminator_forward.6} parent=0 // pred_check_branch
    %1146 = sbr.rel (0) target = $region21
  $region20: #{discriminator_forward.6} parent=0 // pred_region
    _
  $region21: #{discriminator_forward.6} parent=0 // pred_fallthru
    _

// kernel: discriminator_forward.7
$region0: #{discriminator_forward.7}
  #allocation0 [shape = 'u32[]', space=smem, size = 0x4, offset = 0x4, fixed_abs, tag = 'smem constant byte address 0x4 - core index']
  #allocation1 [shape = 'u32[144,128]{1,0:T(1,128)}', space=vmem, size = 0x12000, scoped, tag = 'internal scratch']
  %s0 = inlined_call_operand.vmem [shape: bf16[128,256], index: 0, kind: input, shape index: {}]
  %s1 = inlined_call_operand.vmem [shape: bf16[256,128], index: 1, kind: input, shape index: {}]
  %s2 = inlined_call_operand.vmem [shape: f32[1,128], index: 2, kind: input, shape index: {}]
  %s3 = inlined_call_operand.vmem [shape: bf16[128,128], index: 3, kind: output, shape index: {}]
  %s4 = sld [smem:[#allocation0]]
  $region22: #{discriminator_forward.7} parent=0
    _
  %s6 = ssub.s32 1, %s4
  %s7 = scalar_select 0, %s6, %s4
  // Predicated region
  $region2: #{discriminator_forward.7} parent=0 // pred_check
    _
  $region3: #{discriminator_forward.7} parent=0 // pred_check_branch
    %9 = sbr.rel (0) target = $region5
  $region4: #{discriminator_forward.7} parent=0 // pred_region
    _
  $region5: #{discriminator_forward.7} parent=0 // pred_fallthru
    _
  // Predicated region
  $region6: #{discriminator_forward.7} parent=0 // pred_check
    _
  $region7: #{discriminator_forward.7} parent=0 // pred_check_branch
    %11 = sbr.rel (0) target = $region9
  $region8: #{discriminator_forward.7} parent=0 // pred_region
    _
  $region9: #{discriminator_forward.7} parent=0 // pred_fallthru
    _
  // Predicated region
  $region10: #{discriminator_forward.7} parent=0 // pred_check
    _
  $region11: #{discriminator_forward.7} parent=0 // pred_check_branch
    %13 = sbr.rel (0) target = $region13
  $region12: #{discriminator_forward.7} parent=0 // pred_region
    _
  $region13: #{discriminator_forward.7} parent=0 // pred_fallthru
    _
  %v15 = vld [vmem:[%s0] sm:$0xff]
  %v16 = vld [vmem:[%s0 + $0x8] sm:$0xff]
  %v17 = vld [vmem:[%s0 + $0x10] sm:$0xff]
  %v18 = vld [vmem:[%s0 + $0x18] sm:$0xff]
  %v19 = vld [vmem:[%s0 + $0x20] sm:$0xff]
  %v20 = vld [vmem:[%s0 + $0x28] sm:$0xff]
  %v21 = vld [vmem:[%s0 + $0x30] sm:$0xff]
  %v22 = vld [vmem:[%s0 + $0x38] sm:$0xff]
  %v23 = vld [vmem:[%s0 + $0x40] sm:$0xff]
  %v24 = vld [vmem:[%s0 + $0x48] sm:$0xff]
  %v25 = vld [vmem:[%s0 + $0x50] sm:$0xff]
  %v26 = vld [vmem:[%s0 + $0x58] sm:$0xff]
  %v27 = vld [vmem:[%s0 + $0x60] sm:$0xff]
  %v28 = vld [vmem:[%s0 + $0x68] sm:$0xff]
  %v29 = vld [vmem:[%s0 + $0x70] sm:$0xff]
  %v30 = vld [vmem:[%s0 + $0x78] sm:$0xff]
  %v31 = vld [vmem:[%s1] sm:$0xf]
  %v32 = vld [vmem:[%s1 + $0x4] sm:$0xf]
  %v33 = vld [vmem:[%s1 + $0x8] sm:$0xf]
  %v34 = vld [vmem:[%s1 + $0xc] sm:$0xf]
  %v35 = vld [vmem:[%s1 + $0x10] sm:$0xf]
  %v36 = vld [vmem:[%s1 + $0x14] sm:$0xf]
  %v37 = vld [vmem:[%s1 + $0x18] sm:$0xf]
  %v38 = vld [vmem:[%s1 + $0x1c] sm:$0xf]
  %v39 = vld [vmem:[%s1 + $0x20] sm:$0xf]
  %v40 = vld [vmem:[%s1 + $0x24] sm:$0xf]
  %v41 = vld [vmem:[%s1 + $0x28] sm:$0xf]
  %v42 = vld [vmem:[%s1 + $0x2c] sm:$0xf]
  %v43 = vld [vmem:[%s1 + $0x30] sm:$0xf]
  %v44 = vld [vmem:[%s1 + $0x34] sm:$0xf]
  %v45 = vld [vmem:[%s1 + $0x38] sm:$0xf]
  %v46 = vld [vmem:[%s1 + $0x3c] sm:$0xf]
  %v47 = vld [vmem:[%s1 + $0x40] sm:$0xf]
  %v48 = vld [vmem:[%s1 + $0x44] sm:$0xf]
  %v49 = vld [vmem:[%s1 + $0x48] sm:$0xf]
  %v50 = vld [vmem:[%s1 + $0x4c] sm:$0xf]
  %v51 = vld [vmem:[%s1 + $0x50] sm:$0xf]
  %v52 = vld [vmem:[%s1 + $0x54] sm:$0xf]
  %v53 = vld [vmem:[%s1 + $0x58] sm:$0xf]
  %v54 = vld [vmem:[%s1 + $0x5c] sm:$0xf]
  %v55 = vld [vmem:[%s1 + $0x60] sm:$0xf]
  %v56 = vld [vmem:[%s1 + $0x64] sm:$0xf]
  %v57 = vld [vmem:[%s1 + $0x68] sm:$0xf]
  %v58 = vld [vmem:[%s1 + $0x6c] sm:$0xf]
  %v59 = vld [vmem:[%s1 + $0x70] sm:$0xf]
  %v60 = vld [vmem:[%s1 + $0x74] sm:$0xf]
  %v61 = vld [vmem:[%s1 + $0x78] sm:$0xf]
  %v62 = vld [vmem:[%s1 + $0x7c] sm:$0xf]
  %v63 = vld [vmem:[%s2] sm:$0x1]
  %v65 = vlaneseq
  %v66 = vshrl.u32 %v65, 7
  %v67 = vsub.s32 0, %v66
  %v68 = vrot.slane %v63, %v67
  %v86 = vunpack.c.l.b16 %v15
  %v87 = vunpack.c.h.b16 %v15
  %v88 = vunpack.c.l.b16 %v16
  %v89 = vunpack.c.h.b16 %v16
  %v90 = vunpack.c.l.b16 %v17
  %v91 = vunpack.c.h.b16 %v17
  %v92 = vunpack.c.l.b16 %v18
  %v93 = vunpack.c.h.b16 %v18
  %v94 = vunpack.c.l.b16 %v19
  %v95 = vunpack.c.h.b16 %v19
  %v96 = vunpack.c.l.b16 %v20
  %v97 = vunpack.c.h.b16 %v20
  %v98 = vunpack.c.l.b16 %v21
  %v99 = vunpack.c.h.b16 %v21
  %v100 = vunpack.c.l.b16 %v22
  %v101 = vunpack.c.h.b16 %v22
  %v102 = vunpack.c.l.b16 %v23
  %v103 = vunpack.c.h.b16 %v23
  %v104 = vunpack.c.l.b16 %v24
  %v105 = vunpack.c.h.b16 %v24
  %v106 = vunpack.c.l.b16 %v25
  %v107 = vunpack.c.h.b16 %v25
  %v108 = vunpack.c.l.b16 %v26
  %v109 = vunpack.c.h.b16 %v26
  %v110 = vunpack.c.l.b16 %v27
  %v111 = vunpack.c.h.b16 %v27
  %v112 = vunpack.c.l.b16 %v28
  %v113 = vunpack.c.h.b16 %v28
  %v114 = vunpack.c.l.b16 %v29
  %v115 = vunpack.c.h.b16 %v29
  %v116 = vunpack.c.l.b16 %v30
  %v117 = vunpack.c.h.b16 %v30
  %v118 = vpack.c.b16 %v88, %v86
  %v119 = vpack.c.b16 %v89, %v87
  %v120 = vpack.c.b16 %v92, %v90
  %v121 = vpack.c.b16 %v93, %v91
  %v122 = vpack.c.b16 %v96, %v94
  %v123 = vpack.c.b16 %v97, %v95
  %v124 = vpack.c.b16 %v100, %v98
  %v125 = vpack.c.b16 %v101, %v99
  %v126 = vpack.c.b16 %v104, %v102
  %v127 = vpack.c.b16 %v105, %v103
  %v128 = vpack.c.b16 %v108, %v106
  %v129 = vpack.c.b16 %v109, %v107
  %v130 = vpack.c.b16 %v112, %v110
  %v131 = vpack.c.b16 %v113, %v111
  %v132 = vpack.c.b16 %v116, %v114
  %v133 = vpack.c.b16 %v117, %v115
  %v182 = vunpack.c.l.b16 %v31
  %v183 = vunpack.c.l.b16 %v32
  %v184 = vunpack.c.l.b16 %v33
  %v185 = vunpack.c.l.b16 %v34
  %v186 = vunpack.c.l.b16 %v35
  %v187 = vunpack.c.l.b16 %v36
  %v188 = vunpack.c.l.b16 %v37
  %v189 = vunpack.c.l.b16 %v38
  %v190 = vunpack.c.l.b16 %v39
  %v191 = vunpack.c.l.b16 %v40
  %v192 = vunpack.c.l.b16 %v41
  %v193 = vunpack.c.l.b16 %v42
  %v194 = vunpack.c.l.b16 %v43
  %v195 = vunpack.c.l.b16 %v44
  %v196 = vunpack.c.l.b16 %v45
  %v197 = vunpack.c.l.b16 %v46
  %v198 = vunpack.c.l.b16 %v47
  %v199 = vunpack.c.l.b16 %v48
  %v200 = vunpack.c.l.b16 %v49
  %v201 = vunpack.c.l.b16 %v50
  %v202 = vunpack.c.l.b16 %v51
  %v203 = vunpack.c.l.b16 %v52
  %v204 = vunpack.c.l.b16 %v53
  %v205 = vunpack.c.l.b16 %v54
  %v206 = vunpack.c.l.b16 %v55
  %v207 = vunpack.c.l.b16 %v56
  %v208 = vunpack.c.l.b16 %v57
  %v209 = vunpack.c.l.b16 %v58
  %v210 = vunpack.c.l.b16 %v59
  %v211 = vunpack.c.l.b16 %v60
  %v212 = vunpack.c.l.b16 %v61
  %v213 = vunpack.c.l.b16 %v62
  %v214 = vpack.c.b16 %v183, %v182
  %v215 = vpack.c.b16 %v185, %v184
  %v216 = vpack.c.b16 %v187, %v186
  %v217 = vpack.c.b16 %v189, %v188
  %v218 = vpack.c.b16 %v191, %v190
  %v219 = vpack.c.b16 %v193, %v192
  %v220 = vpack.c.b16 %v195, %v194
  %v221 = vpack.c.b16 %v197, %v196
  %v222 = vpack.c.b16 %v199, %v198
  %v223 = vpack.c.b16 %v201, %v200
  %v224 = vpack.c.b16 %v203, %v202
  %v225 = vpack.c.b16 %v205, %v204
  %v226 = vpack.c.b16 %v207, %v206
  %v227 = vpack.c.b16 %v209, %v208
  %v228 = vpack.c.b16 %v211, %v210
  %v229 = vpack.c.b16 %v213, %v212
  %246 = vmatprep.subr.bf16.mxu0 0
  %247 = vmatpush1.bf16.msra.mxu0 %v214
  %248 = vmatprep.subr.bf16.mxu0 0
  %249 = vmatpush1.bf16.msra.mxu0 %v215
  %250 = vmatprep.subr.bf16.mxu0 0
  %251 = vmatpush1.bf16.msra.mxu0 %v216
  %252 = vmatprep.subr.bf16.mxu0 0
  %253 = vmatpush1.bf16.msra.mxu0 %v217
  %254 = vmatprep.subr.bf16.mxu0 0
  %255 = vmatpush1.bf16.msra.mxu0 %v218
  %256 = vmatprep.subr.bf16.mxu0 0
  %257 = vmatpush1.bf16.msra.mxu0 %v219
  %258 = vmatprep.subr.bf16.mxu0 0
  %259 = vmatpush1.bf16.msra.mxu0 %v220
  %260 = vmatprep.subr.bf16.mxu0 0
  %261 = vmatpush1.bf16.msra.mxu0 %v221
  %262 = vmatprep.subr.bf16.mxu0 0
  %263 = vmatpush1.bf16.msra.mxu0 %v222
  %264 = vmatprep.subr.bf16.mxu0 0
  %265 = vmatpush1.bf16.msra.mxu0 %v223
  %266 = vmatprep.subr.bf16.mxu0 0
  %267 = vmatpush1.bf16.msra.mxu0 %v224
  %268 = vmatprep.subr.bf16.mxu0 0
  %269 = vmatpush1.bf16.msra.mxu0 %v225
  %270 = vmatprep.subr.bf16.mxu0 0
  %271 = vmatpush1.bf16.msra.mxu0 %v226
  %272 = vmatprep.subr.bf16.mxu0 0
  %273 = vmatpush1.bf16.msra.mxu0 %v227
  %274 = vmatprep.subr.bf16.mxu0 0
  %275 = vmatpush1.bf16.msra.mxu0 %v228
  %276 = vmatprep.subr.bf16.mxu0 0
  %277 = vmatpush1.bf16.msra.mxu0 %v229
  %278 = vmatprep.mubr.bf16.mxu0 %v119
  %279 = vmatmul.mubr.bf16.gmra.mrb[0].mxu0 %v118
  %v280 = vpop.f32.mrb[0].mxu0
  %v281 = vadd.f32 %v68, %v280
  %v282 = vpop.f32.mrb[0].mxu0
  %v283 = vpop.f32.mrb[0].mxu0
  %v284 = vadd.f32 %v68, %v283
  %v285 = vpop.f32.mrb[0].mxu0
  %286 = vmatprep.mubr.bf16.mxu0 %v121
  %287 = vmatmul.mubr.bf16.gmra.mrb[0].mxu0 %v120
  %v288 = vpop.f32.mrb[0].mxu0
  %v289 = vadd.f32 %v68, %v288
  %v290 = vpop.f32.mrb[0].mxu0
  %v291 = vpop.f32.mrb[0].mxu0
  %v292 = vadd.f32 %v68, %v291
  %v293 = vpop.f32.mrb[0].mxu0
  %294 = vmatprep.mubr.bf16.mxu0 %v123
  %295 = vmatmul.mubr.bf16.gmra.mrb[0].mxu0 %v122
  %v296 = vpop.f32.mrb[0].mxu0
  %v297 = vadd.f32 %v68, %v296
  %v298 = vpop.f32.mrb[0].mxu0
  %v299 = vpop.f32.mrb[0].mxu0
  %v300 = vadd.f32 %v68, %v299
  %v301 = vpop.f32.mrb[0].mxu0
  %302 = vmatprep.mubr.bf16.mxu0 %v125
  %303 = vmatmul.mubr.bf16.gmra.mrb[0].mxu0 %v124
  %v304 = vpop.f32.mrb[0].mxu0
  %v305 = vadd.f32 %v68, %v304
  %v306 = vpop.f32.mrb[0].mxu0
  %v307 = vpop.f32.mrb[0].mxu0
  %v308 = vadd.f32 %v68, %v307
  %v309 = vpop.f32.mrb[0].mxu0
  %310 = vmatprep.mubr.bf16.mxu0 %v127
  %311 = vmatmul.mubr.bf16.gmra.mrb[0].mxu0 %v126
  %v312 = vpop.f32.mrb[0].mxu0
  %v313 = vadd.f32 %v68, %v312
  %v314 = vpop.f32.mrb[0].mxu0
  %v315 = vpop.f32.mrb[0].mxu0
  %v316 = vadd.f32 %v68, %v315
  %v317 = vpop.f32.mrb[0].mxu0
  %318 = vmatprep.mubr.bf16.mxu0 %v129
  %319 = vmatmul.mubr.bf16.gmra.mrb[0].mxu0 %v128
  %v320 = vpop.f32.mrb[0].mxu0
  %v321 = vadd.f32 %v68, %v320
  %v322 = vpop.f32.mrb[0].mxu0
  %v323 = vpop.f32.mrb[0].mxu0
  %v324 = vadd.f32 %v68, %v323
  %v325 = vpop.f32.mrb[0].mxu0
  %326 = vmatprep.mubr.bf16.mxu0 %v131
  %327 = vmatmul.mubr.bf16.gmra.mrb[0].mxu0 %v130
  %v328 = vpop.f32.mrb[0].mxu0
  %v329 = vadd.f32 %v68, %v328
  %v330 = vpop.f32.mrb[0].mxu0
  %v331 = vpop.f32.mrb[0].mxu0
  %v332 = vadd.f32 %v68, %v331
  %v333 = vpop.f32.mrb[0].mxu0
  %334 = vmatprep.mubr.bf16.mxu0 %v133
  %335 = vmatmul.mubr.bf16.gmra.mrb[0].mxu0 %v132
  %v336 = vpop.f32.mrb[0].mxu0
  %v337 = vadd.f32 %v68, %v336
  %v338 = vpop.f32.mrb[0].mxu0
  %v339 = vpop.f32.mrb[0].mxu0
  %v340 = vadd.f32 %v68, %v339
  %v341 = vpop.f32.mrb[0].mxu0
  %342 = vdwg.mxu0
  %vm343 = vcmp.ge.f32.partialorder %v281, 0.0
  %vm344 = vcmp.ge.f32.partialorder %v284, 0.0
  %vm345 = vcmp.ge.f32.partialorder %v289, 0.0
  %vm346 = vcmp.ge.f32.partialorder %v292, 0.0
  %vm347 = vcmp.ge.f32.partialorder %v297, 0.0
  %vm348 = vcmp.ge.f32.partialorder %v300, 0.0
  %vm349 = vcmp.ge.f32.partialorder %v305, 0.0
  %vm350 = vcmp.ge.f32.partialorder %v308, 0.0
  %vm351 = vcmp.ge.f32.partialorder %v313, 0.0
  %vm352 = vcmp.ge.f32.partialorder %v316, 0.0
  %vm353 = vcmp.ge.f32.partialorder %v321, 0.0
  %vm354 = vcmp.ge.f32.partialorder %v324, 0.0
  %vm355 = vcmp.ge.f32.partialorder %v329, 0.0
  %vm356 = vcmp.ge.f32.partialorder %v332, 0.0
  %vm357 = vcmp.ge.f32.partialorder %v337, 0.0
  %vm358 = vcmp.ge.f32.partialorder %v340, 0.0
  %v359 = vmul.f32 %v281, 0.2
  %v360 = vmul.f32 %v284, 0.2
  %v361 = vmul.f32 %v289, 0.2
  %v362 = vmul.f32 %v292, 0.2
  %v363 = vmul.f32 %v297, 0.2
  %v364 = vmul.f32 %v300, 0.2
  %v365 = vmul.f32 %v305, 0.2
  %v366 = vmul.f32 %v308, 0.2
  %v367 = vmul.f32 %v313, 0.2
  %v368 = vmul.f32 %v316, 0.2
  %v369 = vmul.f32 %v321, 0.2
  %v370 = vmul.f32 %v324, 0.2
  %v371 = vmul.f32 %v329, 0.2
  %v372 = vmul.f32 %v332, 0.2
  %v373 = vmul.f32 %v337, 0.2
  %v374 = vmul.f32 %v340, 0.2
  %v375 = vsel %vm343, %v281, %v359
  %v376 = vsel %vm344, %v284, %v360
  %v377 = vsel %vm345, %v289, %v361
  %v378 = vsel %vm346, %v292, %v362
  %v379 = vsel %vm347, %v297, %v363
  %v380 = vsel %vm348, %v300, %v364
  %v381 = vsel %vm349, %v305, %v365
  %v382 = vsel %vm350, %v308, %v366
  %v383 = vsel %vm351, %v313, %v367
  %v384 = vsel %vm352, %v316, %v368
  %v385 = vsel %vm353, %v321, %v369
  %v386 = vsel %vm354, %v324, %v370
  %v387 = vsel %vm355, %v329, %v371
  %v388 = vsel %vm356, %v332, %v372
  %v389 = vsel %vm357, %v337, %v373
  %v390 = vsel %vm358, %v340, %v374
  %v391 = vpack.c.bf16 %v376, %v375
  %v392 = vpack.c.bf16 %v378, %v377
  %v393 = vpack.c.bf16 %v380, %v379
  %v394 = vpack.c.bf16 %v382, %v381
  %v395 = vpack.c.bf16 %v384, %v383
  %v396 = vpack.c.bf16 %v386, %v385
  %v397 = vpack.c.bf16 %v388, %v387
  %v398 = vpack.c.bf16 %v390, %v389
  %v407 = vunpack.c.l.b16 %v391
  %v408 = vunpack.c.h.b16 %v391
  %v409 = vunpack.c.l.b16 %v392
  %v410 = vunpack.c.h.b16 %v392
  %v411 = vunpack.c.l.b16 %v393
  %v412 = vunpack.c.h.b16 %v393
  %v413 = vunpack.c.l.b16 %v394
  %v414 = vunpack.c.h.b16 %v394
  %v415 = vunpack.c.l.b16 %v395
  %v416 = vunpack.c.h.b16 %v395
  %v417 = vunpack.c.l.b16 %v396
  %v418 = vunpack.c.h.b16 %v396
  %v419 = vunpack.c.l.b16 %v397
  %v420 = vunpack.c.h.b16 %v397
  %v421 = vunpack.c.l.b16 %v398
  %v422 = vunpack.c.h.b16 %v398
  %v423 = vpack.c.b16 %v407, %v407
  %v424 = vpack.c.b16 %v408, %v408
  %v425 = vpack.c.b16 %v409, %v409
  %v426 = vpack.c.b16 %v410, %v410
  %v427 = vpack.c.b16 %v411, %v411
  %v428 = vpack.c.b16 %v412, %v412
  %v429 = vpack.c.b16 %v413, %v413
  %v430 = vpack.c.b16 %v414, %v414
  %v431 = vpack.c.b16 %v415, %v415
  %v432 = vpack.c.b16 %v416, %v416
  %v433 = vpack.c.b16 %v417, %v417
  %v434 = vpack.c.b16 %v418, %v418
  %v435 = vpack.c.b16 %v419, %v419
  %v436 = vpack.c.b16 %v420, %v420
  %v437 = vpack.c.b16 %v421, %v421
  %v438 = vpack.c.b16 %v422, %v422
  %455 = vst [vmem:[%s3] sm:$0xf] %v423
  %456 = vst [vmem:[%s3 + $0x4] sm:$0xf] %v424
  %457 = vst [vmem:[%s3 + $0x8] sm:$0xf] %v425
  %458 = vst [vmem:[%s3 + $0xc] sm:$0xf] %v426
  %459 = vst [vmem:[%s3 + $0x10] sm:$0xf] %v427
  %460 = vst [vmem:[%s3 + $0x14] sm:$0xf] %v428
  %461 = vst [vmem:[%s3 + $0x18] sm:$0xf] %v429
  %462 = vst [vmem:[%s3 + $0x1c] sm:$0xf] %v430
  %463 = vst [vmem:[%s3 + $0x20] sm:$0xf] %v431
  %464 = vst [vmem:[%s3 + $0x24] sm:$0xf] %v432
  %465 = vst [vmem:[%s3 + $0x28] sm:$0xf] %v433
  %466 = vst [vmem:[%s3 + $0x2c] sm:$0xf] %v434
  %467 = vst [vmem:[%s3 + $0x30] sm:$0xf] %v435
  %468 = vst [vmem:[%s3 + $0x34] sm:$0xf] %v436
  %469 = vst [vmem:[%s3 + $0x38] sm:$0xf] %v437
  %470 = vst [vmem:[%s3 + $0x3c] sm:$0xf] %v438
  // Predicated region
  $region14: #{discriminator_forward.7} parent=0 // pred_check
    _
  $region15: #{discriminator_forward.7} parent=0 // pred_check_branch
    %472 = sbr.rel (0) target = $region17
  $region16: #{discriminator_forward.7} parent=0 // pred_region
    _
  $region17: #{discriminator_forward.7} parent=0 // pred_fallthru
    _
  // Predicated region
  $region18: #{discriminator_forward.7} parent=0 // pred_check
    _
  $region19: #{discriminator_forward.7} parent=0 // pred_check_branch
    %474 = sbr.rel (0) target = $region21
  $region20: #{discriminator_forward.7} parent=0 // pred_region
    _
  $region21: #{discriminator_forward.7} parent=0 // pred_fallthru
    _

// kernel: discriminator_forward.8
$region0: #{discriminator_forward.8}
  #allocation0 [shape = 'u32[]', space=smem, size = 0x4, offset = 0x4, fixed_abs, tag = 'smem constant byte address 0x4 - core index']
  #allocation1 [shape = 'u32[144,128]{1,0:T(1,128)}', space=vmem, size = 0x12000, scoped, tag = 'internal scratch']
  %s0 = inlined_call_operand.vmem [shape: bf16[32,512], index: 0, kind: input, shape index: {}]
  %s1 = inlined_call_operand.vmem [shape: bf16[512,128], index: 1, kind: input, shape index: {}]
  %s2 = inlined_call_operand.vmem [shape: f32[1,128], index: 2, kind: input, shape index: {}]
  %s3 = inlined_call_operand.vmem [shape: bf16[32,128], index: 3, kind: output, shape index: {}]
  %s4 = sld [smem:[#allocation0]]
  $region22: #{discriminator_forward.8} parent=0
    _
  %s6 = ssub.s32 1, %s4
  %s7 = scalar_select 0, %s6, %s4
  // Predicated region
  $region2: #{discriminator_forward.8} parent=0 // pred_check
    _
  $region3: #{discriminator_forward.8} parent=0 // pred_check_branch
    %9 = sbr.rel (0) target = $region5
  $region4: #{discriminator_forward.8} parent=0 // pred_region
    _
  $region5: #{discriminator_forward.8} parent=0 // pred_fallthru
    _
  // Predicated region
  $region6: #{discriminator_forward.8} parent=0 // pred_check
    _
  $region7: #{discriminator_forward.8} parent=0 // pred_check_branch
    %11 = sbr.rel (0) target = $region9
  $region8: #{discriminator_forward.8} parent=0 // pred_region
    _
  $region9: #{discriminator_forward.8} parent=0 // pred_fallthru
    _
  // Predicated region
  $region10: #{discriminator_forward.8} parent=0 // pred_check
    _
  $region11: #{discriminator_forward.8} parent=0 // pred_check_branch
    %13 = sbr.rel (0) target = $region13
  $region12: #{discriminator_forward.8} parent=0 // pred_region
    _
  $region13: #{discriminator_forward.8} parent=0 // pred_fallthru
    _
  %v15 = vld [vmem:[%s0] sm:$0xff]
  %v16 = vld [vmem:[%s0 + $0x8] sm:$0xff]
  %v17 = vld [vmem:[%s0 + $0x10] sm:$0xff]
  %v18 = vld [vmem:[%s0 + $0x18] sm:$0xff]
  %v19 = vld [vmem:[%s0 + $0x20] sm:$0xff]
  %v20 = vld [vmem:[%s0 + $0x28] sm:$0xff]
  %v21 = vld [vmem:[%s0 + $0x30] sm:$0xff]
  %v22 = vld [vmem:[%s0 + $0x38] sm:$0xff]
  %v23 = vld [vmem:[%s1] sm:$0xf]
  %v24 = vld [vmem:[%s1 + $0x4] sm:$0xf]
  %v25 = vld [vmem:[%s1 + $0x8] sm:$0xf]
  %v26 = vld [vmem:[%s1 + $0xc] sm:$0xf]
  %v27 = vld [vmem:[%s1 + $0x10] sm:$0xf]
  %v28 = vld [vmem:[%s1 + $0x14] sm:$0xf]
  %v29 = vld [vmem:[%s1 + $0x18] sm:$0xf]
  %v30 = vld [vmem:[%s1 + $0x1c] sm:$0xf]
  %v31 = vld [vmem:[%s1 + $0x20] sm:$0xf]
  %v32 = vld [vmem:[%s1 + $0x24] sm:$0xf]
  %v33 = vld [vmem:[%s1 + $0x28] sm:$0xf]
  %v34 = vld [vmem:[%s1 + $0x2c] sm:$0xf]
  %v35 = vld [vmem:[%s1 + $0x30] sm:$0xf]
  %v36 = vld [vmem:[%s1 + $0x34] sm:$0xf]
  %v37 = vld [vmem:[%s1 + $0x38] sm:$0xf]
  %v38 = vld [vmem:[%s1 + $0x3c] sm:$0xf]
  %v39 = vld [vmem:[%s1 + $0x40] sm:$0xf]
  %v40 = vld [vmem:[%s1 + $0x44] sm:$0xf]
  %v41 = vld [vmem:[%s1 + $0x48] sm:$0xf]
  %v42 = vld [vmem:[%s1 + $0x4c] sm:$0xf]
  %v43 = vld [vmem:[%s1 + $0x50] sm:$0xf]
  %v44 = vld [vmem:[%s1 + $0x54] sm:$0xf]
  %v45 = vld [vmem:[%s1 + $0x58] sm:$0xf]
  %v46 = vld [vmem:[%s1 + $0x5c] sm:$0xf]
  %v47 = vld [vmem:[%s1 + $0x60] sm:$0xf]
  %v48 = vld [vmem:[%s1 + $0x64] sm:$0xf]
  %v49 = vld [vmem:[%s1 + $0x68] sm:$0xf]
  %v50 = vld [vmem:[%s1 + $0x6c] sm:$0xf]
  %v51 = vld [vmem:[%s1 + $0x70] sm:$0xf]
  %v52 = vld [vmem:[%s1 + $0x74] sm:$0xf]
  %v53 = vld [vmem:[%s1 + $0x78] sm:$0xf]
  %v54 = vld [vmem:[%s1 + $0x7c] sm:$0xf]
  %v55 = vld [vmem:[%s1 + $0x80] sm:$0xf]
  %v56 = vld [vmem:[%s1 + $0x84] sm:$0xf]
  %v57 = vld [vmem:[%s1 + $0x88] sm:$0xf]
  %v58 = vld [vmem:[%s1 + $0x8c] sm:$0xf]
  %v59 = vld [vmem:[%s1 + $0x90] sm:$0xf]
  %v60 = vld [vmem:[%s1 + $0x94] sm:$0xf]
  %v61 = vld [vmem:[%s1 + $0x98] sm:$0xf]
  %v62 = vld [vmem:[%s1 + $0x9c] sm:$0xf]
  %v63 = vld [vmem:[%s1 + $0xa0] sm:$0xf]
  %v64 = vld [vmem:[%s1 + $0xa4] sm:$0xf]
  %v65 = vld [vmem:[%s1 + $0xa8] sm:$0xf]
  %v66 = vld [vmem:[%s1 + $0xac] sm:$0xf]
  %v67 = vld [vmem:[%s1 + $0xb0] sm:$0xf]
  %v68 = vld [vmem:[%s1 + $0xb4] sm:$0xf]
  %v69 = vld [vmem:[%s1 + $0xb8] sm:$0xf]
  %v70 = vld [vmem:[%s1 + $0xbc] sm:$0xf]
  %v71 = vld [vmem:[%s1 + $0xc0] sm:$0xf]
  %v72 = vld [vmem:[%s1 + $0xc4] sm:$0xf]
  %v73 = vld [vmem:[%s1 + $0xc8] sm:$0xf]
  %v74 = vld [vmem:[%s1 + $0xcc] sm:$0xf]
  %v75 = vld [vmem:[%s1 + $0xd0] sm:$0xf]
  %v76 = vld [vmem:[%s1 + $0xd4] sm:$0xf]
  %v77 = vld [vmem:[%s1 + $0xd8] sm:$0xf]
  %v78 = vld [vmem:[%s1 + $0xdc] sm:$0xf]
  %v79 = vld [vmem:[%s1 + $0xe0] sm:$0xf]
  %v80 = vld [vmem:[%s1 + $0xe4] sm:$0xf]
  %v81 = vld [vmem:[%s1 + $0xe8] sm:$0xf]
  %v82 = vld [vmem:[%s1 + $0xec] sm:$0xf]
  %v83 = vld [vmem:[%s1 + $0xf0] sm:$0xf]
  %v84 = vld [vmem:[%s1 + $0xf4] sm:$0xf]
  %v85 = vld [vmem:[%s1 + $0xf8] sm:$0xf]
  %v86 = vld [vmem:[%s1 + $0xfc] sm:$0xf]
  %v87 = vld [vmem:[%s2] sm:$0x1]
  %v89 = vlaneseq
  %v90 = vshrl.u32 %v89, 7
  %v91 = vsub.s32 0, %v90
  %v92 = vrot.slane %v87, %v91
  %v102 = vunpack.c.l.b16 %v15
  %v103 = vunpack.c.h.b16 %v15
  %v104 = vunpack.c.l.b16 %v16
  %v105 = vunpack.c.h.b16 %v16
  %v106 = vunpack.c.l.b16 %v17
  %v107 = vunpack.c.h.b16 %v17
  %v108 = vunpack.c.l.b16 %v18
  %v109 = vunpack.c.h.b16 %v18
  %v110 = vunpack.c.l.b16 %v19
  %v111 = vunpack.c.h.b16 %v19
  %v112 = vunpack.c.l.b16 %v20
  %v113 = vunpack.c.h.b16 %v20
  %v114 = vunpack.c.l.b16 %v21
  %v115 = vunpack.c.h.b16 %v21
  %v116 = vunpack.c.l.b16 %v22
  %v117 = vunpack.c.h.b16 %v22
  %v118 = vpack.c.b16 %v106, %v102
  %v119 = vpack.c.b16 %v107, %v103
  %v120 = vpack.c.b16 %v108, %v104
  %v121 = vpack.c.b16 %v109, %v105
  %v122 = vpack.c.b16 %v114, %v110
  %v123 = vpack.c.b16 %v115, %v111
  %v124 = vpack.c.b16 %v116, %v112
  %v125 = vpack.c.b16 %v117, %v113
  %v198 = vunpack.c.l.b16 %v23
  %v199 = vunpack.c.l.b16 %v24
  %v200 = vunpack.c.l.b16 %v25
  %v201 = vunpack.c.l.b16 %v26
  %v202 = vunpack.c.l.b16 %v27
  %v203 = vunpack.c.l.b16 %v28
  %v204 = vunpack.c.l.b16 %v29
  %v205 = vunpack.c.l.b16 %v30
  %v206 = vunpack.c.l.b16 %v31
  %v207 = vunpack.c.l.b16 %v32
  %v208 = vunpack.c.l.b16 %v33
  %v209 = vunpack.c.l.b16 %v34
  %v210 = vunpack.c.l.b16 %v35
  %v211 = vunpack.c.l.b16 %v36
  %v212 = vunpack.c.l.b16 %v37
  %v213 = vunpack.c.l.b16 %v38
  %v214 = vunpack.c.l.b16 %v39
  %v215 = vunpack.c.l.b16 %v40
  %v216 = vunpack.c.l.b16 %v41
  %v217 = vunpack.c.l.b16 %v42
  %v218 = vunpack.c.l.b16 %v43
  %v219 = vunpack.c.l.b16 %v44
  %v220 = vunpack.c.l.b16 %v45
  %v221 = vunpack.c.l.b16 %v46
  %v222 = vunpack.c.l.b16 %v47
  %v223 = vunpack.c.l.b16 %v48
  %v224 = vunpack.c.l.b16 %v49
  %v225 = vunpack.c.l.b16 %v50
  %v226 = vunpack.c.l.b16 %v51
  %v227 = vunpack.c.l.b16 %v52
  %v228 = vunpack.c.l.b16 %v53
  %v229 = vunpack.c.l.b16 %v54
  %v230 = vunpack.c.l.b16 %v55
  %v231 = vunpack.c.l.b16 %v56
  %v232 = vunpack.c.l.b16 %v57
  %v233 = vunpack.c.l.b16 %v58
  %v234 = vunpack.c.l.b16 %v59
  %v235 = vunpack.c.l.b16 %v60
  %v236 = vunpack.c.l.b16 %v61
  %v237 = vunpack.c.l.b16 %v62
  %v238 = vunpack.c.l.b16 %v63
  %v239 = vunpack.c.l.b16 %v64
  %v240 = vunpack.c.l.b16 %v65
  %v241 = vunpack.c.l.b16 %v66
  %v242 = vunpack.c.l.b16 %v67
  %v243 = vunpack.c.l.b16 %v68
  %v244 = vunpack.c.l.b16 %v69
  %v245 = vunpack.c.l.b16 %v70
  %v246 = vunpack.c.l.b16 %v71
  %v247 = vunpack.c.l.b16 %v72
  %v248 = vunpack.c.l.b16 %v73
  %v249 = vunpack.c.l.b16 %v74
  %v250 = vunpack.c.l.b16 %v75
  %v251 = vunpack.c.l.b16 %v76
  %v252 = vunpack.c.l.b16 %v77
  %v253 = vunpack.c.l.b16 %v78
  %v254 = vunpack.c.l.b16 %v79
  %v255 = vunpack.c.l.b16 %v80
  %v256 = vunpack.c.l.b16 %v81
  %v257 = vunpack.c.l.b16 %v82
  %v258 = vunpack.c.l.b16 %v83
  %v259 = vunpack.c.l.b16 %v84
  %v260 = vunpack.c.l.b16 %v85
  %v261 = vunpack.c.l.b16 %v86
  %v262 = vpack.c.b16 %v199, %v198
  %v263 = vpack.c.b16 %v201, %v200
  %v264 = vpack.c.b16 %v203, %v202
  %v265 = vpack.c.b16 %v205, %v204
  %v266 = vpack.c.b16 %v207, %v206
  %v267 = vpack.c.b16 %v209, %v208
  %v268 = vpack.c.b16 %v211, %v210
  %v269 = vpack.c.b16 %v213, %v212
  %v270 = vpack.c.b16 %v215, %v214
  %v271 = vpack.c.b16 %v217, %v216
  %v272 = vpack.c.b16 %v219, %v218
  %v273 = vpack.c.b16 %v221, %v220
  %v274 = vpack.c.b16 %v223, %v222
  %v275 = vpack.c.b16 %v225, %v224
  %v276 = vpack.c.b16 %v227, %v226
  %v277 = vpack.c.b16 %v229, %v228
  %v278 = vpack.c.b16 %v231, %v230
  %v279 = vpack.c.b16 %v233, %v232
  %v280 = vpack.c.b16 %v235, %v234
  %v281 = vpack.c.b16 %v237, %v236
  %v282 = vpack.c.b16 %v239, %v238
  %v283 = vpack.c.b16 %v241, %v240
  %v284 = vpack.c.b16 %v243, %v242
  %v285 = vpack.c.b16 %v245, %v244
  %v286 = vpack.c.b16 %v247, %v246
  %v287 = vpack.c.b16 %v249, %v248
  %v288 = vpack.c.b16 %v251, %v250
  %v289 = vpack.c.b16 %v253, %v252
  %v290 = vpack.c.b16 %v255, %v254
  %v291 = vpack.c.b16 %v257, %v256
  %v292 = vpack.c.b16 %v259, %v258
  %v293 = vpack.c.b16 %v261, %v260
  %326 = vmatprep.subr.bf16.mxu0 0
  %327 = vmatpush1.bf16.msra.mxu0 %v262
  %328 = vmatprep.subr.bf16.mxu0 0
  %329 = vmatpush1.bf16.msra.mxu0 %v263
  %330 = vmatprep.subr.bf16.mxu0 0
  %331 = vmatpush1.bf16.msra.mxu0 %v264
  %332 = vmatprep.subr.bf16.mxu0 0
  %333 = vmatpush1.bf16.msra.mxu0 %v265
  %334 = vmatprep.subr.bf16.mxu0 0
  %335 = vmatpush1.bf16.msra.mxu0 %v266
  %336 = vmatprep.subr.bf16.mxu0 0
  %337 = vmatpush1.bf16.msra.mxu0 %v267
  %338 = vmatprep.subr.bf16.mxu0 0
  %339 = vmatpush1.bf16.msra.mxu0 %v268
  %340 = vmatprep.subr.bf16.mxu0 0
  %341 = vmatpush1.bf16.msra.mxu0 %v269
  %342 = vmatprep.subr.bf16.mxu0 0
  %343 = vmatpush1.bf16.msra.mxu0 %v270
  %344 = vmatprep.subr.bf16.mxu0 0
  %345 = vmatpush1.bf16.msra.mxu0 %v271
  %346 = vmatprep.subr.bf16.mxu0 0
  %347 = vmatpush1.bf16.msra.mxu0 %v272
  %348 = vmatprep.subr.bf16.mxu0 0
  %349 = vmatpush1.bf16.msra.mxu0 %v273
  %350 = vmatprep.subr.bf16.mxu0 0
  %351 = vmatpush1.bf16.msra.mxu0 %v274
  %352 = vmatprep.subr.bf16.mxu0 0
  %353 = vmatpush1.bf16.msra.mxu0 %v275
  %354 = vmatprep.subr.bf16.mxu0 0
  %355 = vmatpush1.bf16.msra.mxu0 %v276
  %356 = vmatprep.subr.bf16.mxu0 0
  %357 = vmatpush1.bf16.msra.mxu0 %v277
  %358 = vmatprep.mubr.bf16.mxu0 %v119
  %359 = vmatmul.mubr.bf16.gmra.mrb[0].mxu0 %v118
  %v360 = vpop.f32.mrb[0].mxu0
  %v361 = vadd.f32 %v92, %v360
  %v362 = vpop.f32.mrb[0].mxu0
  %v363 = vpop.f32.mrb[0].mxu0
  %v364 = vadd.f32 %v92, %v363
  %v365 = vpop.f32.mrb[0].mxu0
  %366 = vmatprep.mubr.bf16.mxu0 %v123
  %367 = vmatmul.mubr.bf16.gmra.mrb[0].mxu0 %v122
  %v368 = vpop.f32.mrb[0].mxu0
  %v369 = vadd.f32 %v92, %v368
  %v370 = vpop.f32.mrb[0].mxu0
  %v371 = vpop.f32.mrb[0].mxu0
  %v372 = vadd.f32 %v92, %v371
  %v373 = vpop.f32.mrb[0].mxu0
  %374 = vdwg.mxu0
  %375 = vmatprep.subr.bf16.mxu0 0
  %376 = vmatpush1.bf16.msra.mxu0 %v278
  %377 = vmatprep.subr.bf16.mxu0 0
  %378 = vmatpush1.bf16.msra.mxu0 %v279
  %379 = vmatprep.subr.bf16.mxu0 0
  %380 = vmatpush1.bf16.msra.mxu0 %v280
  %381 = vmatprep.subr.bf16.mxu0 0
  %382 = vmatpush1.bf16.msra.mxu0 %v281
  %383 = vmatprep.subr.bf16.mxu0 0
  %384 = vmatpush1.bf16.msra.mxu0 %v282
  %385 = vmatprep.subr.bf16.mxu0 0
  %386 = vmatpush1.bf16.msra.mxu0 %v283
  %387 = vmatprep.subr.bf16.mxu0 0
  %388 = vmatpush1.bf16.msra.mxu0 %v284
  %389 = vmatprep.subr.bf16.mxu0 0
  %390 = vmatpush1.bf16.msra.mxu0 %v285
  %391 = vmatprep.subr.bf16.mxu0 0
  %392 = vmatpush1.bf16.msra.mxu0 %v286
  %393 = vmatprep.subr.bf16.mxu0 0
  %394 = vmatpush1.bf16.msra.mxu0 %v287
  %395 = vmatprep.subr.bf16.mxu0 0
  %396 = vmatpush1.bf16.msra.mxu0 %v288
  %397 = vmatprep.subr.bf16.mxu0 0
  %398 = vmatpush1.bf16.msra.mxu0 %v289
  %399 = vmatprep.subr.bf16.mxu0 0
  %400 = vmatpush1.bf16.msra.mxu0 %v290
  %401 = vmatprep.subr.bf16.mxu0 0
  %402 = vmatpush1.bf16.msra.mxu0 %v291
  %403 = vmatprep.subr.bf16.mxu0 0
  %404 = vmatpush1.bf16.msra.mxu0 %v292
  %405 = vmatprep.subr.bf16.mxu0 0
  %406 = vmatpush1.bf16.msra.mxu0 %v293
  %407 = vmatprep.mubr.bf16.mxu0 %v121
  %408 = vmatmul.mubr.bf16.gmra.mrb[0].mxu0 %v120
  %v409 = vpop.f32.mrb[0].mxu0
  %v410 = vadd.f32 %v361, %v409
  %v411 = vpop.f32.mrb[0].mxu0
  %v412 = vpop.f32.mrb[0].mxu0
  %v413 = vadd.f32 %v364, %v412
  %v414 = vpop.f32.mrb[0].mxu0
  %415 = vmatprep.mubr.bf16.mxu0 %v125
  %416 = vmatmul.mubr.bf16.gmra.mrb[0].mxu0 %v124
  %v417 = vpop.f32.mrb[0].mxu0
  %v418 = vadd.f32 %v369, %v417
  %v419 = vpop.f32.mrb[0].mxu0
  %v420 = vpop.f32.mrb[0].mxu0
  %v421 = vadd.f32 %v372, %v420
  %v422 = vpop.f32.mrb[0].mxu0
  %423 = vdwg.mxu0
  %vm424 = vcmp.ge.f32.partialorder %v410, 0.0
  %vm425 = vcmp.ge.f32.partialorder %v413, 0.0
  %vm426 = vcmp.ge.f32.partialorder %v418, 0.0
  %vm427 = vcmp.ge.f32.partialorder %v421, 0.0
  %v428 = vmul.f32 %v410, 0.2
  %v429 = vmul.f32 %v413, 0.2
  %v430 = vmul.f32 %v418, 0.2
  %v431 = vmul.f32 %v421, 0.2
  %v432 = vsel %vm424, %v410, %v428
  %v433 = vsel %vm425, %v413, %v429
  %v434 = vsel %vm426, %v418, %v430
  %v435 = vsel %vm427, %v421, %v431
  %v436 = vpack.c.bf16 %v433, %v432
  %v437 = vpack.c.bf16 %v435, %v434
  %v440 = vunpack.c.l.b16 %v436
  %v441 = vunpack.c.h.b16 %v436
  %v442 = vunpack.c.l.b16 %v437
  %v443 = vunpack.c.h.b16 %v437
  %v444 = vpack.c.b16 %v440, %v440
  %v445 = vpack.c.b16 %v441, %v441
  %v446 = vpack.c.b16 %v442, %v442
  %v447 = vpack.c.b16 %v443, %v443
  %452 = vst [vmem:[%s3] sm:$0xf] %v444
  %453 = vst [vmem:[%s3 + $0x4] sm:$0xf] %v445
  %454 = vst [vmem:[%s3 + $0x8] sm:$0xf] %v446
  %455 = vst [vmem:[%s3 + $0xc] sm:$0xf] %v447
  // Predicated region
  $region14: #{discriminator_forward.8} parent=0 // pred_check
    _
  $region15: #{discriminator_forward.8} parent=0 // pred_check_branch
    %457 = sbr.rel (0) target = $region17
  $region16: #{discriminator_forward.8} parent=0 // pred_region
    _
  $region17: #{discriminator_forward.8} parent=0 // pred_fallthru
    _
  // Predicated region
  $region18: #{discriminator_forward.8} parent=0 // pred_check
    _
  $region19: #{discriminator_forward.8} parent=0 // pred_check_branch
    %459 = sbr.rel (0) target = $region21
  $region20: #{discriminator_forward.8} parent=0 // pred_region
    _
  $region21: #{discriminator_forward.8} parent=0 // pred_fallthru
    _

// kernel: discriminator_forward.9
$region0: #{discriminator_forward.9}
  #allocation0 [shape = 'u32[]', space=smem, size = 0x4, offset = 0x4, fixed_abs, tag = 'smem constant byte address 0x4 - core index']
  #allocation1 [shape = 'u32[144,128]{1,0:T(1,128)}', space=vmem, size = 0x12000, scoped, tag = 'internal scratch']
  %s0 = inlined_call_operand.vmem [shape: bf16[16,1024], index: 0, kind: input, shape index: {}]
  %s1 = inlined_call_operand.vmem [shape: bf16[1024,128], index: 1, kind: input, shape index: {}]
  %s2 = inlined_call_operand.vmem [shape: f32[1,128], index: 2, kind: input, shape index: {}]
  %s3 = inlined_call_operand.vmem [shape: f32[16,128], index: 3, kind: output, shape index: {}]
  %s4 = sld [smem:[#allocation0]]
  $region22: #{discriminator_forward.9} parent=0
    _
  %s6 = ssub.s32 1, %s4
  %s7 = scalar_select 0, %s6, %s4
  // Predicated region
  $region2: #{discriminator_forward.9} parent=0 // pred_check
    _
  $region3: #{discriminator_forward.9} parent=0 // pred_check_branch
    %9 = sbr.rel (0) target = $region5
  $region4: #{discriminator_forward.9} parent=0 // pred_region
    _
  $region5: #{discriminator_forward.9} parent=0 // pred_fallthru
    _
  // Predicated region
  $region6: #{discriminator_forward.9} parent=0 // pred_check
    _
  $region7: #{discriminator_forward.9} parent=0 // pred_check_branch
    %11 = sbr.rel (0) target = $region9
  $region8: #{discriminator_forward.9} parent=0 // pred_region
    _
  $region9: #{discriminator_forward.9} parent=0 // pred_fallthru
    _
  // Predicated region
  $region10: #{discriminator_forward.9} parent=0 // pred_check
    _
  $region11: #{discriminator_forward.9} parent=0 // pred_check_branch
    %13 = sbr.rel (0) target = $region13
  $region12: #{discriminator_forward.9} parent=0 // pred_region
    _
  $region13: #{discriminator_forward.9} parent=0 // pred_fallthru
    _
  %v15 = vld [vmem:[%s0] sm:$0xff]
  %v16 = vld [vmem:[%s0 + $0x8] sm:$0xff]
  %v17 = vld [vmem:[%s0 + $0x10] sm:$0xff]
  %v18 = vld [vmem:[%s0 + $0x18] sm:$0xff]
  %v19 = vld [vmem:[%s0 + $0x20] sm:$0xff]
  %v20 = vld [vmem:[%s0 + $0x28] sm:$0xff]
  %v21 = vld [vmem:[%s0 + $0x30] sm:$0xff]
  %v22 = vld [vmem:[%s0 + $0x38] sm:$0xff]
  %v23 = vld [vmem:[%s1] sm:$0xf]
  %v24 = vld [vmem:[%s1 + $0x4] sm:$0xf]
  %v25 = vld [vmem:[%s1 + $0x8] sm:$0xf]
  %v26 = vld [vmem:[%s1 + $0xc] sm:$0xf]
  %v27 = vld [vmem:[%s1 + $0x10] sm:$0xf]
  %v28 = vld [vmem:[%s1 + $0x14] sm:$0xf]
  %v29 = vld [vmem:[%s1 + $0x18] sm:$0xf]
  %v30 = vld [vmem:[%s1 + $0x1c] sm:$0xf]
  %v31 = vld [vmem:[%s1 + $0x20] sm:$0xf]
  %v32 = vld [vmem:[%s1 + $0x24] sm:$0xf]
  %v33 = vld [vmem:[%s1 + $0x28] sm:$0xf]
  %v34 = vld [vmem:[%s1 + $0x2c] sm:$0xf]
  %v35 = vld [vmem:[%s1 + $0x30] sm:$0xf]
  %v36 = vld [vmem:[%s1 + $0x34] sm:$0xf]
  %v37 = vld [vmem:[%s1 + $0x38] sm:$0xf]
  %v38 = vld [vmem:[%s1 + $0x3c] sm:$0xf]
  %v39 = vld [vmem:[%s1 + $0x40] sm:$0xf]
  %v40 = vld [vmem:[%s1 + $0x44] sm:$0xf]
  %v41 = vld [vmem:[%s1 + $0x48] sm:$0xf]
  %v42 = vld [vmem:[%s1 + $0x4c] sm:$0xf]
  %v43 = vld [vmem:[%s1 + $0x50] sm:$0xf]
  %v44 = vld [vmem:[%s1 + $0x54] sm:$0xf]
  %v45 = vld [vmem:[%s1 + $0x58] sm:$0xf]
  %v46 = vld [vmem:[%s1 + $0x5c] sm:$0xf]
  %v47 = vld [vmem:[%s1 + $0x60] sm:$0xf]
  %v48 = vld [vmem:[%s1 + $0x64] sm:$0xf]
  %v49 = vld [vmem:[%s1 + $0x68] sm:$0xf]
  %v50 = vld [vmem:[%s1 + $0x6c] sm:$0xf]
  %v51 = vld [vmem:[%s1 + $0x70] sm:$0xf]
  %v52 = vld [vmem:[%s1 + $0x74] sm:$0xf]
  %v53 = vld [vmem:[%s1 + $0x78] sm:$0xf]
  %v54 = vld [vmem:[%s1 + $0x7c] sm:$0xf]
  %v55 = vld [vmem:[%s1 + $0x80] sm:$0xf]
  %v56 = vld [vmem:[%s1 + $0x84] sm:$0xf]
  %v57 = vld [vmem:[%s1 + $0x88] sm:$0xf]
  %v58 = vld [vmem:[%s1 + $0x8c] sm:$0xf]
  %v59 = vld [vmem:[%s1 + $0x90] sm:$0xf]
  %v60 = vld [vmem:[%s1 + $0x94] sm:$0xf]
  %v61 = vld [vmem:[%s1 + $0x98] sm:$0xf]
  %v62 = vld [vmem:[%s1 + $0x9c] sm:$0xf]
  %v63 = vld [vmem:[%s1 + $0xa0] sm:$0xf]
  %v64 = vld [vmem:[%s1 + $0xa4] sm:$0xf]
  %v65 = vld [vmem:[%s1 + $0xa8] sm:$0xf]
  %v66 = vld [vmem:[%s1 + $0xac] sm:$0xf]
  %v67 = vld [vmem:[%s1 + $0xb0] sm:$0xf]
  %v68 = vld [vmem:[%s1 + $0xb4] sm:$0xf]
  %v69 = vld [vmem:[%s1 + $0xb8] sm:$0xf]
  %v70 = vld [vmem:[%s1 + $0xbc] sm:$0xf]
  %v71 = vld [vmem:[%s1 + $0xc0] sm:$0xf]
  %v72 = vld [vmem:[%s1 + $0xc4] sm:$0xf]
  %v73 = vld [vmem:[%s1 + $0xc8] sm:$0xf]
  %v74 = vld [vmem:[%s1 + $0xcc] sm:$0xf]
  %v75 = vld [vmem:[%s1 + $0xd0] sm:$0xf]
  %v76 = vld [vmem:[%s1 + $0xd4] sm:$0xf]
  %v77 = vld [vmem:[%s1 + $0xd8] sm:$0xf]
  %v78 = vld [vmem:[%s1 + $0xdc] sm:$0xf]
  %v79 = vld [vmem:[%s1 + $0xe0] sm:$0xf]
  %v80 = vld [vmem:[%s1 + $0xe4] sm:$0xf]
  %v81 = vld [vmem:[%s1 + $0xe8] sm:$0xf]
  %v82 = vld [vmem:[%s1 + $0xec] sm:$0xf]
  %v83 = vld [vmem:[%s1 + $0xf0] sm:$0xf]
  %v84 = vld [vmem:[%s1 + $0xf4] sm:$0xf]
  %v85 = vld [vmem:[%s1 + $0xf8] sm:$0xf]
  %v86 = vld [vmem:[%s1 + $0xfc] sm:$0xf]
  %v87 = vld [vmem:[%s1 + $0x100] sm:$0xf]
  %v88 = vld [vmem:[%s1 + $0x104] sm:$0xf]
  %v89 = vld [vmem:[%s1 + $0x108] sm:$0xf]
  %v90 = vld [vmem:[%s1 + $0x10c] sm:$0xf]
  %v91 = vld [vmem:[%s1 + $0x110] sm:$0xf]
  %v92 = vld [vmem:[%s1 + $0x114] sm:$0xf]
  %v93 = vld [vmem:[%s1 + $0x118] sm:$0xf]
  %v94 = vld [vmem:[%s1 + $0x11c] sm:$0xf]
  %v95 = vld [vmem:[%s1 + $0x120] sm:$0xf]
  %v96 = vld [vmem:[%s1 + $0x124] sm:$0xf]
  %v97 = vld [vmem:[%s1 + $0x128] sm:$0xf]
  %v98 = vld [vmem:[%s1 + $0x12c] sm:$0xf]
  %v99 = vld [vmem:[%s1 + $0x130] sm:$0xf]
  %v100 = vld [vmem:[%s1 + $0x134] sm:$0xf]
  %v101 = vld [vmem:[%s1 + $0x138] sm:$0xf]
  %v102 = vld [vmem:[%s1 + $0x13c] sm:$0xf]
  %v103 = vld [vmem:[%s1 + $0x140] sm:$0xf]
  %v104 = vld [vmem:[%s1 + $0x144] sm:$0xf]
  %v105 = vld [vmem:[%s1 + $0x148] sm:$0xf]
  %v106 = vld [vmem:[%s1 + $0x14c] sm:$0xf]
  %v107 = vld [vmem:[%s1 + $0x150] sm:$0xf]
  %v108 = vld [vmem:[%s1 + $0x154] sm:$0xf]
  %v109 = vld [vmem:[%s1 + $0x158] sm:$0xf]
  %v110 = vld [vmem:[%s1 + $0x15c] sm:$0xf]
  %v111 = vld [vmem:[%s1 + $0x160] sm:$0xf]
  %v112 = vld [vmem:[%s1 + $0x164] sm:$0xf]
  %v113 = vld [vmem:[%s1 + $0x168] sm:$0xf]
  %v114 = vld [vmem:[%s1 + $0x16c] sm:$0xf]
  %v115 = vld [vmem:[%s1 + $0x170] sm:$0xf]
  %v116 = vld [vmem:[%s1 + $0x174] sm:$0xf]
  %v117 = vld [vmem:[%s1 + $0x178] sm:$0xf]
  %v118 = vld [vmem:[%s1 + $0x17c] sm:$0xf]
  %v119 = vld [vmem:[%s1 + $0x180] sm:$0xf]
  %v120 = vld [vmem:[%s1 + $0x184] sm:$0xf]
  %v121 = vld [vmem:[%s1 + $0x188] sm:$0xf]
  %v122 = vld [vmem:[%s1 + $0x18c] sm:$0xf]
  %v123 = vld [vmem:[%s1 + $0x190] sm:$0xf]
  %v124 = vld [vmem:[%s1 + $0x194] sm:$0xf]
  %v125 = vld [vmem:[%s1 + $0x198] sm:$0xf]
  %v126 = vld [vmem:[%s1 + $0x19c] sm:$0xf]
  %v127 = vld [vmem:[%s1 + $0x1a0] sm:$0xf]
  %v128 = vld [vmem:[%s1 + $0x1a4] sm:$0xf]
  %v129 = vld [vmem:[%s1 + $0x1a8] sm:$0xf]
  %v130 = vld [vmem:[%s1 + $0x1ac] sm:$0xf]
  %v131 = vld [vmem:[%s1 + $0x1b0] sm:$0xf]
  %v132 = vld [vmem:[%s1 + $0x1b4] sm:$0xf]
  %v133 = vld [vmem:[%s1 + $0x1b8] sm:$0xf]
  %v134 = vld [vmem:[%s1 + $0x1bc] sm:$0xf]
  %v135 = vld [vmem:[%s1 + $0x1c0] sm:$0xf]
  %v136 = vld [vmem:[%s1 + $0x1c4] sm:$0xf]
  %v137 = vld [vmem:[%s1 + $0x1c8] sm:$0xf]
  %v138 = vld [vmem:[%s1 + $0x1cc] sm:$0xf]
  %v139 = vld [vmem:[%s1 + $0x1d0] sm:$0xf]
  %v140 = vld [vmem:[%s1 + $0x1d4] sm:$0xf]
  %v141 = vld [vmem:[%s1 + $0x1d8] sm:$0xf]
  %v142 = vld [vmem:[%s1 + $0x1dc] sm:$0xf]
  %v143 = vld [vmem:[%s1 + $0x1e0] sm:$0xf]
  %v144 = vld [vmem:[%s1 + $0x1e4] sm:$0xf]
  %v145 = vld [vmem:[%s1 + $0x1e8] sm:$0xf]
  %v146 = vld [vmem:[%s1 + $0x1ec] sm:$0xf]
  %v147 = vld [vmem:[%s1 + $0x1f0] sm:$0xf]
  %v148 = vld [vmem:[%s1 + $0x1f4] sm:$0xf]
  %v149 = vld [vmem:[%s1 + $0x1f8] sm:$0xf]
  %v150 = vld [vmem:[%s1 + $0x1fc] sm:$0xf]
  %v151 = vld [vmem:[%s2] sm:$0x1]
  %v153 = vlaneseq
  %v154 = vshrl.u32 %v153, 7
  %v155 = vsub.s32 0, %v154
  %v156 = vrot.slane %v151, %v155
  %v166 = vunpack.c.l.b16 %v15
  %v167 = vunpack.c.h.b16 %v15
  %v168 = vunpack.c.l.b16 %v16
  %v169 = vunpack.c.h.b16 %v16
  %v170 = vunpack.c.l.b16 %v17
  %v171 = vunpack.c.h.b16 %v17
  %v172 = vunpack.c.l.b16 %v18
  %v173 = vunpack.c.h.b16 %v18
  %v174 = vunpack.c.l.b16 %v19
  %v175 = vunpack.c.h.b16 %v19
  %v176 = vunpack.c.l.b16 %v20
  %v177 = vunpack.c.h.b16 %v20
  %v178 = vunpack.c.l.b16 %v21
  %v179 = vunpack.c.h.b16 %v21
  %v180 = vunpack.c.l.b16 %v22
  %v181 = vunpack.c.h.b16 %v22
  %v182 = vpack.c.b16 %v174, %v166
  %v183 = vpack.c.b16 %v175, %v167
  %v184 = vpack.c.b16 %v176, %v168
  %v185 = vpack.c.b16 %v177, %v169
  %v186 = vpack.c.b16 %v178, %v170
  %v187 = vpack.c.b16 %v179, %v171
  %v188 = vpack.c.b16 %v180, %v172
  %v189 = vpack.c.b16 %v181, %v173
  %v326 = vunpack.c.l.b16 %v23
  %v327 = vunpack.c.l.b16 %v24
  %v328 = vunpack.c.l.b16 %v25
  %v329 = vunpack.c.l.b16 %v26
  %v330 = vunpack.c.l.b16 %v27
  %v331 = vunpack.c.l.b16 %v28
  %v332 = vunpack.c.l.b16 %v29
  %v333 = vunpack.c.l.b16 %v30
  %v334 = vunpack.c.l.b16 %v31
  %v335 = vunpack.c.l.b16 %v32
  %v336 = vunpack.c.l.b16 %v33
  %v337 = vunpack.c.l.b16 %v34
  %v338 = vunpack.c.l.b16 %v35
  %v339 = vunpack.c.l.b16 %v36
  %v340 = vunpack.c.l.b16 %v37
  %v341 = vunpack.c.l.b16 %v38
  %v342 = vunpack.c.l.b16 %v39
  %v343 = vunpack.c.l.b16 %v40
  %v344 = vunpack.c.l.b16 %v41
  %v345 = vunpack.c.l.b16 %v42
  %v346 = vunpack.c.l.b16 %v43
  %v347 = vunpack.c.l.b16 %v44
  %v348 = vunpack.c.l.b16 %v45
  %v349 = vunpack.c.l.b16 %v46
  %v350 = vunpack.c.l.b16 %v47
  %v351 = vunpack.c.l.b16 %v48
  %v352 = vunpack.c.l.b16 %v49
  %v353 = vunpack.c.l.b16 %v50
  %v354 = vunpack.c.l.b16 %v51
  %v355 = vunpack.c.l.b16 %v52
  %v356 = vunpack.c.l.b16 %v53
  %v357 = vunpack.c.l.b16 %v54
  %v358 = vunpack.c.l.b16 %v55
  %v359 = vunpack.c.l.b16 %v56
  %v360 = vunpack.c.l.b16 %v57
  %v361 = vunpack.c.l.b16 %v58
  %v362 = vunpack.c.l.b16 %v59
  %v363 = vunpack.c.l.b16 %v60
  %v364 = vunpack.c.l.b16 %v61
  %v365 = vunpack.c.l.b16 %v62
  %v366 = vunpack.c.l.b16 %v63
  %v367 = vunpack.c.l.b16 %v64
  %v368 = vunpack.c.l.b16 %v65
  %v369 = vunpack.c.l.b16 %v66
  %v370 = vunpack.c.l.b16 %v67
  %v371 = vunpack.c.l.b16 %v68
  %v372 = vunpack.c.l.b16 %v69
  %v373 = vunpack.c.l.b16 %v70
  %v374 = vunpack.c.l.b16 %v71
  %v375 = vunpack.c.l.b16 %v72
  %v376 = vunpack.c.l.b16 %v73
  %v377 = vunpack.c.l.b16 %v74
  %v378 = vunpack.c.l.b16 %v75
  %v379 = vunpack.c.l.b16 %v76
  %v380 = vunpack.c.l.b16 %v77
  %v381 = vunpack.c.l.b16 %v78
  %v382 = vunpack.c.l.b16 %v79
  %v383 = vunpack.c.l.b16 %v80
  %v384 = vunpack.c.l.b16 %v81
  %v385 = vunpack.c.l.b16 %v82
  %v386 = vunpack.c.l.b16 %v83
  %v387 = vunpack.c.l.b16 %v84
  %v388 = vunpack.c.l.b16 %v85
  %v389 = vunpack.c.l.b16 %v86
  %v390 = vunpack.c.l.b16 %v87
  %v391 = vunpack.c.l.b16 %v88
  %v392 = vunpack.c.l.b16 %v89
  %v393 = vunpack.c.l.b16 %v90
  %v394 = vunpack.c.l.b16 %v91
  %v395 = vunpack.c.l.b16 %v92
  %v396 = vunpack.c.l.b16 %v93
  %v397 = vunpack.c.l.b16 %v94
  %v398 = vunpack.c.l.b16 %v95
  %v399 = vunpack.c.l.b16 %v96
  %v400 = vunpack.c.l.b16 %v97
  %v401 = vunpack.c.l.b16 %v98
  %v402 = vunpack.c.l.b16 %v99
  %v403 = vunpack.c.l.b16 %v100
  %v404 = vunpack.c.l.b16 %v101
  %v405 = vunpack.c.l.b16 %v102
  %v406 = vunpack.c.l.b16 %v103
  %v407 = vunpack.c.l.b16 %v104
  %v408 = vunpack.c.l.b16 %v105
  %v409 = vunpack.c.l.b16 %v106
  %v410 = vunpack.c.l.b16 %v107
  %v411 = vunpack.c.l.b16 %v108
  %v412 = vunpack.c.l.b16 %v109
  %v413 = vunpack.c.l.b16 %v110
  %v414 = vunpack.c.l.b16 %v111
  %v415 = vunpack.c.l.b16 %v112
  %v416 = vunpack.c.l.b16 %v113
  %v417 = vunpack.c.l.b16 %v114
  %v418 = vunpack.c.l.b16 %v115
  %v419 = vunpack.c.l.b16 %v116
  %v420 = vunpack.c.l.b16 %v117
  %v421 = vunpack.c.l.b16 %v118
  %v422 = vunpack.c.l.b16 %v119
  %v423 = vunpack.c.l.b16 %v120
  %v424 = vunpack.c.l.b16 %v121
  %v425 = vunpack.c.l.b16 %v122
  %v426 = vunpack.c.l.b16 %v123
  %v427 = vunpack.c.l.b16 %v124
  %v428 = vunpack.c.l.b16 %v125
  %v429 = vunpack.c.l.b16 %v126
  %v430 = vunpack.c.l.b16 %v127
  %v431 = vunpack.c.l.b16 %v128
  %v432 = vunpack.c.l.b16 %v129
  %v433 = vunpack.c.l.b16 %v130
  %v434 = vunpack.c.l.b16 %v131
  %v435 = vunpack.c.l.b16 %v132
  %v436 = vunpack.c.l.b16 %v133
  %v437 = vunpack.c.l.b16 %v134
  %v438 = vunpack.c.l.b16 %v135
  %v439 = vunpack.c.l.b16 %v136
  %v440 = vunpack.c.l.b16 %v137
  %v441 = vunpack.c.l.b16 %v138
  %v442 = vunpack.c.l.b16 %v139
  %v443 = vunpack.c.l.b16 %v140
  %v444 = vunpack.c.l.b16 %v141
  %v445 = vunpack.c.l.b16 %v142
  %v446 = vunpack.c.l.b16 %v143
  %v447 = vunpack.c.l.b16 %v144
  %v448 = vunpack.c.l.b16 %v145
  %v449 = vunpack.c.l.b16 %v146
  %v450 = vunpack.c.l.b16 %v147
  %v451 = vunpack.c.l.b16 %v148
  %v452 = vunpack.c.l.b16 %v149
  %v453 = vunpack.c.l.b16 %v150
  %v454 = vpack.c.b16 %v327, %v326
  %v455 = vpack.c.b16 %v329, %v328
  %v456 = vpack.c.b16 %v331, %v330
  %v457 = vpack.c.b16 %v333, %v332
  %v458 = vpack.c.b16 %v335, %v334
  %v459 = vpack.c.b16 %v337, %v336
  %v460 = vpack.c.b16 %v339, %v338
  %v461 = vpack.c.b16 %v341, %v340
  %v462 = vpack.c.b16 %v343, %v342
  %v463 = vpack.c.b16 %v345, %v344
  %v464 = vpack.c.b16 %v347, %v346
  %v465 = vpack.c.b16 %v349, %v348
  %v466 = vpack.c.b16 %v351, %v350
  %v467 = vpack.c.b16 %v353, %v352
  %v468 = vpack.c.b16 %v355, %v354
  %v469 = vpack.c.b16 %v357, %v356
  %v470 = vpack.c.b16 %v359, %v358
  %v471 = vpack.c.b16 %v361, %v360
  %v472 = vpack.c.b16 %v363, %v362
  %v473 = vpack.c.b16 %v365, %v364
  %v474 = vpack.c.b16 %v367, %v366
  %v475 = vpack.c.b16 %v369, %v368
  %v476 = vpack.c.b16 %v371, %v370
  %v477 = vpack.c.b16 %v373, %v372
  %v478 = vpack.c.b16 %v375, %v374
  %v479 = vpack.c.b16 %v377, %v376
  %v480 = vpack.c.b16 %v379, %v378
  %v481 = vpack.c.b16 %v381, %v380
  %v482 = vpack.c.b16 %v383, %v382
  %v483 = vpack.c.b16 %v385, %v384
  %v484 = vpack.c.b16 %v387, %v386
  %v485 = vpack.c.b16 %v389, %v388
  %v486 = vpack.c.b16 %v391, %v390
  %v487 = vpack.c.b16 %v393, %v392
  %v488 = vpack.c.b16 %v395, %v394
  %v489 = vpack.c.b16 %v397, %v396
  %v490 = vpack.c.b16 %v399, %v398
  %v491 = vpack.c.b16 %v401, %v400
  %v492 = vpack.c.b16 %v403, %v402
  %v493 = vpack.c.b16 %v405, %v404
  %v494 = vpack.c.b16 %v407, %v406
  %v495 = vpack.c.b16 %v409, %v408
  %v496 = vpack.c.b16 %v411, %v410
  %v497 = vpack.c.b16 %v413, %v412
  %v498 = vpack.c.b16 %v415, %v414
  %v499 = vpack.c.b16 %v417, %v416
  %v500 = vpack.c.b16 %v419, %v418
  %v501 = vpack.c.b16 %v421, %v420
  %v502 = vpack.c.b16 %v423, %v422
  %v503 = vpack.c.b16 %v425, %v424
  %v504 = vpack.c.b16 %v427, %v426
  %v505 = vpack.c.b16 %v429, %v428
  %v506 = vpack.c.b16 %v431, %v430
  %v507 = vpack.c.b16 %v433, %v432
  %v508 = vpack.c.b16 %v435, %v434
  %v509 = vpack.c.b16 %v437, %v436
  %v510 = vpack.c.b16 %v439, %v438
  %v511 = vpack.c.b16 %v441, %v440
  %v512 = vpack.c.b16 %v443, %v442
  %v513 = vpack.c.b16 %v445, %v444
  %v514 = vpack.c.b16 %v447, %v446
  %v515 = vpack.c.b16 %v449, %v448
  %v516 = vpack.c.b16 %v451, %v450
  %v517 = vpack.c.b16 %v453, %v452
  %582 = vmatprep.subr.bf16.mxu0 0
  %583 = vmatpush1.bf16.msra.mxu0 %v454
  %584 = vmatprep.subr.bf16.mxu0 0
  %585 = vmatpush1.bf16.msra.mxu0 %v455
  %586 = vmatprep.subr.bf16.mxu0 0
  %587 = vmatpush1.bf16.msra.mxu0 %v456
  %588 = vmatprep.subr.bf16.mxu0 0
  %589 = vmatpush1.bf16.msra.mxu0 %v457
  %590 = vmatprep.subr.bf16.mxu0 0
  %591 = vmatpush1.bf16.msra.mxu0 %v458
  %592 = vmatprep.subr.bf16.mxu0 0
  %593 = vmatpush1.bf16.msra.mxu0 %v459
  %594 = vmatprep.subr.bf16.mxu0 0
  %595 = vmatpush1.bf16.msra.mxu0 %v460
  %596 = vmatprep.subr.bf16.mxu0 0
  %597 = vmatpush1.bf16.msra.mxu0 %v461
  %598 = vmatprep.subr.bf16.mxu0 0
  %599 = vmatpush1.bf16.msra.mxu0 %v462
  %600 = vmatprep.subr.bf16.mxu0 0
  %601 = vmatpush1.bf16.msra.mxu0 %v463
  %602 = vmatprep.subr.bf16.mxu0 0
  %603 = vmatpush1.bf16.msra.mxu0 %v464
  %604 = vmatprep.subr.bf16.mxu0 0
  %605 = vmatpush1.bf16.msra.mxu0 %v465
  %606 = vmatprep.subr.bf16.mxu0 0
  %607 = vmatpush1.bf16.msra.mxu0 %v466
  %608 = vmatprep.subr.bf16.mxu0 0
  %609 = vmatpush1.bf16.msra.mxu0 %v467
  %610 = vmatprep.subr.bf16.mxu0 0
  %611 = vmatpush1.bf16.msra.mxu0 %v468
  %612 = vmatprep.subr.bf16.mxu0 0
  %613 = vmatpush1.bf16.msra.mxu0 %v469
  %614 = vmatprep.mubr.bf16.mxu0 %v183
  %615 = vmatmul.mubr.bf16.gmra.mrb[0].mxu0 %v182
  %v616 = vpop.f32.mrb[0].mxu0
  %v617 = vadd.f32 %v156, %v616
  %v618 = vpop.f32.mrb[0].mxu0
  %v619 = vpop.f32.mrb[0].mxu0
  %v620 = vadd.f32 %v156, %v619
  %v621 = vpop.f32.mrb[0].mxu0
  %622 = vdwg.mxu0
  %623 = vmatprep.subr.bf16.mxu0 0
  %624 = vmatpush1.bf16.msra.mxu0 %v470
  %625 = vmatprep.subr.bf16.mxu0 0
  %626 = vmatpush1.bf16.msra.mxu0 %v471
  %627 = vmatprep.subr.bf16.mxu0 0
  %628 = vmatpush1.bf16.msra.mxu0 %v472
  %629 = vmatprep.subr.bf16.mxu0 0
  %630 = vmatpush1.bf16.msra.mxu0 %v473
  %631 = vmatprep.subr.bf16.mxu0 0
  %632 = vmatpush1.bf16.msra.mxu0 %v474
  %633 = vmatprep.subr.bf16.mxu0 0
  %634 = vmatpush1.bf16.msra.mxu0 %v475
  %635 = vmatprep.subr.bf16.mxu0 0
  %636 = vmatpush1.bf16.msra.mxu0 %v476
  %637 = vmatprep.subr.bf16.mxu0 0
  %638 = vmatpush1.bf16.msra.mxu0 %v477
  %639 = vmatprep.subr.bf16.mxu0 0
  %640 = vmatpush1.bf16.msra.mxu0 %v478
  %641 = vmatprep.subr.bf16.mxu0 0
  %642 = vmatpush1.bf16.msra.mxu0 %v479
  %643 = vmatprep.subr.bf16.mxu0 0
  %644 = vmatpush1.bf16.msra.mxu0 %v480
  %645 = vmatprep.subr.bf16.mxu0 0
  %646 = vmatpush1.bf16.msra.mxu0 %v481
  %647 = vmatprep.subr.bf16.mxu0 0
  %648 = vmatpush1.bf16.msra.mxu0 %v482
  %649 = vmatprep.subr.bf16.mxu0 0
  %650 = vmatpush1.bf16.msra.mxu0 %v483
  %651 = vmatprep.subr.bf16.mxu0 0
  %652 = vmatpush1.bf16.msra.mxu0 %v484
  %653 = vmatprep.subr.bf16.mxu0 0
  %654 = vmatpush1.bf16.msra.mxu0 %v485
  %655 = vmatprep.mubr.bf16.mxu0 %v185
  %656 = vmatmul.mubr.bf16.gmra.mrb[0].mxu0 %v184
  %v657 = vpop.f32.mrb[0].mxu0
  %v658 = vadd.f32 %v617, %v657
  %v659 = vpop.f32.mrb[0].mxu0
  %v660 = vpop.f32.mrb[0].mxu0
  %v661 = vadd.f32 %v620, %v660
  %v662 = vpop.f32.mrb[0].mxu0
  %663 = vdwg.mxu0
  %664 = vmatprep.subr.bf16.mxu0 0
  %665 = vmatpush1.bf16.msra.mxu0 %v486
  %666 = vmatprep.subr.bf16.mxu0 0
  %667 = vmatpush1.bf16.msra.mxu0 %v487
  %668 = vmatprep.subr.bf16.mxu0 0
  %669 = vmatpush1.bf16.msra.mxu0 %v488
  %670 = vmatprep.subr.bf16.mxu0 0
  %671 = vmatpush1.bf16.msra.mxu0 %v489
  %672 = vmatprep.subr.bf16.mxu0 0
  %673 = vmatpush1.bf16.msra.mxu0 %v490
  %674 = vmatprep.subr.bf16.mxu0 0
  %675 = vmatpush1.bf16.msra.mxu0 %v491
  %676 = vmatprep.subr.bf16.mxu0 0
  %677 = vmatpush1.bf16.msra.mxu0 %v492
  %678 = vmatprep.subr.bf16.mxu0 0
  %679 = vmatpush1.bf16.msra.mxu0 %v493
  %680 = vmatprep.subr.bf16.mxu0 0
  %681 = vmatpush1.bf16.msra.mxu0 %v494
  %682 = vmatprep.subr.bf16.mxu0 0
  %683 = vmatpush1.bf16.msra.mxu0 %v495
  %684 = vmatprep.subr.bf16.mxu0 0
  %685 = vmatpush1.bf16.msra.mxu0 %v496
  %686 = vmatprep.subr.bf16.mxu0 0
  %687 = vmatpush1.bf16.msra.mxu0 %v497
  %688 = vmatprep.subr.bf16.mxu0 0
  %689 = vmatpush1.bf16.msra.mxu0 %v498
  %690 = vmatprep.subr.bf16.mxu0 0
  %691 = vmatpush1.bf16.msra.mxu0 %v499
  %692 = vmatprep.subr.bf16.mxu0 0
  %693 = vmatpush1.bf16.msra.mxu0 %v500
  %694 = vmatprep.subr.bf16.mxu0 0
  %695 = vmatpush1.bf16.msra.mxu0 %v501
  %696 = vmatprep.mubr.bf16.mxu0 %v187
  %697 = vmatmul.mubr.bf16.gmra.mrb[0].mxu0 %v186
  %v698 = vpop.f32.mrb[0].mxu0
  %v699 = vadd.f32 %v658, %v698
  %v700 = vpop.f32.mrb[0].mxu0
  %v701 = vpop.f32.mrb[0].mxu0
  %v702 = vadd.f32 %v661, %v701
  %v703 = vpop.f32.mrb[0].mxu0
  %704 = vdwg.mxu0
  %705 = vmatprep.subr.bf16.mxu0 0
  %706 = vmatpush1.bf16.msra.mxu0 %v502
  %707 = vmatprep.subr.bf16.mxu0 0
  %708 = vmatpush1.bf16.msra.mxu0 %v503
  %709 = vmatprep.subr.bf16.mxu0 0
  %710 = vmatpush1.bf16.msra.mxu0 %v504
  %711 = vmatprep.subr.bf16.mxu0 0
  %712 = vmatpush1.bf16.msra.mxu0 %v505
  %713 = vmatprep.subr.bf16.mxu0 0
  %714 = vmatpush1.bf16.msra.mxu0 %v506
  %715 = vmatprep.subr.bf16.mxu0 0
  %716 = vmatpush1.bf16.msra.mxu0 %v507
  %717 = vmatprep.subr.bf16.mxu0 0
  %718 = vmatpush1.bf16.msra.mxu0 %v508
  %719 = vmatprep.subr.bf16.mxu0 0
  %720 = vmatpush1.bf16.msra.mxu0 %v509
  %721 = vmatprep.subr.bf16.mxu0 0
  %722 = vmatpush1.bf16.msra.mxu0 %v510
  %723 = vmatprep.subr.bf16.mxu0 0
  %724 = vmatpush1.bf16.msra.mxu0 %v511
  %725 = vmatprep.subr.bf16.mxu0 0
  %726 = vmatpush1.bf16.msra.mxu0 %v512
  %727 = vmatprep.subr.bf16.mxu0 0
  %728 = vmatpush1.bf16.msra.mxu0 %v513
  %729 = vmatprep.subr.bf16.mxu0 0
  %730 = vmatpush1.bf16.msra.mxu0 %v514
  %731 = vmatprep.subr.bf16.mxu0 0
  %732 = vmatpush1.bf16.msra.mxu0 %v515
  %733 = vmatprep.subr.bf16.mxu0 0
  %734 = vmatpush1.bf16.msra.mxu0 %v516
  %735 = vmatprep.subr.bf16.mxu0 0
  %736 = vmatpush1.bf16.msra.mxu0 %v517
  %737 = vmatprep.mubr.bf16.mxu0 %v189
  %738 = vmatmul.mubr.bf16.gmra.mrb[0].mxu0 %v188
  %v739 = vpop.f32.mrb[0].mxu0
  %v740 = vadd.f32 %v699, %v739
  %v741 = vpop.f32.mrb[0].mxu0
  %v742 = vpop.f32.mrb[0].mxu0
  %v743 = vadd.f32 %v702, %v742
  %v744 = vpop.f32.mrb[0].mxu0
  %745 = vdwg.mxu0
  %v746 = vsub.f32 0.0, %v740
  %v747 = vsub.f32 0.0, %v743
  %v748 = vmul.f32 %v746, 1.442695
  %v749 = vpow.pop %v748
  %v750 = vmul.f32 %v747, 1.442695
  %v751 = vpow.pop %v750
  %v752 = vadd.f32 %v749, 1.0
  %v753 = vadd.f32 %v751, 1.0
  %v754 = vrcp.pop %v752
  %v755 = vrcp.pop %v753
  %756 = vst [vmem:[%s3] sm:$0xff] %v754
  %757 = vst [vmem:[%s3 + $0x8] sm:$0xff] %v755
  // Predicated region
  $region14: #{discriminator_forward.9} parent=0 // pred_check
    _
  $region15: #{discriminator_forward.9} parent=0 // pred_check_branch
    %759 = sbr.rel (0) target = $region17
  $region16: #{discriminator_forward.9} parent=0 // pred_region
    _
  $region17: #{discriminator_forward.9} parent=0 // pred_fallthru
    _
  // Predicated region
  $region18: #{discriminator_forward.9} parent=0 // pred_check
    _
  $region19: #{discriminator_forward.9} parent=0 // pred_check_branch
    %761 = sbr.rel (0) target = $region21
  $region20: #{discriminator_forward.9} parent=0 // pred_region
    _
  $region21: #{discriminator_forward.9} parent=0 // pred_fallthru
    _

</llo_original>
